<compile_context>
chip_gen: v7x
topology: tpu7x:2x2x1
jax: 0.10.0
libtpu: 0.0.40
codegen_flags: <defaults>
</compile_context>

<pallas_src>
import functools
import math

import jax
import jax.numpy as jnp
from jax.experimental import pallas as pl
from jax.experimental.pallas import tpu as pltpu


# ------------------------------------------------------------------
# VMEM budgeting helpers
# ------------------------------------------------------------------
def _vmem_budget():
    """(vmem_limit_bytes to request, byte budget for double-buffered blocks)."""
    try:
        phys = pltpu.get_tpu_info().vmem_capacity_bytes
    except Exception:  # conservative default (v7x physical VMEM)
        phys = 64 * 1024 * 1024
    limit = min(phys // 2, 64 * 1024 * 1024)   # 32 MiB on v7x, 64 MiB on v5e/v6e
    return limit, limit // 2


def _choose_tile_s(S, N, Cin, C4, budget_bytes):
    """Largest lane-aligned spatial tile that (a) divides S, (b) keeps the
    double-buffered f32 input+output blocks within the VMEM budget and
    (c) leaves >= 4 grid entries so the grid can split across TensorCores."""
    def block_bytes(t):
        return 2 * (Cin + C4) * t * 4          # 2x (pipeline) * (in + out) f32
    candidates = [t for t in (16384, 8192, 4096, 2048, 1024, 512, 256, 128)
                  if S % t == 0 and block_bytes(t) <= budget_bytes]
    for t in candidates:
        if N * (S // t) >= 4:
            return t
    if candidates:                             # perf-only fallback (few steps)
        return candidates[0]
    return S  # tiny problem: full extent always satisfies the block rules


# ------------------------------------------------------------------
# Kernel 1: BN1 -> ReLU -> conv1x1x1 (BN2 scale folded into weight)
#           -> +BN2 shift -> ReLU, channels-first, lane-dense output.
# x3   : (N, Cin, S)   with S = D*H*W   (free reshape of the NCDHW input)
# w1f  : (C4, Cin)     conv1 weight with BN2 scale folded into its rows
# s1,b1: (Cin, 1)      folded BN1 scale / shift
# b2   : (C4, 1)       folded BN2 shift
# out  : (N, C4, S)
# ------------------------------------------------------------------
def _k1_body(x_ref, w_ref, s1_ref, b1_ref, b2_ref, o_ref):
    a = jnp.maximum(x_ref[0] * s1_ref[...] + b1_ref[...], 0.0)        # BN1+ReLU
    # f32 MXU dot keeps the test tolerance tight; bf16 operand cast
    # (preferred_element_type=f32) would give ~2x MXU and halve VMEM if needed.
    y = jnp.dot(w_ref[...], a, preferred_element_type=jnp.float32)    # 1x1x1 conv
    o_ref[0] = jnp.maximum(y + b2_ref[...], 0.0)                      # +b2, ReLU


def fused_bn_relu_conv1(x3, w1f, s1, b1, b2, *, tile_s, vmem_limit):
    N, Cin, S = x3.shape
    C4 = w1f.shape[0]
    assert S % tile_s == 0
    return pl.pallas_call(
        _k1_body,
        out_shape=jax.ShapeDtypeStruct((N, C4, S), jnp.float32),
        grid_spec=pltpu.PrefetchScalarGridSpec(
            num_scalar_prefetch=0,
            grid=(N, S // tile_s),
            in_specs=[
                pl.BlockSpec((1, Cin, tile_s), lambda n, s: (n, 0, s)),
                pl.BlockSpec((C4, Cin), lambda n, s: (0, 0)),
                pl.BlockSpec((Cin, 1), lambda n, s: (0, 0)),
                pl.BlockSpec((Cin, 1), lambda n, s: (0, 0)),
                pl.BlockSpec((C4, 1), lambda n, s: (0, 0)),
            ],
            out_specs=pl.BlockSpec((1, C4, tile_s), lambda n, s: (n, 0, s)),
        ),
        compiler_params=pltpu.CompilerParams(
            dimension_semantics=("parallel", "parallel"),
            vmem_limit_bytes=vmem_limit),
    )(x3, w1f, s1, b1, b2)


# ------------------------------------------------------------------
# Kernel 2: 3x3x3 "same" conv fused with the channel concat.
# Grid (N, D); per step it reads the x plane plus the three neighbouring conv1
# planes (clamped index maps, no jnp.pad anywhere), builds the 27 im2col taps
# as contiguous flat-offset lane slices masked for the borders, runs ONE
# flipped-orientation matmul (Cout, 27*C4) @ (27*C4, H*W) and writes the final
# concatenated block (x channels copied through, conv channels appended).
#
# TODO(synk): for very large planes (H*W >~ 4K with C4 ~ 128) the f32 patch
#             should be built per H-row-strip to stay inside v7x VMEM; and the
#             3x re-read of a2 along depth could be cut to ~1x with a manual
#             rolling 3-plane VMEM buffer (memory_space=pl.ANY + DMAs).
# TODO(synk): a larger refactor would fuse K1 into K2 so the (N, C4, S)
#             intermediate never touches HBM.
# ------------------------------------------------------------------
def _k2_body(x_ref, am1_ref, a0_ref, ap1_ref, w_ref, m_ref, o_ref,
             *, Cin, C4, Cout, D, H, W):
    d = pl.program_id(1)
    HW = H * W
    PAD = W + 1

    # Fused channel concat: copy the input block through (torch.cat dim=1).
    o_ref[0, 0:Cin, 0, :, :] = x_ref[0, :, 0, :, :]

    # Flatten the three conv1 depth planes to (C4, H*W) (spatial on lanes) and
    # zero the out-of-range depth neighbours: the clamped index maps always
    # load a valid plane; masking here reproduces exact zero padding along D.
    pm1 = am1_ref[0, :, 0, :, :].reshape(C4, HW) * jnp.where(d == 0, 0.0, 1.0)
    p0 = a0_ref[0, :, 0, :, :].reshape(C4, HW)
    pp1 = ap1_ref[0, :, 0, :, :].reshape(C4, HW) * jnp.where(d == D - 1, 0.0, 1.0)

    # im2col via contiguous flat-offset taps: extend each flattened plane by
    # W+1 zero lanes on both sides, take each (kh, kw) tap as a static
    # contiguous lane slice at offset (kh-1)*W + (kw-1), and mask the border
    # outputs so row-crossing lanes reproduce exact zero padding along H, W.
    zpad = jnp.zeros((C4, PAD), jnp.float32)
    taps = []
    for plane in (pm1, p0, pp1):                      # kd = 0, 1, 2
        pf = jnp.concatenate([zpad, plane, zpad], axis=1)   # (C4, HW + 2W + 2)
        for kh in range(3):
            for kw in range(3):
                if kh == 1 and kw == 1:
                    taps.append(plane)                # centre tap: mask all-ones
                    continue
                start = PAD + (kh - 1) * W + (kw - 1)
                tap = pf[:, start:start + HW]
                m = kh * 3 + kw
                taps.append(tap * m_ref[m:m + 1, :])
    patch = jnp.concatenate(taps, axis=0)             # (27*C4, H*W)

    # Single big-K MXU matmul; the lane (store) dimension is H*W, not Cout.
    y = jnp.dot(w_ref[...], patch, preferred_element_type=jnp.float32)
    o_ref[0, Cin:Cin + Cout, 0, :, :] = y.reshape(Cout, H, W)


def conv3x3x3_concat(x, a2, w2f, masks, *, vmem_limit):
    N, Cin, D, H, W = x.shape
    C4 = a2.shape[1]
    Cout = w2f.shape[0]
    HW = H * W
    kernel = functools.partial(_k2_body, Cin=Cin, C4=C4, Cout=Cout,
                               D=D, H=H, W=W)
    return pl.pallas_call(
        kernel,
        out_shape=jax.ShapeDtypeStruct((N, Cin + Cout, D, H, W), jnp.float32),
        grid_spec=pltpu.PrefetchScalarGridSpec(
            num_scalar_prefetch=0,
            grid=(N, D),
            in_specs=[
                # x plane (copied through for the concat).
                pl.BlockSpec((1, Cin, 1, H, W), lambda n, d: (n, 0, d, 0, 0)),
                # conv1 output planes d-1, d, d+1 (depth indices clamped; the
                # out-of-range neighbours are zeroed inside the kernel).
                pl.BlockSpec((1, C4, 1, H, W),
                             lambda n, d: (n, 0, jnp.maximum(d - 1, 0), 0, 0)),
                pl.BlockSpec((1, C4, 1, H, W), lambda n, d: (n, 0, d, 0, 0)),
                pl.BlockSpec((1, C4, 1, H, W),
                             lambda n, d: (n, 0, jnp.minimum(d + 1, D - 1), 0, 0)),
                # Full flipped 3x3x3 weight resident in VMEM (one DMA total).
                pl.BlockSpec((Cout, 27 * C4), lambda n, d: (0, 0)),
                # Border masks, resident in VMEM (one DMA total).
                pl.BlockSpec((9, HW), lambda n, d: (0, 0)),
            ],
            out_specs=pl.BlockSpec((1, Cin + Cout, 1, H, W),
                                   lambda n, d: (n, 0, d, 0, 0)),
        ),
        compiler_params=pltpu.CompilerParams(
            dimension_semantics=("parallel", "parallel"),
            vmem_limit_bytes=vmem_limit),
    )(x, a2, a2, a2, w2f, masks)


def _make_border_masks(H, W):
    """masks[kh*3+kw, h*W+w] = 1 iff (h+kh-1, w+kw-1) lies inside the HxW plane."""
    hs = jnp.arange(H)[:, None]
    ws = jnp.arange(W)[None, :]
    rows = []
    for kh in range(3):
        for kw in range(3):
            ok = ((hs + kh - 1 >= 0) & (hs + kh - 1 < H) &
                  (ws + kw - 1 >= 0) & (ws + kw - 1 < W))
            rows.append(ok.reshape(H * W))
    return jnp.stack(rows, axis=0).astype(jnp.float32)        # (9, H*W)


# ------------------------------------------------------------------
# Bottleneck forward (wrapper).  x: (N, Cin, D, H, W) float32, NCDHW like torch
# ------------------------------------------------------------------
def bottleneck_forward(x_ncdhw, params, dropout=0.0, training=False):
    N, Cin, D, H, W = x_ncdhw.shape
    S = D * H * W
    eps = 1e-5

    # Fold BN (eval mode) into per-channel scale/shift; conv1x1 -> BN2 is
    # linear, so BN2's scale is folded into the 1x1 weight rows at trace time.
    s1 = params["gamma1"] / jnp.sqrt(params["var1"] + eps)
    b1 = params["beta1"] - params["mean1"] * s1
    s2 = params["gamma2"] / jnp.sqrt(params["var2"] + eps)
    b2 = params["beta2"] - params["mean2"] * s2
    w1f = params["w1"] * s2[:, None]                          # (C4, Cin)
    C4 = w1f.shape[0]
    Cout = params["w2"].shape[0]

    vmem_limit, tile_budget = _vmem_budget()

    # K1: fused BN1 -> ReLU -> 1x1x1 conv -> BN2 shift -> ReLU (flat spatial).
    x3 = x_ncdhw.reshape(N, Cin, S)                           # free reshape
    tile_s = _choose_tile_s(S, N, Cin, C4, tile_budget)
    a2 = fused_bn_relu_conv1(x3, w1f, s1[:, None], b1[:, None], b2[:, None],
                             tile_s=tile_s, vmem_limit=vmem_limit)
    a2 = a2.reshape(N, C4, D, H, W)                           # free reshape

    # K2: 3x3x3 conv + channel concat, consuming a2 channels-first directly
    # (no transpose / pad / concatenate HBM passes).
    # torch weight (Cout, C4, kd, kh, kw) -> (Cout, (kd, kh, kw, c)).
    w2f = jnp.transpose(params["w2"], (0, 2, 3, 4, 1)).reshape(Cout, 27 * C4)
    masks = _make_border_masks(H, W)

    # TODO(synk): training-mode dropout3d (channel dropout) not implemented;
    # eval-mode F.dropout3d is the identity.
    return conv3x3x3_concat(x_ncdhw, a2, w2f, masks, vmem_limit=vmem_limit)


# ------------------------------------------------------------------
# Deterministic synthetic parameters (shapes from Bottleneck.__init__)
# ------------------------------------------------------------------
def make_params(key, in_channels, out_channels):
    c4 = out_channels * 4
    keys = jax.random.split(key, 10)
    std1 = math.sqrt(2.0 / (in_channels * 1 * 1 * 1))         # kaiming, relu
    std2 = math.sqrt(2.0 / (c4 * 3 * 3 * 3))
    return {
        "gamma1": 1.0 + 0.1 * jax.random.normal(keys[0], (in_channels,), jnp.float32),
        "beta1": 0.1 * jax.random.normal(keys[1], (in_channels,), jnp.float32),
        "mean1": 0.1 * jax.random.normal(keys[2], (in_channels,), jnp.float32),
        "var1": 0.5 + jnp.abs(jax.random.normal(keys[3], (in_channels,), jnp.float32)),
        "w1": std1 * jax.random.normal(keys[4], (c4, in_channels), jnp.float32),
        "gamma2": 1.0 + 0.1 * jax.random.normal(keys[5], (c4,), jnp.float32),
        "beta2": 0.1 * jax.random.normal(keys[6], (c4,), jnp.float32),
        "mean2": 0.1 * jax.random.normal(keys[7], (c4,), jnp.float32),
        "var2": 0.5 + jnp.abs(jax.random.normal(keys[8], (c4,), jnp.float32)),
        "w2": std2 * jax.random.normal(keys[9], (out_channels, c4, 3, 3, 3), jnp.float32),
    }


# ------------------------------------------------------------------
# Pure-JAX reference (NCDHW, mirrors the PyTorch forward in eval mode)
# ------------------------------------------------------------------
def reference_forward(x, params):
    eps = 1e-5

    def bn(v, g, b, m, var):
        sh = (1, -1, 1, 1, 1)
        return (v - m.reshape(sh)) / jnp.sqrt(var.reshape(sh) + eps) * \
            g.reshape(sh) + b.reshape(sh)

    a1 = jax.nn.relu(bn(x, params["gamma1"], params["beta1"],
                        params["mean1"], params["var1"]))
    y1 = jnp.einsum("ncdhw,oc->nodhw", a1, params["w1"])
    a2 = jax.nn.relu(bn(y1, params["gamma2"], params["beta2"],
                        params["mean2"], params["var2"]))
    y2 = jax.lax.conv_general_dilated(
        a2, params["w2"], window_strides=(1, 1, 1),
        padding=((1, 1), (1, 1), (1, 1)),
        dimension_numbers=("NCDHW", "OIDHW", "NCDHW"))
    return jnp.concatenate([x, y2], axis=1)


if __name__ == "__main__":
    N, Cin, D, H, W = 2, 4, 8, 8, 8
    out_channels = 4

    key = jax.random.PRNGKey(0)
    kx, kp = jax.random.split(key)
    x = jax.random.normal(kx, (N, Cin, D, H, W), jnp.float32)
    params = make_params(kp, Cin, out_channels)

    fwd = jax.jit(lambda xx: bottleneck_forward(xx, params))
    out = jax.block_until_ready(fwd(x))

    ref = reference_forward(x, params)
    assert out.shape == (N, Cin + out_channels, D, H, W), out.shape
    assert jnp.allclose(out, ref, rtol=1e-4, atol=2e-4), \
        float(jnp.max(jnp.abs(out - ref)))

    print("KERNEL_OK")
</pallas_src>

<mosaic_0001>
module attributes {stable_mosaic.version = 11 : i64} {
  func.func @_k1_body(%arg0: i32, %arg1: i32, %arg2: memref<1x4x256xf32, #tpu.memory_space<vmem>>, %arg3: memref<16x4xf32, #tpu.memory_space<vmem>>, %arg4: memref<4x1xf32, #tpu.memory_space<vmem>>, %arg5: memref<4x1xf32, #tpu.memory_space<vmem>>, %arg6: memref<16x1xf32, #tpu.memory_space<vmem>>, %arg7: memref<1x16x256xf32, #tpu.memory_space<vmem>>) attributes {dimension_semantics = [#tpu.dimension_semantics<parallel>, #tpu.dimension_semantics<parallel>], iteration_bounds = array<i64: 2, 2>, scalar_prefetch = 0 : i64, scratch_operands = 0 : i64, tpu.core_type = #tpu.core_type<tc>, window_params = [{transform_indices = @transform_0, window_bounds = array<i64: 1, 4, 256>}, {pipeline_mode = #tpu.pipeline_mode<synchronous>, transform_indices = @transform_1, window_bounds = array<i64: 16, 4>}, {pipeline_mode = #tpu.pipeline_mode<synchronous>, transform_indices = @transform_2, window_bounds = array<i64: 4, 1>}, {pipeline_mode = #tpu.pipeline_mode<synchronous>, transform_indices = @transform_3, window_bounds = array<i64: 4, 1>}, {pipeline_mode = #tpu.pipeline_mode<synchronous>, transform_indices = @transform_4, window_bounds = array<i64: 16, 1>}, {transform_indices = @transform_5, window_bounds = array<i64: 1, 16, 256>}]} {
    %c0 = arith.constant 0 : index
    %c0_0 = arith.constant 0 : index
    %c0_1 = arith.constant 0 : index
    %0 = vector.load %arg2[%c0, %c0_0, %c0_1] : memref<1x4x256xf32, #tpu.memory_space<vmem>>, vector<1x4x256xf32>
    %1 = vector.shape_cast %0 : vector<1x4x256xf32> to vector<4x256xf32>
    %c0_2 = arith.constant 0 : index
    %c0_3 = arith.constant 0 : index
    %2 = vector.load %arg4[%c0_2, %c0_3] : memref<4x1xf32, #tpu.memory_space<vmem>>, vector<4x1xf32>
    %3 = vector.broadcast %2 : vector<4x1xf32> to vector<4x256xf32>
    %4 = arith.mulf %1, %3 : vector<4x256xf32>
    %c0_4 = arith.constant 0 : index
    %c0_5 = arith.constant 0 : index
    %5 = vector.load %arg5[%c0_4, %c0_5] : memref<4x1xf32, #tpu.memory_space<vmem>>, vector<4x1xf32>
    %6 = vector.broadcast %5 : vector<4x1xf32> to vector<4x256xf32>
    %7 = arith.addf %4, %6 : vector<4x256xf32>
    %cst = arith.constant 0.000000e+00 : f32
    %8 = vector.broadcast %cst : f32 to vector<4x256xf32>
    %9 = arith.maximumf %7, %8 : vector<4x256xf32>
    %c0_6 = arith.constant 0 : index
    %c0_7 = arith.constant 0 : index
    %10 = vector.load %arg3[%c0_6, %c0_7] : memref<16x4xf32, #tpu.memory_space<vmem>>, vector<16x4xf32>
    %cst_8 = arith.constant dense<0.000000e+00> : vector<16x256xf32>
    %11 = tpu.matmul %10, %9, %cst_8 {dimension_numbers = #tpu.dot_dimension_numbers<[1], [0], [0], [1], [0, 0, 1, 1], [], []>} : vector<16x4xf32>, vector<4x256xf32>, vector<16x256xf32> -> vector<16x256xf32>
    %c0_9 = arith.constant 0 : index
    %c0_10 = arith.constant 0 : index
    %12 = vector.load %arg6[%c0_9, %c0_10] : memref<16x1xf32, #tpu.memory_space<vmem>>, vector<16x1xf32>
    %13 = vector.broadcast %12 : vector<16x1xf32> to vector<16x256xf32>
    %14 = arith.addf %11, %13 : vector<16x256xf32>
    %cst_11 = arith.constant 0.000000e+00 : f32
    %15 = vector.broadcast %cst_11 : f32 to vector<16x256xf32>
    %16 = arith.maximumf %14, %15 : vector<16x256xf32>
    %c0_12 = arith.constant 0 : index
    %c0_13 = arith.constant 0 : index
    %c0_14 = arith.constant 0 : index
    %17 = vector.load %arg7[%c0_12, %c0_13, %c0_14] : memref<1x16x256xf32, #tpu.memory_space<vmem>>, vector<1x16x256xf32>
    %18 = vector.shape_cast %17 : vector<1x16x256xf32> to vector<16x256xf32>
    %19 = vector.shape_cast %16 : vector<16x256xf32> to vector<1x16x256xf32>
    tpu.vector_store %arg7[%c0_12, %c0_13, %c0_14], %19 {strides = array<i32>} : memref<1x16x256xf32, #tpu.memory_space<vmem>>, vector<1x16x256xf32>,
    return
  }
  func.func @transform_0(%arg0: i32, %arg1: i32) -> (i32, i32, i32) {
    %c0_i32 = arith.constant 0 : i32
    %c0_i32_0 = arith.constant 0 : i32
    return %arg0, %c0_i32, %arg1 : i32, i32, i32
  }
  func.func @transform_1(%arg0: i32, %arg1: i32) -> (i32, i32) {
    %c0_i32 = arith.constant 0 : i32
    %c0_i32_0 = arith.constant 0 : i32
    %c0_i32_1 = arith.constant 0 : i32
    return %c0_i32, %c0_i32_0 : i32, i32
  }
  func.func @transform_2(%arg0: i32, %arg1: i32) -> (i32, i32) {
    %c0_i32 = arith.constant 0 : i32
    %c0_i32_0 = arith.constant 0 : i32
    %c0_i32_1 = arith.constant 0 : i32
    return %c0_i32, %c0_i32_0 : i32, i32
  }
  func.func @transform_3(%arg0: i32, %arg1: i32) -> (i32, i32) {
    %c0_i32 = arith.constant 0 : i32
    %c0_i32_0 = arith.constant 0 : i32
    %c0_i32_1 = arith.constant 0 : i32
    return %c0_i32, %c0_i32_0 : i32, i32
  }
  func.func @transform_4(%arg0: i32, %arg1: i32) -> (i32, i32) {
    %c0_i32 = arith.constant 0 : i32
    %c0_i32_0 = arith.constant 0 : i32
    %c0_i32_1 = arith.constant 0 : i32
    return %c0_i32, %c0_i32_0 : i32, i32
  }
  func.func @transform_5(%arg0: i32, %arg1: i32) -> (i32, i32, i32) {
    %c0_i32 = arith.constant 0 : i32
    %c0_i32_0 = arith.constant 0 : i32
    return %arg0, %c0_i32, %arg1 : i32, i32, i32
  }
}

module attributes {stable_mosaic.version = 11 : i64} {
  func.func @_k2_body(%arg0: i32, %arg1: i32, %arg2: memref<1x4x1x8x8xf32, #tpu.memory_space<vmem>>, %arg3: memref<1x16x1x8x8xf32, #tpu.memory_space<vmem>>, %arg4: memref<1x16x1x8x8xf32, #tpu.memory_space<vmem>>, %arg5: memref<1x16x1x8x8xf32, #tpu.memory_space<vmem>>, %arg6: memref<4x432xf32, #tpu.memory_space<vmem>>, %arg7: memref<9x64xf32, #tpu.memory_space<vmem>>, %arg8: memref<1x8x1x8x8xf32, #tpu.memory_space<vmem>>) attributes {dimension_semantics = [#tpu.dimension_semantics<parallel>, #tpu.dimension_semantics<parallel>], iteration_bounds = array<i64: 2, 8>, scalar_prefetch = 0 : i64, scratch_operands = 0 : i64, tpu.core_type = #tpu.core_type<tc>, window_params = [{transform_indices = @transform_0, window_bounds = array<i64: 1, 4, 1, 8, 8>}, {transform_indices = @transform_1, window_bounds = array<i64: 1, 16, 1, 8, 8>}, {transform_indices = @transform_2, window_bounds = array<i64: 1, 16, 1, 8, 8>}, {transform_indices = @transform_3, window_bounds = array<i64: 1, 16, 1, 8, 8>}, {pipeline_mode = #tpu.pipeline_mode<synchronous>, transform_indices = @transform_4, window_bounds = array<i64: 4, 432>}, {pipeline_mode = #tpu.pipeline_mode<synchronous>, transform_indices = @transform_5, window_bounds = array<i64: 9, 64>}, {transform_indices = @transform_6, window_bounds = array<i64: 1, 8, 1, 8, 8>}]} {
    %c0 = arith.constant 0 : index
    %c0_0 = arith.constant 0 : index
    %c0_1 = arith.constant 0 : index
    %c0_2 = arith.constant 0 : index
    %c0_3 = arith.constant 0 : index
    %0 = vector.load %arg2[%c0, %c0_0, %c0_1, %c0_2, %c0_3] : memref<1x4x1x8x8xf32, #tpu.memory_space<vmem>>, vector<1x4x1x8x8xf32>
    %1 = vector.shape_cast %0 : vector<1x4x1x8x8xf32> to vector<4x8x8xf32>
    %c0_4 = arith.constant 0 : index
    %c0_5 = arith.constant 0 : index
    %c0_6 = arith.constant 0 : index
    %c0_7 = arith.constant 0 : index
    %c0_8 = arith.constant 0 : index
    %2 = vector.load %arg8[%c0_4, %c0_5, %c0_6, %c0_7, %c0_8] : memref<1x8x1x8x8xf32, #tpu.memory_space<vmem>>, vector<1x4x1x8x8xf32>
    %3 = vector.shape_cast %2 : vector<1x4x1x8x8xf32> to vector<4x8x8xf32>
    %4 = vector.shape_cast %1 : vector<4x8x8xf32> to vector<1x4x1x8x8xf32>
    tpu.vector_store %arg8[%c0_4, %c0_5, %c0_6, %c0_7, %c0_8], %4 {strides = array<i32>} : memref<1x8x1x8x8xf32, #tpu.memory_space<vmem>>, vector<1x4x1x8x8xf32>,
    %c0_9 = arith.constant 0 : index
    %c0_10 = arith.constant 0 : index
    %c0_11 = arith.constant 0 : index
    %c0_12 = arith.constant 0 : index
    %c0_13 = arith.constant 0 : index
    %5 = vector.load %arg3[%c0_9, %c0_10, %c0_11, %c0_12, %c0_13] : memref<1x16x1x8x8xf32, #tpu.memory_space<vmem>>, vector<1x16x1x8x8xf32>
    %6 = vector.shape_cast %5 : vector<1x16x1x8x8xf32> to vector<16x8x8xf32>
    %7 = vector.shape_cast %6 : vector<16x8x8xf32> to vector<16x64xf32>
    %c0_i32 = arith.constant 0 : i32
    %8 = arith.cmpi eq, %arg1, %c0_i32 : i32
    %cst = arith.constant 0.000000e+00 : f32
    %cst_14 = arith.constant 1.000000e+00 : f32
    %9 = arith.select %8, %cst, %cst_14 : f32
    %10 = vector.broadcast %9 : f32 to vector<16x64xf32>
    %11 = arith.mulf %7, %10 : vector<16x64xf32>
    %c0_15 = arith.constant 0 : index
    %c0_16 = arith.constant 0 : index
    %c0_17 = arith.constant 0 : index
    %c0_18 = arith.constant 0 : index
    %c0_19 = arith.constant 0 : index
    %12 = vector.load %arg4[%c0_15, %c0_16, %c0_17, %c0_18, %c0_19] : memref<1x16x1x8x8xf32, #tpu.memory_space<vmem>>, vector<1x16x1x8x8xf32>
    %13 = vector.shape_cast %12 : vector<1x16x1x8x8xf32> to vector<16x8x8xf32>
    %14 = vector.shape_cast %13 : vector<16x8x8xf32> to vector<16x64xf32>
    %c0_20 = arith.constant 0 : index
    %c0_21 = arith.constant 0 : index
    %c0_22 = arith.constant 0 : index
    %c0_23 = arith.constant 0 : index
    %c0_24 = arith.constant 0 : index
    %15 = vector.load %arg5[%c0_20, %c0_21, %c0_22, %c0_23, %c0_24] : memref<1x16x1x8x8xf32, #tpu.memory_space<vmem>>, vector<1x16x1x8x8xf32>
    %16 = vector.shape_cast %15 : vector<1x16x1x8x8xf32> to vector<16x8x8xf32>
    %17 = vector.shape_cast %16 : vector<16x8x8xf32> to vector<16x64xf32>
    %c7_i32 = arith.constant 7 : i32
    %18 = arith.cmpi eq, %arg1, %c7_i32 : i32
    %cst_25 = arith.constant 0.000000e+00 : f32
    %cst_26 = arith.constant 1.000000e+00 : f32
    %19 = arith.select %18, %cst_25, %cst_26 : f32
    %20 = vector.broadcast %19 : f32 to vector<16x64xf32>
    %21 = arith.mulf %17, %20 : vector<16x64xf32>
    %cst_27 = arith.constant 0.000000e+00 : f32
    %22 = vector.broadcast %cst_27 : f32 to vector<16x9xf32>
    %23 = tpu.concatenate %22, %11, %22 in 1 : vector<16x9xf32>, vector<16x64xf32>, vector<16x9xf32> -> vector<16x82xf32>
    %24 = vector.extract_strided_slice %23 {offsets = [0, 0], sizes = [16, 64], strides = [1, 1]} : vector<16x82xf32> to vector<16x64xf32>
    %c0_28 = arith.constant 0 : index
    %c0_29 = arith.constant 0 : index
    %25 = vector.load %arg7[%c0_28, %c0_29] : memref<9x64xf32, #tpu.memory_space<vmem>>, vector<1x64xf32>
    %26 = vector.broadcast %25 : vector<1x64xf32> to vector<16x64xf32>
    %27 = arith.mulf %24, %26 : vector<16x64xf32>
    %28 = vector.extract_strided_slice %23 {offsets = [0, 1], sizes = [16, 64], strides = [1, 1]} : vector<16x82xf32> to vector<16x64xf32>
    %c1 = arith.constant 1 : index
    %c0_30 = arith.constant 0 : index
    %29 = vector.load %arg7[%c1, %c0_30] : memref<9x64xf32, #tpu.memory_space<vmem>>, vector<1x64xf32>
    %30 = vector.broadcast %29 : vector<1x64xf32> to vector<16x64xf32>
    %31 = arith.mulf %28, %30 : vector<16x64xf32>
    %32 = vector.extract_strided_slice %23 {offsets = [0, 2], sizes = [16, 64], strides = [1, 1]} : vector<16x82xf32> to vector<16x64xf32>
    %c2 = arith.constant 2 : index
    %c0_31 = arith.constant 0 : index
    %33 = vector.load %arg7[%c2, %c0_31] : memref<9x64xf32, #tpu.memory_space<vmem>>, vector<1x64xf32>
    %34 = vector.broadcast %33 : vector<1x64xf32> to vector<16x64xf32>
    %35 = arith.mulf %32, %34 : vector<16x64xf32>
    %36 = vector.extract_strided_slice %23 {offsets = [0, 8], sizes = [16, 64], strides = [1, 1]} : vector<16x82xf32> to vector<16x64xf32>
    %c3 = arith.constant 3 : index
    %c0_32 = arith.constant 0 : index
    %37 = vector.load %arg7[%c3, %c0_32] : memref<9x64xf32, #tpu.memory_space<vmem>>, vector<1x64xf32>
    %38 = vector.broadcast %37 : vector<1x64xf32> to vector<16x64xf32>
    %39 = arith.mulf %36, %38 : vector<16x64xf32>
    %40 = vector.extract_strided_slice %23 {offsets = [0, 10], sizes = [16, 64], strides = [1, 1]} : vector<16x82xf32> to vector<16x64xf32>
    %c5 = arith.constant 5 : index
    %c0_33 = arith.constant 0 : index
    %41 = vector.load %arg7[%c5, %c0_33] : memref<9x64xf32, #tpu.memory_space<vmem>>, vector<1x64xf32>
    %42 = vector.broadcast %41 : vector<1x64xf32> to vector<16x64xf32>
    %43 = arith.mulf %40, %42 : vector<16x64xf32>
    %44 = vector.extract_strided_slice %23 {offsets = [0, 16], sizes = [16, 64], strides = [1, 1]} : vector<16x82xf32> to vector<16x64xf32>
    %c6 = arith.constant 6 : index
    %c0_34 = arith.constant 0 : index
    %45 = vector.load %arg7[%c6, %c0_34] : memref<9x64xf32, #tpu.memory_space<vmem>>, vector<1x64xf32>
    %46 = vector.broadcast %45 : vector<1x64xf32> to vector<16x64xf32>
    %47 = arith.mulf %44, %46 : vector<16x64xf32>
    %48 = vector.extract_strided_slice %23 {offsets = [0, 17], sizes = [16, 64], strides = [1, 1]} : vector<16x82xf32> to vector<16x64xf32>
    %c7 = arith.constant 7 : index
    %c0_35 = arith.constant 0 : index
    %49 = vector.load %arg7[%c7, %c0_35] : memref<9x64xf32, #tpu.memory_space<vmem>>, vector<1x64xf32>
    %50 = vector.broadcast %49 : vector<1x64xf32> to vector<16x64xf32>
    %51 = arith.mulf %48, %50 : vector<16x64xf32>
    %52 = vector.extract_strided_slice %23 {offsets = [0, 18], sizes = [16, 64], strides = [1, 1]} : vector<16x82xf32> to vector<16x64xf32>
    %c8 = arith.constant 8 : index
    %c0_36 = arith.constant 0 : index
    %53 = vector.load %arg7[%c8, %c0_36] : memref<9x64xf32, #tpu.memory_space<vmem>>, vector<1x64xf32>
    %54 = vector.broadcast %53 : vector<1x64xf32> to vector<16x64xf32>
    %55 = arith.mulf %52, %54 : vector<16x64xf32>
    %56 = tpu.concatenate %22, %14, %22 in 1 : vector<16x9xf32>, vector<16x64xf32>, vector<16x9xf32> -> vector<16x82xf32>
    %57 = vector.extract_strided_slice %56 {offsets = [0, 0], sizes = [16, 64], strides = [1, 1]} : vector<16x82xf32> to vector<16x64xf32>
    %c0_37 = arith.constant 0 : index
    %c0_38 = arith.constant 0 : index
    %58 = vector.load %arg7[%c0_37, %c0_38] : memref<9x64xf32, #tpu.memory_space<vmem>>, vector<1x64xf32>
    %59 = vector.broadcast %58 : vector<1x64xf32> to vector<16x64xf32>
    %60 = arith.mulf %57, %59 : vector<16x64xf32>
    %61 = vector.extract_strided_slice %56 {offsets = [0, 1], sizes = [16, 64], strides = [1, 1]} : vector<16x82xf32> to vector<16x64xf32>
    %c1_39 = arith.constant 1 : index
    %c0_40 = arith.constant 0 : index
    %62 = vector.load %arg7[%c1_39, %c0_40] : memref<9x64xf32, #tpu.memory_space<vmem>>, vector<1x64xf32>
    %63 = vector.broadcast %62 : vector<1x64xf32> to vector<16x64xf32>
    %64 = arith.mulf %61, %63 : vector<16x64xf32>
    %65 = vector.extract_strided_slice %56 {offsets = [0, 2], sizes = [16, 64], strides = [1, 1]} : vector<16x82xf32> to vector<16x64xf32>
    %c2_41 = arith.constant 2 : index
    %c0_42 = arith.constant 0 : index
    %66 = vector.load %arg7[%c2_41, %c0_42] : memref<9x64xf32, #tpu.memory_space<vmem>>, vector<1x64xf32>
    %67 = vector.broadcast %66 : vector<1x64xf32> to vector<16x64xf32>
    %68 = arith.mulf %65, %67 : vector<16x64xf32>
    %69 = vector.extract_strided_slice %56 {offsets = [0, 8], sizes = [16, 64], strides = [1, 1]} : vector<16x82xf32> to vector<16x64xf32>
    %c3_43 = arith.constant 3 : index
    %c0_44 = arith.constant 0 : index
    %70 = vector.load %arg7[%c3_43, %c0_44] : memref<9x64xf32, #tpu.memory_space<vmem>>, vector<1x64xf32>
    %71 = vector.broadcast %70 : vector<1x64xf32> to vector<16x64xf32>
    %72 = arith.mulf %69, %71 : vector<16x64xf32>
    %73 = vector.extract_strided_slice %56 {offsets = [0, 10], sizes = [16, 64], strides = [1, 1]} : vector<16x82xf32> to vector<16x64xf32>
    %c5_45 = arith.constant 5 : index
    %c0_46 = arith.constant 0 : index
    %74 = vector.load %arg7[%c5_45, %c0_46] : memref<9x64xf32, #tpu.memory_space<vmem>>, vector<1x64xf32>
    %75 = vector.broadcast %74 : vector<1x64xf32> to vector<16x64xf32>
    %76 = arith.mulf %73, %75 : vector<16x64xf32>
    %77 = vector.extract_strided_slice %56 {offsets = [0, 16], sizes = [16, 64], strides = [1, 1]} : vector<16x82xf32> to vector<16x64xf32>
    %c6_47 = arith.constant 6 : index
    %c0_48 = arith.constant 0 : index
    %78 = vector.load %arg7[%c6_47, %c0_48] : memref<9x64xf32, #tpu.memory_space<vmem>>, vector<1x64xf32>
    %79 = vector.broadcast %78 : vector<1x64xf32> to vector<16x64xf32>
    %80 = arith.mulf %77, %79 : vector<16x64xf32>
    %81 = vector.extract_strided_slice %56 {offsets = [0, 17], sizes = [16, 64], strides = [1, 1]} : vector<16x82xf32> to vector<16x64xf32>
    %c7_49 = arith.constant 7 : index
    %c0_50 = arith.constant 0 : index
    %82 = vector.load %arg7[%c7_49, %c0_50] : memref<9x64xf32, #tpu.memory_space<vmem>>, vector<1x64xf32>
    %83 = vector.broadcast %82 : vector<1x64xf32> to vector<16x64xf32>
    %84 = arith.mulf %81, %83 : vector<16x64xf32>
    %85 = vector.extract_strided_slice %56 {offsets = [0, 18], sizes = [16, 64], strides = [1, 1]} : vector<16x82xf32> to vector<16x64xf32>
    %c8_51 = arith.constant 8 : index
    %c0_52 = arith.constant 0 : index
    %86 = vector.load %arg7[%c8_51, %c0_52] : memref<9x64xf32, #tpu.memory_space<vmem>>, vector<1x64xf32>
    %87 = vector.broadcast %86 : vector<1x64xf32> to vector<16x64xf32>
    %88 = arith.mulf %85, %87 : vector<16x64xf32>
    %89 = tpu.concatenate %22, %21, %22 in 1 : vector<16x9xf32>, vector<16x64xf32>, vector<16x9xf32> -> vector<16x82xf32>
    %90 = vector.extract_strided_slice %89 {offsets = [0, 0], sizes = [16, 64], strides = [1, 1]} : vector<16x82xf32> to vector<16x64xf32>
    %c0_53 = arith.constant 0 : index
    %c0_54 = arith.constant 0 : index
    %91 = vector.load %arg7[%c0_53, %c0_54] : memref<9x64xf32, #tpu.memory_space<vmem>>, vector<1x64xf32>
    %92 = vector.broadcast %91 : vector<1x64xf32> to vector<16x64xf32>
    %93 = arith.mulf %90, %92 : vector<16x64xf32>
    %94 = vector.extract_strided_slice %89 {offsets = [0, 1], sizes = [16, 64], strides = [1, 1]} : vector<16x82xf32> to vector<16x64xf32>
    %c1_55 = arith.constant 1 : index
    %c0_56 = arith.constant 0 : index
    %95 = vector.load %arg7[%c1_55, %c0_56] : memref<9x64xf32, #tpu.memory_space<vmem>>, vector<1x64xf32>
    %96 = vector.broadcast %95 : vector<1x64xf32> to vector<16x64xf32>
    %97 = arith.mulf %94, %96 : vector<16x64xf32>
    %98 = vector.extract_strided_slice %89 {offsets = [0, 2], sizes = [16, 64], strides = [1, 1]} : vector<16x82xf32> to vector<16x64xf32>
    %c2_57 = arith.constant 2 : index
    %c0_58 = arith.constant 0 : index
    %99 = vector.load %arg7[%c2_57, %c0_58] : memref<9x64xf32, #tpu.memory_space<vmem>>, vector<1x64xf32>
    %100 = vector.broadcast %99 : vector<1x64xf32> to vector<16x64xf32>
    %101 = arith.mulf %98, %100 : vector<16x64xf32>
    %102 = vector.extract_strided_slice %89 {offsets = [0, 8], sizes = [16, 64], strides = [1, 1]} : vector<16x82xf32> to vector<16x64xf32>
    %c3_59 = arith.constant 3 : index
    %c0_60 = arith.constant 0 : index
    %103 = vector.load %arg7[%c3_59, %c0_60] : memref<9x64xf32, #tpu.memory_space<vmem>>, vector<1x64xf32>
    %104 = vector.broadcast %103 : vector<1x64xf32> to vector<16x64xf32>
    %105 = arith.mulf %102, %104 : vector<16x64xf32>
    %106 = vector.extract_strided_slice %89 {offsets = [0, 10], sizes = [16, 64], strides = [1, 1]} : vector<16x82xf32> to vector<16x64xf32>
    %c5_61 = arith.constant 5 : index
    %c0_62 = arith.constant 0 : index
    %107 = vector.load %arg7[%c5_61, %c0_62] : memref<9x64xf32, #tpu.memory_space<vmem>>, vector<1x64xf32>
    %108 = vector.broadcast %107 : vector<1x64xf32> to vector<16x64xf32>
    %109 = arith.mulf %106, %108 : vector<16x64xf32>
    %110 = vector.extract_strided_slice %89 {offsets = [0, 16], sizes = [16, 64], strides = [1, 1]} : vector<16x82xf32> to vector<16x64xf32>
    %c6_63 = arith.constant 6 : index
    %c0_64 = arith.constant 0 : index
    %111 = vector.load %arg7[%c6_63, %c0_64] : memref<9x64xf32, #tpu.memory_space<vmem>>, vector<1x64xf32>
    %112 = vector.broadcast %111 : vector<1x64xf32> to vector<16x64xf32>
    %113 = arith.mulf %110, %112 : vector<16x64xf32>
    %114 = vector.extract_strided_slice %89 {offsets = [0, 17], sizes = [16, 64], strides = [1, 1]} : vector<16x82xf32> to vector<16x64xf32>
    %c7_65 = arith.constant 7 : index
    %c0_66 = arith.constant 0 : index
    %115 = vector.load %arg7[%c7_65, %c0_66] : memref<9x64xf32, #tpu.memory_space<vmem>>, vector<1x64xf32>
    %116 = vector.broadcast %115 : vector<1x64xf32> to vector<16x64xf32>
    %117 = arith.mulf %114, %116 : vector<16x64xf32>
    %118 = vector.extract_strided_slice %89 {offsets = [0, 18], sizes = [16, 64], strides = [1, 1]} : vector<16x82xf32> to vector<16x64xf32>
    %c8_67 = arith.constant 8 : index
    %c0_68 = arith.constant 0 : index
    %119 = vector.load %arg7[%c8_67, %c0_68] : memref<9x64xf32, #tpu.memory_space<vmem>>, vector<1x64xf32>
    %120 = vector.broadcast %119 : vector<1x64xf32> to vector<16x64xf32>
    %121 = arith.mulf %118, %120 : vector<16x64xf32>
    %122 = tpu.concatenate %27, %31, %35, %39, %11, %43, %47, %51, %55, %60, %64, %68, %72, %14, %76, %80 in 0 : vector<16x64xf32>, vector<16x64xf32>, vector<16x64xf32>, vector<16x64xf32>, vector<16x64xf32>, vector<16x64xf32>, vector<16x64xf32>, vector<16x64xf32>, vector<16x64xf32>, vector<16x64xf32>, vector<16x64xf32>, vector<16x64xf32>, vector<16x64xf32>, vector<16x64xf32>, vector<16x64xf32>, vector<16x64xf32> -> vector<256x64xf32>
    %123 = tpu.concatenate %84, %88, %93, %97, %101, %105, %21, %109, %113, %117, %121 in 0 : vector<16x64xf32>, vector<16x64xf32>, vector<16x64xf32>, vector<16x64xf32>, vector<16x64xf32>, vector<16x64xf32>, vector<16x64xf32>, vector<16x64xf32>, vector<16x64xf32>, vector<16x64xf32>, vector<16x64xf32> -> vector<176x64xf32>
    %124 = tpu.concatenate %122, %123 in 0 : vector<256x64xf32>, vector<176x64xf32> -> vector<432x64xf32>
    %c0_69 = arith.constant 0 : index
    %c0_70 = arith.constant 0 : index
    %125 = vector.load %arg6[%c0_69, %c0_70] : memref<4x432xf32, #tpu.memory_space<vmem>>, vector<4x432xf32>
    %cst_71 = arith.constant dense<0.000000e+00> : vector<4x64xf32>
    %126 = tpu.matmul %125, %124, %cst_71 {dimension_numbers = #tpu.dot_dimension_numbers<[1], [0], [0], [1], [0, 0, 1, 1], [], []>} : vector<4x432xf32>, vector<432x64xf32>, vector<4x64xf32> -> vector<4x64xf32>
    %127 = vector.shape_cast %126 : vector<4x64xf32> to vector<4x8x8xf32>
    %c0_72 = arith.constant 0 : index
    %c4 = arith.constant 4 : index
    %c0_73 = arith.constant 0 : index
    %c0_74 = arith.constant 0 : index
    %c0_75 = arith.constant 0 : index
    %128 = vector.load %arg8[%c0_72, %c4, %c0_73, %c0_74, %c0_75] : memref<1x8x1x8x8xf32, #tpu.memory_space<vmem>>, vector<1x4x1x8x8xf32>
    %129 = vector.shape_cast %128 : vector<1x4x1x8x8xf32> to vector<4x8x8xf32>
    %130 = vector.shape_cast %127 : vector<4x8x8xf32> to vector<1x4x1x8x8xf32>
    tpu.vector_store %arg8[%c0_72, %c4, %c0_73, %c0_74, %c0_75], %130 {strides = array<i32>} : memref<1x8x1x8x8xf32, #tpu.memory_space<vmem>>, vector<1x4x1x8x8xf32>,
    return
  }
  func.func @transform_0(%arg0: i32, %arg1: i32) -> (i32, i32, i32, i32, i32) {
    %c0_i32 = arith.constant 0 : i32
    %c0_i32_0 = arith.constant 0 : i32
    %c0_i32_1 = arith.constant 0 : i32
    %c0_i32_2 = arith.constant 0 : i32
    return %arg0, %c0_i32, %arg1, %c0_i32_0, %c0_i32_1 : i32, i32, i32, i32, i32
  }
  func.func @transform_1(%arg0: i32, %arg1: i32) -> (i32, i32, i32, i32, i32) {
    %c1_i32 = arith.constant 1 : i32
    %0 = arith.subi %arg1, %c1_i32 : i32
    %c0_i32 = arith.constant 0 : i32
    %1 = arith.maxsi %0, %c0_i32 : i32
    %c0_i32_0 = arith.constant 0 : i32
    %c0_i32_1 = arith.constant 0 : i32
    %c0_i32_2 = arith.constant 0 : i32
    %c0_i32_3 = arith.constant 0 : i32
    return %arg0, %c0_i32_0, %1, %c0_i32_1, %c0_i32_2 : i32, i32, i32, i32, i32
  }
  func.func @transform_2(%arg0: i32, %arg1: i32) -> (i32, i32, i32, i32, i32) {
    %c0_i32 = arith.constant 0 : i32
    %c0_i32_0 = arith.constant 0 : i32
    %c0_i32_1 = arith.constant 0 : i32
    %c0_i32_2 = arith.constant 0 : i32
    return %arg0, %c0_i32, %arg1, %c0_i32_0, %c0_i32_1 : i32, i32, i32, i32, i32
  }
  func.func @transform_3(%arg0: i32, %arg1: i32) -> (i32, i32, i32, i32, i32) {
    %c1_i32 = arith.constant 1 : i32
    %0 = arith.addi %arg1, %c1_i32 : i32
    %c7_i32 = arith.constant 7 : i32
    %1 = arith.minsi %0, %c7_i32 : i32
    %c0_i32 = arith.constant 0 : i32
    %c0_i32_0 = arith.constant 0 : i32
    %c0_i32_1 = arith.constant 0 : i32
    %c0_i32_2 = arith.constant 0 : i32
    return %arg0, %c0_i32, %1, %c0_i32_0, %c0_i32_1 : i32, i32, i32, i32, i32
  }
  func.func @transform_4(%arg0: i32, %arg1: i32) -> (i32, i32) {
    %c0_i32 = arith.constant 0 : i32
    %c0_i32_0 = arith.constant 0 : i32
    %c0_i32_1 = arith.constant 0 : i32
    return %c0_i32, %c0_i32_0 : i32, i32
  }
  func.func @transform_5(%arg0: i32, %arg1: i32) -> (i32, i32) {
    %c0_i32 = arith.constant 0 : i32
    %c0_i32_0 = arith.constant 0 : i32
    %c0_i32_1 = arith.constant 0 : i32
    return %c0_i32, %c0_i32_0 : i32, i32
  }
  func.func @transform_6(%arg0: i32, %arg1: i32) -> (i32, i32, i32, i32, i32) {
    %c0_i32 = arith.constant 0 : i32
    %c0_i32_0 = arith.constant 0 : i32
    %c0_i32_1 = arith.constant 0 : i32
    %c0_i32_2 = arith.constant 0 : i32
    return %arg0, %c0_i32, %arg1, %c0_i32_0, %c0_i32_1 : i32, i32, i32, i32, i32
  }
}

</mosaic_0001>

<llo_original>
// kernel: _lambda_.2
$region0: #{_lambda_.2}
  #allocation0 [shape = 'u32[]', space=smem, size = 0x4, offset = 0x4, fixed_abs, tag = 'smem constant byte address 0x4 - core index']
  #allocation1 [shape = 'u32[144,128]{1,0:T(1,128)}', space=vmem, size = 0x12000, scoped, tag = 'internal scratch']
  %s0 = inlined_call_operand.vmem [shape: f32[2,4,512], index: 0, kind: input, shape index: {}]
  %s1 = inlined_call_operand.vmem [shape: f32[16,4], index: 1, kind: input, shape index: {}]
  %s2 = inlined_call_operand.vmem [shape: f32[4,1], index: 2, kind: input, shape index: {}]
  %s3 = inlined_call_operand.vmem [shape: f32[4,1], index: 3, kind: input, shape index: {}]
  %s4 = inlined_call_operand.vmem [shape: f32[16,1], index: 4, kind: input, shape index: {}]
  %s5 = inlined_call_operand.vmem [shape: f32[2,16,512], index: 5, kind: output, shape index: {}]
  %s6 = sld [smem:[#allocation0]]
  $region72: #{_lambda_.2} parent=0
    _
  %s8 = ssub.s32 1, %s6
  %s9 = scalar_select 0, %s8, %s6
  $region1: #{_lambda_.2} parent=0
    #allocation2 [shape = 'u8[32768]{0}', space=vmem, size = 0x8000, scoped, tag = 'output window, operand 0']
    loop: start=0, step=1, limit=6
    $region2: #{_lambda_.2} parent=1 // loop_pre_header
      _
    $region3: #{_lambda_.2} parent=1 // loop_header
      %s11 = sphi 0, %s15
      %p12 = scmp.ge.s32.totalorder %s11, 6
      %s18 = sphi 0, %s30
      %s19 = sphi 0, %s26
      %s20 = sphi 0, %s18
      %s21 = sphi 0, %s19
      %s22 = sphi 0, %s20
      %s23 = sphi 0, %s21
      %s35 = sphi 0, %s37
      %s38 = sphi 0, %s35
      %s39 = sphi 0, %s38
      %s55 = sphi 0, %s39
      %s59 = sphi 0, %s59
      %s61 = sphi 0, %s59
      %s62 = sphi 0, %s61
      %s76 = sphi 0, %s62
      %s80 = sphi 0, %s80
      %s82 = sphi 0, %s80
      %s83 = sphi 0, %s82
      %s97 = sphi 0, %s83
      %s101 = sphi 0, %s101
      %s103 = sphi 0, %s101
      %s104 = sphi 0, %s103
      %s118 = sphi 0, %s104
      %s122 = sphi 0, %s122
      %s124 = sphi 0, %s122
      %s125 = sphi 0, %s124
      %s139 = sphi 0, %s125
      %s147 = sphi 0, %s149
      %s150 = sphi 0, %s147
      %s151 = sphi 0, %s150
      %s167 = sphi 0, %s151
    $region4: #{_lambda_.2} parent=1 // loop_header_branch
      %14 = sbr.rel (%p12) target = $region8
    $region5: #{_lambda_.2} parent=1 // loop_body
      %s16 = ssub.s32 %s11, 1
      %s17 = ssub.s32 %s11, 2
      %s24 = sadd.s32 1, %s19
      %p25 = scmp.ge.s32.totalorder %s24, 2
      %s26 = scalar_select %p25, 0, %s24
      %s27 = sadd.s32 1, %s18
      %s28 = scalar_select %p25, %s27, %s18
      %p29 = scmp.ge.s32.totalorder %s28, 2
      %s30 = scalar_select %p29, 0, %s28
      %s31 = ssub.s32 %s18, %s30
      %s32 = ssub.s32 %s19, %s26
      %s33 = sor.u32 %s31, %s32
      %p34 = scmp.eq.s32.totalorder %s33, 0
      %s36 = sadd.s32 %s35, 1
      %s37 = scalar_select %p34, %s35, %s36
      %p40 = pneg %p34
      %p41 = scmp.eq.s32.totalorder %s11, 3
      %p42 = por %p40, %p41
      %p43 = scmp.ne.s32.totalorder %s35, %s38
      %p44 = scmp.eq.s32.totalorder %s11, 0
      %p45 = por %p43, %p44
      %p46 = scmp.ne.s32.totalorder %s35, %s38
      %p47 = scmp.eq.s32.totalorder %s16, 3
      %p48 = por %p46, %p47
      %p49 = scmp.ne.s32.totalorder %s38, %s39
      %p50 = scmp.eq.s32.totalorder %s16, 0
      %p51 = por %p49, %p50
      %p52 = scmp.ne.s32.totalorder %s38, %s39
      %p53 = scmp.eq.s32.totalorder %s17, 3
      %p54 = por %p52, %p53
      %p56 = scmp.ne.s32.totalorder %s39, %s55
      %p57 = scmp.eq.s32.totalorder %s17, 0
      %p58 = por %p56, %p57
      %s60 = sadd.s32 %s59, 1
      %p63 = scmp.eq.s32.totalorder %s11, 3
      %p64 = scmp.ne.s32.totalorder %s59, %s61
      %p65 = scmp.eq.s32.totalorder %s11, 0
      %p66 = por %p64, %p65
      %p67 = scmp.ne.s32.totalorder %s59, %s61
      %p68 = scmp.eq.s32.totalorder %s16, 3
      %p69 = por %p67, %p68
      %p70 = scmp.ne.s32.totalorder %s61, %s62
      %p71 = scmp.eq.s32.totalorder %s16, 0
      %p72 = por %p70, %p71
      %p73 = scmp.ne.s32.totalorder %s61, %s62
      %p74 = scmp.eq.s32.totalorder %s17, 3
      %p75 = por %p73, %p74
      %p77 = scmp.ne.s32.totalorder %s62, %s76
      %p78 = scmp.eq.s32.totalorder %s17, 0
      %p79 = por %p77, %p78
      %s81 = sadd.s32 %s80, 1
      %p84 = scmp.eq.s32.totalorder %s11, 3
      %p85 = scmp.ne.s32.totalorder %s80, %s82
      %p86 = scmp.eq.s32.totalorder %s11, 0
      %p87 = por %p85, %p86
      %p88 = scmp.ne.s32.totalorder %s80, %s82
      %p89 = scmp.eq.s32.totalorder %s16, 3
      %p90 = por %p88, %p89
      %p91 = scmp.ne.s32.totalorder %s82, %s83
      %p92 = scmp.eq.s32.totalorder %s16, 0
      %p93 = por %p91, %p92
      %p94 = scmp.ne.s32.totalorder %s82, %s83
      %p95 = scmp.eq.s32.totalorder %s17, 3
      %p96 = por %p94, %p95
      %p98 = scmp.ne.s32.totalorder %s83, %s97
      %p99 = scmp.eq.s32.totalorder %s17, 0
      %p100 = por %p98, %p99
      %s102 = sadd.s32 %s101, 1
      %p105 = scmp.eq.s32.totalorder %s11, 3
      %p106 = scmp.ne.s32.totalorder %s101, %s103
      %p107 = scmp.eq.s32.totalorder %s11, 0
      %p108 = por %p106, %p107
      %p109 = scmp.ne.s32.totalorder %s101, %s103
      %p110 = scmp.eq.s32.totalorder %s16, 3
      %p111 = por %p109, %p110
      %p112 = scmp.ne.s32.totalorder %s103, %s104
      %p113 = scmp.eq.s32.totalorder %s16, 0
      %p114 = por %p112, %p113
      %p115 = scmp.ne.s32.totalorder %s103, %s104
      %p116 = scmp.eq.s32.totalorder %s17, 3
      %p117 = por %p115, %p116
      %p119 = scmp.ne.s32.totalorder %s104, %s118
      %p120 = scmp.eq.s32.totalorder %s17, 0
      %p121 = por %p119, %p120
      %s123 = sadd.s32 %s122, 1
      %p126 = scmp.eq.s32.totalorder %s11, 3
      %p127 = scmp.ne.s32.totalorder %s122, %s124
      %p128 = scmp.eq.s32.totalorder %s11, 0
      %p129 = por %p127, %p128
      %p130 = scmp.ne.s32.totalorder %s122, %s124
      %p131 = scmp.eq.s32.totalorder %s16, 3
      %p132 = por %p130, %p131
      %p133 = scmp.ne.s32.totalorder %s124, %s125
      %p134 = scmp.eq.s32.totalorder %s16, 0
      %p135 = por %p133, %p134
      %p136 = scmp.ne.s32.totalorder %s124, %s125
      %p137 = scmp.eq.s32.totalorder %s17, 3
      %p138 = por %p136, %p137
      %p140 = scmp.ne.s32.totalorder %s125, %s139
      %p141 = scmp.eq.s32.totalorder %s17, 0
      %p142 = por %p140, %p141
      %s143 = ssub.s32 %s18, %s30
      %s144 = ssub.s32 %s19, %s26
      %s145 = sor.u32 %s143, %s144
      %p146 = scmp.eq.s32.totalorder %s145, 0
      %s148 = sadd.s32 %s147, 1
      %s149 = scalar_select %p146, %s147, %s148
      %p152 = pneg %p146
      %p153 = scmp.eq.s32.totalorder %s11, 3
      %p154 = por %p152, %p153
      %p155 = scmp.ne.s32.totalorder %s147, %s150
      %p156 = scmp.eq.s32.totalorder %s11, 0
      %p157 = por %p155, %p156
      %p158 = scmp.ne.s32.totalorder %s147, %s150
      %p159 = scmp.eq.s32.totalorder %s16, 3
      %p160 = por %p158, %p159
      %p161 = scmp.ne.s32.totalorder %s150, %s151
      %p162 = scmp.eq.s32.totalorder %s16, 0
      %p163 = por %p161, %p162
      %p164 = scmp.ne.s32.totalorder %s150, %s151
      %p165 = scmp.eq.s32.totalorder %s17, 3
      %p166 = por %p164, %p165
      %p168 = scmp.ne.s32.totalorder %s151, %s167
      %p169 = scmp.eq.s32.totalorder %s17, 0
      %p170 = por %p168, %p169
      %p171 = scmp.le.s32.totalorder 1, %s11
      %p172 = scmp.lt.s32.totalorder %s11, 5
      %p173 = pnand %p171, %p172
      %p174 = pneg %p173
      // Predicated region
      $region9: #{_lambda_.2} parent=5 // pred_check
        _
      $region10: #{_lambda_.2} parent=5 // pred_check_branch
        %176 = sbr.rel (%p173) target = $region12
      $region11: #{_lambda_.2} parent=5 // pred_region
        %s177 = ssub.s32 %s11, 1
        // Predicated region
        $region13: #{_lambda_.2} parent=11 // pred_check
          %p178 = pneg %p72
        $region14: #{_lambda_.2} parent=11 // pred_check_branch
          %180 = sbr.rel (%p178) target = $region16
        $region15: #{_lambda_.2} parent=11 // pred_region
          _
        $region16: #{_lambda_.2} parent=11 // pred_fallthru
          _
        // Predicated region
        $region17: #{_lambda_.2} parent=11 // pred_check
          %p181 = pneg %p93
        $region18: #{_lambda_.2} parent=11 // pred_check_branch
          %183 = sbr.rel (%p181) target = $region20
        $region19: #{_lambda_.2} parent=11 // pred_region
          _
        $region20: #{_lambda_.2} parent=11 // pred_fallthru
          _
        // Predicated region
        $region21: #{_lambda_.2} parent=11 // pred_check
          %p184 = pneg %p114
        $region22: #{_lambda_.2} parent=11 // pred_check_branch
          %186 = sbr.rel (%p184) target = $region24
        $region23: #{_lambda_.2} parent=11 // pred_region
          _
        $region24: #{_lambda_.2} parent=11 // pred_fallthru
          _
        // Predicated region
        $region25: #{_lambda_.2} parent=11 // pred_check
          %p187 = pneg %p135
        $region26: #{_lambda_.2} parent=11 // pred_check_branch
          %189 = sbr.rel (%p187) target = $region28
        $region27: #{_lambda_.2} parent=11 // pred_region
          _
        $region28: #{_lambda_.2} parent=11 // pred_fallthru
          _
      $region12: #{_lambda_.2} parent=5 // pred_fallthru
        _
      %p190 = scmp.lt.s32.totalorder %s11, 4
      // Predicated region
      $region29: #{_lambda_.2} parent=5 // pred_check
        %p191 = pneg %p190
      $region30: #{_lambda_.2} parent=5 // pred_check_branch
        %193 = sbr.rel (%p191) target = $region32
      $region31: #{_lambda_.2} parent=5 // pred_region
        // Predicated region
        $region33: #{_lambda_.2} parent=31 // pred_check
          %p194 = pneg %p45
        $region34: #{_lambda_.2} parent=31 // pred_check_branch
          %196 = sbr.rel (%p194) target = $region36
        $region35: #{_lambda_.2} parent=31 // pred_region
          %s197 = smul.u32 2, %s19
          %p198 = scmp.lt.s32.totalorder %s18, 1
          %s199 = scalar_select %p198, %s18, 1
          %p200 = scmp.lt.s32.totalorder %s197, 3
          %s201 = scalar_select %p200, %s197, 3
          %s202 = smul.addr %s199, 4
          %s203 = sadd.s32 %s201, %s202
          %s204 = smul.addr %s203, 4
          %s205 = scalar_lea.vmem %s0, %s204
          %s206 = smul.u32 2, %s19
        $region36: #{_lambda_.2} parent=31 // pred_fallthru
          _
      $region32: #{_lambda_.2} parent=5 // pred_fallthru
        _
      %p207 = scmp.le.s32.totalorder 1, %s11
      %p208 = scmp.lt.s32.totalorder %s11, 5
      %p209 = pnand %p207, %p208
      %p210 = pneg %p209
      // Predicated region
      $region37: #{_lambda_.2} parent=5 // pred_check
        _
      $region38: #{_lambda_.2} parent=5 // pred_check_branch
        %212 = sbr.rel (%p209) target = $region40
      $region39: #{_lambda_.2} parent=5 // pred_region
        %s213 = ssub.s32 %s11, 1
        %s214 = smul.u32 2, %s21
        %p215 = scmp.lt.s32.totalorder %s20, 1
        %s216 = scalar_select %p215, %s20, 1
        %p217 = scmp.lt.s32.totalorder %s214, 3
        %s218 = scalar_select %p217, %s214, 3
        %s219 = smul.addr %s216, 4
        %s220 = sadd.s32 %s218, %s219
        %s221 = smul.addr %s220, 4
        %s222 = scalar_lea.vmem %s0, %s221
        %p223 = pneg %p51
        %p224 = pneg %p48
        %p225 = pneg %p72
        %p226 = pneg %p69
        %p227 = pneg %p93
        %p228 = pneg %p90
        %p229 = pneg %p114
        %p230 = pneg %p111
        %p231 = pneg %p135
        %p232 = pneg %p132
        %p233 = pneg %p163
        %p234 = pneg %p160
        %s235 = sand.u32 %s150, 1
        %s236 = sand.u32 %s150, 1
        %s237 = smul.addr %s236, 32
        %s238 = scalar_lea.vmem [#allocation2], %s237
        %s239 = smul.u32 2, %s21
        %p240 = scmp.lt.s32.totalorder %s20, 1
        %s241 = scalar_select %p240, %s20, 1
        %p242 = scmp.lt.s32.totalorder %s239, 3
        %s243 = scalar_select %p242, %s239, 3
        %s244 = smul.addr %s241, 4
        %s245 = sadd.s32 %s243, %s244
        %s246 = smul.addr %s245, 4
        %s247 = scalar_lea.vmem %s0, %s246
        %s248 = smul.u32 2, %s21
        %s249 = smul.u32 2, %s21
        %v250 = vld [vmem:[%s247] sm:$0xff]
        %v251 = vld [vmem:[%s2] sm:$0xf]
        %253 = vset.pattern.permute.xlu0 0
        %254 = vperm.xlu0 %253, %v251
        %v255 = vpop.permute.xlu0 %254
        %v257 = vunpack.c.l.s4 839922192
        %v258 = vunpack.c.0.s8 %v257
        %v259 = vlaneseq
        %v260 = vshrl.u32 %v259, 7
        %v261 = vsub.s32 %v258, %v260
        %v262 = vrot.slane %v255, %v261
        %v264 = vmul.f32 %v250, %v262
        %v265 = vld [vmem:[%s3] sm:$0xf]
        %267 = vset.pattern.permute.xlu0 0
        %268 = vperm.xlu0 %267, %v265
        %v269 = vpop.permute.xlu0 %268
        %v271 = vunpack.c.l.s4 839922192
        %v272 = vunpack.c.0.s8 %v271
        %v273 = vlaneseq
        %v274 = vshrl.u32 %v273, 7
        %v275 = vsub.s32 %v272, %v274
        %v276 = vrot.slane %v269, %v275
        %v278 = vadd.f32 %v264, %v276
        %v279 = vmax.f32 %v278, 0.0
        %v280 = vld [vmem:[%s1] sm:$0xff]
        %v281 = vld [vmem:[%s1 + $0x8] sm:$0xff]
        %v282 = vld [vmem:[%s4] sm:$0xff]
        %v283 = vld [vmem:[%s4 + $0x8] sm:$0xff]
        %285 = vset.pattern.permute.xlu0 0
        %286 = vperm.xlu0 %285, %v282
        %v287 = vpop.permute.xlu0 %286
        %290 = vset.pattern.permute.xlu0 0
        %291 = vperm.xlu0 %290, %v283
        %v292 = vpop.permute.xlu0 %291
        %v295 = vcombine.high %v279, %v279
        %vm296 = vcmask 31744
        %v298 = vsel %vm296, %v280, 0
        %v301 = vsel %vm296, %v281, 0
        %vm303 = vcmask 1043456
        %v304 = vsel %vm303, %v279, 0
        %v306 = vsel %vm303, %v295, 0
        %308 = vmatprep.subr.mxu0 %v306
        %309 = vmatpush1.msra.mxu0 %v304
        %310 = vmatprep.subr.mxu0 0.0
        %311 = vmatpush1.msra.mxu0 0.0
        %312 = vmatprep.subr.mxu0 0.0
        %313 = vmatpush1.msra.mxu0 0.0
        %314 = vmatprep.subr.mxu0 0.0
        %315 = vmatpush1.msra.mxu0 0.0
        %316 = vmatprep.subr.mxu0 0.0
        %317 = vmatpush1.msra.mxu0 0.0
        %318 = vmatprep.subr.mxu0 0.0
        %319 = vmatpush1.msra.mxu0 0.0
        %320 = vmatprep.subr.mxu0 0.0
        %321 = vmatpush1.msra.mxu0 0.0
        %322 = vmatprep.subr.mxu0 0.0
        %323 = vmatpush1.msra.mxu0 0.0
        %324 = vmatprep.subr.mxu0 0.0
        %325 = vmatpush1.msra.mxu0 0.0
        %326 = vmatprep.subr.mxu0 0.0
        %327 = vmatpush1.msra.mxu0 0.0
        %328 = vmatprep.subr.mxu0 0.0
        %329 = vmatpush1.msra.mxu0 0.0
        %330 = vmatprep.subr.mxu0 0.0
        %331 = vmatpush1.msra.mxu0 0.0
        %332 = vmatprep.subr.mxu0 0.0
        %333 = vmatpush1.msra.mxu0 0.0
        %334 = vmatprep.subr.mxu0 0.0
        %335 = vmatpush1.msra.mxu0 0.0
        %336 = vmatprep.subr.mxu0 0.0
        %337 = vmatpush1.msra.mxu0 0.0
        %338 = vmatprep.subr.mxu0 0.0
        %339 = vmatpush1.msra.mxu0 0.0
        %340 = vmatprep.subr.mxu0 0.0
        %341 = vmatpush1.msra.mxu0 0.0
        %342 = vmatprep.subr.mxu0 0.0
        %343 = vmatpush1.msra.mxu0 0.0
        %344 = vmatprep.subr.mxu0 0.0
        %345 = vmatpush1.msra.mxu0 0.0
        %346 = vmatprep.subr.mxu0 0.0
        %347 = vmatpush1.msra.mxu0 0.0
        %348 = vmatprep.subr.mxu0 0.0
        %349 = vmatpush1.msra.mxu0 0.0
        %350 = vmatprep.subr.mxu0 0.0
        %351 = vmatpush1.msra.mxu0 0.0
        %352 = vmatprep.subr.mxu0 0.0
        %353 = vmatpush1.msra.mxu0 0.0
        %354 = vmatprep.subr.mxu0 0.0
        %355 = vmatpush1.msra.mxu0 0.0
        %356 = vmatprep.subr.mxu0 0.0
        %357 = vmatpush1.msra.mxu0 0.0
        %358 = vmatprep.subr.mxu0 0.0
        %359 = vmatpush1.msra.mxu0 0.0
        %360 = vmatprep.subr.mxu0 0.0
        %361 = vmatpush1.msra.mxu0 0.0
        %362 = vmatprep.subr.mxu0 0.0
        %363 = vmatpush1.msra.mxu0 0.0
        %364 = vmatprep.subr.mxu0 0.0
        %365 = vmatpush1.msra.mxu0 0.0
        %366 = vmatprep.subr.mxu0 0.0
        %367 = vmatpush1.msra.mxu0 0.0
        %368 = vmatprep.subr.mxu0 0.0
        %369 = vmatpush1.msra.mxu0 0.0
        %370 = vmatprep.subr.mxu0 0.0
        %371 = vmatpush1.msra.mxu0 0.0
        %372 = vmatprep.mubr.f32.mxu0 0.0
        %373 = vmatmul.mubr.f32.gmra.mrb[0].mxu0 %v298
        %v374 = vpop.f32.mrb[0].mxu0
        %v375 = vadd.f32 %v287, %v374
        %v376 = vpop.f32.mrb[0].mxu0
        %v377 = vadd.f32 %v287, %v376
        %378 = vmatprep.mubr.f32.mxu0 0.0
        %379 = vmatmul.mubr.f32.gmra.mrb[0].mxu0 %v301
        %v380 = vpop.f32.mrb[0].mxu0
        %v381 = vadd.f32 %v292, %v380
        %v382 = vpop.f32.mrb[0].mxu0
        %v383 = vadd.f32 %v292, %v382
        %384 = vdwg.mxu0
        %v385 = vmax.f32 %v375, 0.0
        %v386 = vmax.f32 %v377, 0.0
        %v387 = vmax.f32 %v381, 0.0
        %v388 = vmax.f32 %v383, 0.0
        %389 = vst [vmem:[%s238] sm:$0xff] %v385
        %390 = vst [vmem:[%s238 + $0x8] sm:$0xff] %v386
        %391 = vst [vmem:[%s238 + $0x10] sm:$0xff] %v387
        %392 = vst [vmem:[%s238 + $0x18] sm:$0xff] %v388
        %s393 = sand.u32 %s150, 1
        %s394 = sand.u32 %s150, 1
        %s395 = smul.addr %s394, 32
        %s396 = scalar_lea.vmem [#allocation2], %s395
        // Predicated region
        $region41: #{_lambda_.2} parent=39 // pred_check
          %p397 = pneg %p160
        $region42: #{_lambda_.2} parent=39 // pred_check_branch
          %399 = sbr.rel (%p397) target = $region44
        $region43: #{_lambda_.2} parent=39 // pred_region
          %s400 = smul.u32 2, %s21
          %s401 = smul.addr %s20, 8
          %s402 = sadd.s32 %s400, %s401
          %s403 = smul.addr %s402, 8
          %s404 = scalar_lea.vmem %s5, %s403
          // Predicated region
          $region45: #{_lambda_.2} parent=43 // pred_check
            _
          $region46: #{_lambda_.2} parent=43 // pred_check_branch
            %406 = sbr.rel (0) target = $region48
          $region47: #{_lambda_.2} parent=43 // pred_region
            // Predicated region
            $region49: #{_lambda_.2} parent=47 // pred_check
              _
            $region50: #{_lambda_.2} parent=47 // pred_check_branch
              %408 = sbr.rel (0) target = $region52
            $region51: #{_lambda_.2} parent=47 // pred_region
              loop: start=0, step=1, limit=1
              $region53: #{_lambda_.2} parent=51 // loop_pre_header
                _
              $region54: #{_lambda_.2} parent=51 // loop_header
                %s410 = sphi 0, %s414
                %p411 = scmp.ge.s32.totalorder %s410, 1
                %s415 = sphi %s396, %s396
                %s416 = sphi %s404, %s404
              $region55: #{_lambda_.2} parent=51 // loop_header_branch
                %413 = sbr.rel (%p411) target = $region59
              $region56: #{_lambda_.2} parent=51 // loop_body
                %v417 = vld [vmem:[%s415] sm:$0xff]
                %418 = vst [vmem:[%s416] sm:$0xff] %v417
                %v419 = vld [vmem:[%s415 + $0x8] sm:$0xff]
                %420 = vst [vmem:[%s416 + $0x8] sm:$0xff] %v419
                %v421 = vld [vmem:[%s415 + $0x10] sm:$0xff]
                %422 = vst [vmem:[%s416 + $0x20] sm:$0xff] %v421
                %v423 = vld [vmem:[%s415 + $0x18] sm:$0xff]
                %424 = vst [vmem:[%s416 + $0x28] sm:$0xff] %v423
              $region57: #{_lambda_.2} parent=51 // loop_footer
                %s414 = sadd.s32 1, %s410
              $region58: #{_lambda_.2} parent=51 // loop_footer_branch
                %409 = sbr.rel target = $region54
              $region59: #{_lambda_.2} parent=51 // loop_exit
                _
            $region52: #{_lambda_.2} parent=47 // pred_fallthru
              _
            // Predicated region
            $region60: #{_lambda_.2} parent=47 // pred_check
              _
            $region61: #{_lambda_.2} parent=47 // pred_check_branch
              %426 = sbr.rel target = $region63
            $region62: #{_lambda_.2} parent=47 // pred_region
              _
            $region63: #{_lambda_.2} parent=47 // pred_fallthru
              _
          $region48: #{_lambda_.2} parent=43 // pred_fallthru
            _
          %427 = vnop
        $region44: #{_lambda_.2} parent=39 // pred_fallthru
          _
      $region40: #{_lambda_.2} parent=5 // pred_fallthru
        _
      %p428 = scmp.le.s32.totalorder 2, %s11
      // Predicated region
      $region64: #{_lambda_.2} parent=5 // pred_check
        %p429 = pneg %p428
      $region65: #{_lambda_.2} parent=5 // pred_check_branch
        %431 = sbr.rel (%p429) target = $region67
      $region66: #{_lambda_.2} parent=5 // pred_region
        %s432 = ssub.s32 %s11, 2
        // Predicated region
        $region68: #{_lambda_.2} parent=66 // pred_check
          %p433 = pneg %p166
        $region69: #{_lambda_.2} parent=66 // pred_check_branch
          %435 = sbr.rel (%p433) target = $region71
        $region70: #{_lambda_.2} parent=66 // pred_region
          %s436 = sand.u32 %s151, 1
          %s437 = sand.u32 %s151, 1
          %s438 = smul.addr %s437, 32
          %s439 = scalar_lea.vmem [#allocation2], %s438
        $region71: #{_lambda_.2} parent=66 // pred_fallthru
          _
      $region67: #{_lambda_.2} parent=5 // pred_fallthru
        _
    $region6: #{_lambda_.2} parent=1 // loop_footer
      %s15 = sadd.s32 1, %s11
    $region7: #{_lambda_.2} parent=1 // loop_footer_branch
      %10 = sbr.rel target = $region3
    $region8: #{_lambda_.2} parent=1 // loop_exit
      _

// kernel: _lambda_.3
$region0: #{_lambda_.3}
  #allocation0 [shape = 'u32[]', space=smem, size = 0x4, offset = 0x4, fixed_abs, tag = 'smem constant byte address 0x4 - core index']
  #allocation1 [shape = 'u32[144,128]{1,0:T(1,128)}', space=vmem, size = 0x12000, scoped, tag = 'internal scratch']
  %s0 = inlined_call_operand.vmem [shape: f32[2,4,8,8,8], index: 0, kind: input, shape index: {}]
  %s1 = inlined_call_operand.vmem [shape: f32[2,16,8,8,8], index: 1, kind: input, shape index: {}, may-alias: {1,2,3}]
  %s2 = inlined_call_operand.vmem [shape: f32[2,16,8,8,8], index: 2, kind: input, shape index: {}, may-alias: {1,2,3}]
  %s3 = inlined_call_operand.vmem [shape: f32[2,16,8,8,8], index: 3, kind: input, shape index: {}, may-alias: {1,2,3}]
  %s4 = inlined_call_operand.vmem [shape: f32[4,432], index: 4, kind: input, shape index: {}]
  %s5 = inlined_call_operand.vmem [shape: f32[9,64], index: 5, kind: input, shape index: {}]
  %s6 = inlined_call_operand.hbm [shape: f32[2,8,8,8,8], index: 6, kind: output, shape index: {}]
  %s7 = sld [smem:[#allocation0]]
  $region209: #{_lambda_.3} parent=0
    _
  %s9 = ssub.s32 1, %s7
  %s10 = scalar_select 0, %s9, %s7
  $region1: #{_lambda_.3} parent=0
    #allocation2 [shape = 'u8[32768]{0}', space=vmem, size = 0x8000, scoped, tag = 'input window, operand 0']
    #allocation3 [shape = 'u8[131072]{0}', space=vmem, size = 0x20000, scoped, tag = 'input window, operand 1']
    #allocation4 [shape = 'u8[131072]{0}', space=vmem, size = 0x20000, scoped, tag = 'input window, operand 2']
    #allocation5 [shape = 'u8[131072]{0}', space=vmem, size = 0x20000, scoped, tag = 'input window, operand 3']
    #allocation6 [shape = 'u8[65536]{0}', space=vmem, size = 0x10000, scoped, tag = 'output window, operand 0']
    #allocation7 [shape = 's32[2]{0}', space=sflag, size = 0x8, scoped, tag = 'scoped memory for _lambda_.3']
    %11 = vsyncpa [#allocation7], 0
    %s12 = scalar_lea.sflag [#allocation7], 1
    %13 = vsyncpa %s12, 0
    loop: start=0, step=1, limit=18
    $region2: #{_lambda_.3} parent=1 // loop_pre_header
      _
    $region3: #{_lambda_.3} parent=1 // loop_header
      %s15 = sphi 0, %s19
      %p16 = scmp.ge.s32.totalorder %s15, 18
      %s22 = sphi 0, %s34
      %s23 = sphi 0, %s30
      %s24 = sphi 0, %s22
      %s25 = sphi 0, %s23
      %s26 = sphi 0, %s24
      %s27 = sphi 0, %s25
      %s39 = sphi 0, %s41
      %s42 = sphi 0, %s39
      %s43 = sphi 0, %s42
      %s59 = sphi 0, %s43
      %s73 = sphi 0, %s75
      %s76 = sphi 0, %s73
      %s77 = sphi 0, %s76
      %s93 = sphi 0, %s77
      %s101 = sphi 0, %s103
      %s104 = sphi 0, %s101
      %s105 = sphi 0, %s104
      %s121 = sphi 0, %s105
      %s135 = sphi 0, %s137
      %s138 = sphi 0, %s135
      %s139 = sphi 0, %s138
      %s155 = sphi 0, %s139
      %s159 = sphi 0, %s159
      %s161 = sphi 0, %s159
      %s162 = sphi 0, %s161
      %s176 = sphi 0, %s162
      %s180 = sphi 0, %s180
      %s182 = sphi 0, %s180
      %s183 = sphi 0, %s182
      %s197 = sphi 0, %s183
      %s205 = sphi 0, %s207
      %s208 = sphi 0, %s205
      %s209 = sphi 0, %s208
      %s225 = sphi 0, %s209
    $region4: #{_lambda_.3} parent=1 // loop_header_branch
      %18 = sbr.rel (%p16) target = $region8
    $region5: #{_lambda_.3} parent=1 // loop_body
      %s20 = ssub.s32 %s15, 1
      %s21 = ssub.s32 %s15, 2
      %s28 = sadd.s32 1, %s23
      %p29 = scmp.ge.s32.totalorder %s28, 8
      %s30 = scalar_select %p29, 0, %s28
      %s31 = sadd.s32 1, %s22
      %s32 = scalar_select %p29, %s31, %s22
      %p33 = scmp.ge.s32.totalorder %s32, 2
      %s34 = scalar_select %p33, 0, %s32
      %s35 = ssub.s32 %s22, %s34
      %s36 = ssub.s32 %s23, %s30
      %s37 = sor.u32 %s35, %s36
      %p38 = scmp.eq.s32.totalorder %s37, 0
      %s40 = sadd.s32 %s39, 1
      %s41 = scalar_select %p38, %s39, %s40
      %p44 = pneg %p38
      %p45 = scmp.eq.s32.totalorder %s15, 15
      %p46 = por %p44, %p45
      %p47 = scmp.ne.s32.totalorder %s39, %s42
      %p48 = scmp.eq.s32.totalorder %s15, 0
      %p49 = por %p47, %p48
      %p50 = scmp.ne.s32.totalorder %s39, %s42
      %p51 = scmp.eq.s32.totalorder %s20, 15
      %p52 = por %p50, %p51
      %p53 = scmp.ne.s32.totalorder %s42, %s43
      %p54 = scmp.eq.s32.totalorder %s20, 0
      %p55 = por %p53, %p54
      %p56 = scmp.ne.s32.totalorder %s42, %s43
      %p57 = scmp.eq.s32.totalorder %s21, 15
      %p58 = por %p56, %p57
      %p60 = scmp.ne.s32.totalorder %s43, %s59
      %p61 = scmp.eq.s32.totalorder %s21, 0
      %p62 = por %p60, %p61
      %s63 = ssub.s32 %s23, 1
      %p64 = scmp.gt.s32.totalorder %s63, 0
      %s65 = scalar_select %p64, %s63, 0
      %s66 = ssub.s32 %s30, 1
      %p67 = scmp.gt.s32.totalorder %s66, 0
      %s68 = scalar_select %p67, %s66, 0
      %s69 = ssub.s32 %s22, %s34
      %s70 = ssub.s32 %s65, %s68
      %s71 = sor.u32 %s69, %s70
      %p72 = scmp.eq.s32.totalorder %s71, 0
      %s74 = sadd.s32 %s73, 1
      %s75 = scalar_select %p72, %s73, %s74
      %p78 = pneg %p72
      %p79 = scmp.eq.s32.totalorder %s15, 15
      %p80 = por %p78, %p79
      %p81 = scmp.ne.s32.totalorder %s73, %s76
      %p82 = scmp.eq.s32.totalorder %s15, 0
      %p83 = por %p81, %p82
      %p84 = scmp.ne.s32.totalorder %s73, %s76
      %p85 = scmp.eq.s32.totalorder %s20, 15
      %p86 = por %p84, %p85
      %p87 = scmp.ne.s32.totalorder %s76, %s77
      %p88 = scmp.eq.s32.totalorder %s20, 0
      %p89 = por %p87, %p88
      %p90 = scmp.ne.s32.totalorder %s76, %s77
      %p91 = scmp.eq.s32.totalorder %s21, 15
      %p92 = por %p90, %p91
      %p94 = scmp.ne.s32.totalorder %s77, %s93
      %p95 = scmp.eq.s32.totalorder %s21, 0
      %p96 = por %p94, %p95
      %s97 = ssub.s32 %s22, %s34
      %s98 = ssub.s32 %s23, %s30
      %s99 = sor.u32 %s97, %s98
      %p100 = scmp.eq.s32.totalorder %s99, 0
      %s102 = sadd.s32 %s101, 1
      %s103 = scalar_select %p100, %s101, %s102
      %p106 = pneg %p100
      %p107 = scmp.eq.s32.totalorder %s15, 15
      %p108 = por %p106, %p107
      %p109 = scmp.ne.s32.totalorder %s101, %s104
      %p110 = scmp.eq.s32.totalorder %s15, 0
      %p111 = por %p109, %p110
      %p112 = scmp.ne.s32.totalorder %s101, %s104
      %p113 = scmp.eq.s32.totalorder %s20, 15
      %p114 = por %p112, %p113
      %p115 = scmp.ne.s32.totalorder %s104, %s105
      %p116 = scmp.eq.s32.totalorder %s20, 0
      %p117 = por %p115, %p116
      %p118 = scmp.ne.s32.totalorder %s104, %s105
      %p119 = scmp.eq.s32.totalorder %s21, 15
      %p120 = por %p118, %p119
      %p122 = scmp.ne.s32.totalorder %s105, %s121
      %p123 = scmp.eq.s32.totalorder %s21, 0
      %p124 = por %p122, %p123
      %s125 = sadd.s32 %s23, 1
      %p126 = scmp.lt.s32.totalorder %s125, 7
      %s127 = scalar_select %p126, %s125, 7
      %s128 = sadd.s32 %s30, 1
      %p129 = scmp.lt.s32.totalorder %s128, 7
      %s130 = scalar_select %p129, %s128, 7
      %s131 = ssub.s32 %s22, %s34
      %s132 = ssub.s32 %s127, %s130
      %s133 = sor.u32 %s131, %s132
      %p134 = scmp.eq.s32.totalorder %s133, 0
      %s136 = sadd.s32 %s135, 1
      %s137 = scalar_select %p134, %s135, %s136
      %p140 = pneg %p134
      %p141 = scmp.eq.s32.totalorder %s15, 15
      %p142 = por %p140, %p141
      %p143 = scmp.ne.s32.totalorder %s135, %s138
      %p144 = scmp.eq.s32.totalorder %s15, 0
      %p145 = por %p143, %p144
      %p146 = scmp.ne.s32.totalorder %s135, %s138
      %p147 = scmp.eq.s32.totalorder %s20, 15
      %p148 = por %p146, %p147
      %p149 = scmp.ne.s32.totalorder %s138, %s139
      %p150 = scmp.eq.s32.totalorder %s20, 0
      %p151 = por %p149, %p150
      %p152 = scmp.ne.s32.totalorder %s138, %s139
      %p153 = scmp.eq.s32.totalorder %s21, 15
      %p154 = por %p152, %p153
      %p156 = scmp.ne.s32.totalorder %s139, %s155
      %p157 = scmp.eq.s32.totalorder %s21, 0
      %p158 = por %p156, %p157
      %s160 = sadd.s32 %s159, 1
      %p163 = scmp.eq.s32.totalorder %s15, 15
      %p164 = scmp.ne.s32.totalorder %s159, %s161
      %p165 = scmp.eq.s32.totalorder %s15, 0
      %p166 = por %p164, %p165
      %p167 = scmp.ne.s32.totalorder %s159, %s161
      %p168 = scmp.eq.s32.totalorder %s20, 15
      %p169 = por %p167, %p168
      %p170 = scmp.ne.s32.totalorder %s161, %s162
      %p171 = scmp.eq.s32.totalorder %s20, 0
      %p172 = por %p170, %p171
      %p173 = scmp.ne.s32.totalorder %s161, %s162
      %p174 = scmp.eq.s32.totalorder %s21, 15
      %p175 = por %p173, %p174
      %p177 = scmp.ne.s32.totalorder %s162, %s176
      %p178 = scmp.eq.s32.totalorder %s21, 0
      %p179 = por %p177, %p178
      %s181 = sadd.s32 %s180, 1
      %p184 = scmp.eq.s32.totalorder %s15, 15
      %p185 = scmp.ne.s32.totalorder %s180, %s182
      %p186 = scmp.eq.s32.totalorder %s15, 0
      %p187 = por %p185, %p186
      %p188 = scmp.ne.s32.totalorder %s180, %s182
      %p189 = scmp.eq.s32.totalorder %s20, 15
      %p190 = por %p188, %p189
      %p191 = scmp.ne.s32.totalorder %s182, %s183
      %p192 = scmp.eq.s32.totalorder %s20, 0
      %p193 = por %p191, %p192
      %p194 = scmp.ne.s32.totalorder %s182, %s183
      %p195 = scmp.eq.s32.totalorder %s21, 15
      %p196 = por %p194, %p195
      %p198 = scmp.ne.s32.totalorder %s183, %s197
      %p199 = scmp.eq.s32.totalorder %s21, 0
      %p200 = por %p198, %p199
      %s201 = ssub.s32 %s22, %s34
      %s202 = ssub.s32 %s23, %s30
      %s203 = sor.u32 %s201, %s202
      %p204 = scmp.eq.s32.totalorder %s203, 0
      %s206 = sadd.s32 %s205, 1
      %s207 = scalar_select %p204, %s205, %s206
      %p210 = pneg %p204
      %p211 = scmp.eq.s32.totalorder %s15, 15
      %p212 = por %p210, %p211
      %p213 = scmp.ne.s32.totalorder %s205, %s208
      %p214 = scmp.eq.s32.totalorder %s15, 0
      %p215 = por %p213, %p214
      %p216 = scmp.ne.s32.totalorder %s205, %s208
      %p217 = scmp.eq.s32.totalorder %s20, 15
      %p218 = por %p216, %p217
      %p219 = scmp.ne.s32.totalorder %s208, %s209
      %p220 = scmp.eq.s32.totalorder %s20, 0
      %p221 = por %p219, %p220
      %p222 = scmp.ne.s32.totalorder %s208, %s209
      %p223 = scmp.eq.s32.totalorder %s21, 15
      %p224 = por %p222, %p223
      %p226 = scmp.ne.s32.totalorder %s209, %s225
      %p227 = scmp.eq.s32.totalorder %s21, 0
      %p228 = por %p226, %p227
      %p229 = scmp.le.s32.totalorder 1, %s15
      %p230 = scmp.lt.s32.totalorder %s15, 17
      %p231 = pnand %p229, %p230
      %p232 = pneg %p231
      // Predicated region
      $region9: #{_lambda_.3} parent=5 // pred_check
        _
      $region10: #{_lambda_.3} parent=5 // pred_check_branch
        %234 = sbr.rel (%p231) target = $region12
      $region11: #{_lambda_.3} parent=5 // pred_region
        %s235 = ssub.s32 %s15, 1
        // Predicated region
        $region13: #{_lambda_.3} parent=11 // pred_check
          %p236 = pneg %p172
        $region14: #{_lambda_.3} parent=11 // pred_check_branch
          %238 = sbr.rel (%p236) target = $region16
        $region15: #{_lambda_.3} parent=11 // pred_region
          _
        $region16: #{_lambda_.3} parent=11 // pred_fallthru
          _
        // Predicated region
        $region17: #{_lambda_.3} parent=11 // pred_check
          %p239 = pneg %p193
        $region18: #{_lambda_.3} parent=11 // pred_check_branch
          %241 = sbr.rel (%p239) target = $region20
        $region19: #{_lambda_.3} parent=11 // pred_region
          _
        $region20: #{_lambda_.3} parent=11 // pred_fallthru
          _
      $region12: #{_lambda_.3} parent=5 // pred_fallthru
        _
      %p242 = scmp.lt.s32.totalorder %s15, 16
      // Predicated region
      $region21: #{_lambda_.3} parent=5 // pred_check
        %p243 = pneg %p242
      $region22: #{_lambda_.3} parent=5 // pred_check_branch
        %245 = sbr.rel (%p243) target = $region24
      $region23: #{_lambda_.3} parent=5 // pred_region
        // Predicated region
        $region25: #{_lambda_.3} parent=23 // pred_check
          %p246 = pneg %p49
        $region26: #{_lambda_.3} parent=23 // pred_check_branch
          %248 = sbr.rel (%p246) target = $region28
        $region27: #{_lambda_.3} parent=23 // pred_region
          %s249 = sand.u32 %s39, 1
          %s250 = sand.u32 %s39, 1
          %s251 = smul.addr %s250, 32
          %s252 = scalar_lea.vmem [#allocation2], %s251
          %s253 = smul.addr %s22, 32
          %s254 = sadd.s32 %s23, %s253
          %s255 = smul.addr %s254, 8
          %s256 = scalar_lea.vmem %s0, %s255
          // Predicated region
          $region29: #{_lambda_.3} parent=27 // pred_check
            _
          $region30: #{_lambda_.3} parent=27 // pred_check_branch
            %258 = sbr.rel (0) target = $region32
          $region31: #{_lambda_.3} parent=27 // pred_region
            // Predicated region
            $region33: #{_lambda_.3} parent=31 // pred_check
              _
            $region34: #{_lambda_.3} parent=31 // pred_check_branch
              %260 = sbr.rel (0) target = $region36
            $region35: #{_lambda_.3} parent=31 // pred_region
              // Predicated region
              $region48: #{_lambda_.3} parent=35 // pred_check
                _
              $region49: #{_lambda_.3} parent=35 // pred_check_branch
                %281 = sbr.rel (0) target = $region51
              $region50: #{_lambda_.3} parent=35 // pred_region
                loop: start=0, step=1, limit=1
                $region52: #{_lambda_.3} parent=50 // loop_pre_header
                  _
                $region53: #{_lambda_.3} parent=50 // loop_header
                  %s283 = sphi 0, %s287
                  %p284 = scmp.ge.s32.totalorder %s283, 1
                  %s288 = sphi %s256, %s256
                  %s289 = sphi %s252, %s252
                $region54: #{_lambda_.3} parent=50 // loop_header_branch
                  %286 = sbr.rel (%p284) target = $region58
                $region55: #{_lambda_.3} parent=50 // loop_body
                  %v290 = vld [vmem:[%s288] sm:$0xff]
                  %291 = vst [vmem:[%s289] sm:$0xff] %v290
                  %v292 = vld [vmem:[%s288 + $0x40] sm:$0xff]
                  %293 = vst [vmem:[%s289 + $0x8] sm:$0xff] %v292
                  %v294 = vld [vmem:[%s288 + $0x80] sm:$0xff]
                  %295 = vst [vmem:[%s289 + $0x10] sm:$0xff] %v294
                  %v296 = vld [vmem:[%s288 + $0xc0] sm:$0xff]
                  %297 = vst [vmem:[%s289 + $0x18] sm:$0xff] %v296
                $region56: #{_lambda_.3} parent=50 // loop_footer
                  %s287 = sadd.s32 1, %s283
                $region57: #{_lambda_.3} parent=50 // loop_footer_branch
                  %282 = sbr.rel target = $region53
                $region58: #{_lambda_.3} parent=50 // loop_exit
                  _
              $region51: #{_lambda_.3} parent=35 // pred_fallthru
                _
              // Predicated region
              $region59: #{_lambda_.3} parent=35 // pred_check
                _
              $region60: #{_lambda_.3} parent=35 // pred_check_branch
                %299 = sbr.rel target = $region62
              $region61: #{_lambda_.3} parent=35 // pred_region
                _
              $region62: #{_lambda_.3} parent=35 // pred_fallthru
                _
            $region36: #{_lambda_.3} parent=31 // pred_fallthru
              _
            // Predicated region
            $region37: #{_lambda_.3} parent=31 // pred_check
              _
            $region38: #{_lambda_.3} parent=31 // pred_check_branch
              %262 = sbr.rel target = $region40
            $region39: #{_lambda_.3} parent=31 // pred_region
              loop: start=0, step=1, limit=1
              $region41: #{_lambda_.3} parent=39 // loop_pre_header
                _
              $region42: #{_lambda_.3} parent=39 // loop_header
                %s265 = sphi 0, %s269
                %p266 = scmp.ge.s32.totalorder %s265, 1
                %s270 = sphi %s256, %s256
                %s271 = sphi %s252, %s252
              $region43: #{_lambda_.3} parent=39 // loop_header_branch
                %268 = sbr.rel (%p266) target = $region47
              $region44: #{_lambda_.3} parent=39 // loop_body
                %v272 = vld [vmem:[%s270] sm:$0xff]
                %273 = vst [vmem:[%s271] sm:$0xff] %v272
                %v274 = vld [vmem:[%s270 + $0x40] sm:$0xff]
                %275 = vst [vmem:[%s271 + $0x8] sm:$0xff] %v274
                %v276 = vld [vmem:[%s270 + $0x80] sm:$0xff]
                %277 = vst [vmem:[%s271 + $0x10] sm:$0xff] %v276
                %v278 = vld [vmem:[%s270 + $0xc0] sm:$0xff]
                %279 = vst [vmem:[%s271 + $0x18] sm:$0xff] %v278
              $region45: #{_lambda_.3} parent=39 // loop_footer
                %s269 = sadd.s32 1, %s265
              $region46: #{_lambda_.3} parent=39 // loop_footer_branch
                %264 = sbr.rel target = $region42
              $region47: #{_lambda_.3} parent=39 // loop_exit
                _
            $region40: #{_lambda_.3} parent=31 // pred_fallthru
              _
          $region32: #{_lambda_.3} parent=27 // pred_fallthru
            _
          %300 = vnop
        $region28: #{_lambda_.3} parent=23 // pred_fallthru
          _
        // Predicated region
        $region63: #{_lambda_.3} parent=23 // pred_check
          %p301 = pneg %p83
        $region64: #{_lambda_.3} parent=23 // pred_check_branch
          %303 = sbr.rel (%p301) target = $region66
        $region65: #{_lambda_.3} parent=23 // pred_region
          %s304 = sand.u32 %s73, 1
          %s305 = sand.u32 %s73, 1
          %s306 = smul.addr %s305, 128
          %s307 = scalar_lea.vmem [#allocation3], %s306
          %s308 = ssub.s32 %s23, 1
          %p309 = scmp.gt.s32.totalorder %s308, 0
          %s310 = scalar_select %p309, %s308, 0
          %s311 = smul.addr %s22, 128
          %s312 = sadd.s32 %s310, %s311
          %s313 = smul.addr %s312, 8
          %s314 = scalar_lea.vmem %s1, %s313
          // Predicated region
          $region67: #{_lambda_.3} parent=65 // pred_check
            _
          $region68: #{_lambda_.3} parent=65 // pred_check_branch
            %316 = sbr.rel (0) target = $region70
          $region69: #{_lambda_.3} parent=65 // pred_region
            // Predicated region
            $region71: #{_lambda_.3} parent=69 // pred_check
              _
            $region72: #{_lambda_.3} parent=69 // pred_check_branch
              %318 = sbr.rel (0) target = $region74
            $region73: #{_lambda_.3} parent=69 // pred_region
              // Predicated region
              $region86: #{_lambda_.3} parent=73 // pred_check
                _
              $region87: #{_lambda_.3} parent=73 // pred_check_branch
                %363 = sbr.rel (0) target = $region89
              $region88: #{_lambda_.3} parent=73 // pred_region
                loop: start=0, step=1, limit=1
                $region90: #{_lambda_.3} parent=88 // loop_pre_header
                  _
                $region91: #{_lambda_.3} parent=88 // loop_header
                  %s365 = sphi 0, %s369
                  %p366 = scmp.ge.s32.totalorder %s365, 1
                  %s370 = sphi %s314, %s314
                  %s371 = sphi %s307, %s307
                $region92: #{_lambda_.3} parent=88 // loop_header_branch
                  %368 = sbr.rel (%p366) target = $region96
                $region93: #{_lambda_.3} parent=88 // loop_body
                  %v372 = vld [vmem:[%s370] sm:$0xff]
                  %373 = vst [vmem:[%s371] sm:$0xff] %v372
                  %v374 = vld [vmem:[%s370 + $0x40] sm:$0xff]
                  %375 = vst [vmem:[%s371 + $0x8] sm:$0xff] %v374
                  %v376 = vld [vmem:[%s370 + $0x80] sm:$0xff]
                  %377 = vst [vmem:[%s371 + $0x10] sm:$0xff] %v376
                  %v378 = vld [vmem:[%s370 + $0xc0] sm:$0xff]
                  %379 = vst [vmem:[%s371 + $0x18] sm:$0xff] %v378
                  %v380 = vld [vmem:[%s370 + $0x100] sm:$0xff]
                  %381 = vst [vmem:[%s371 + $0x20] sm:$0xff] %v380
                  %v382 = vld [vmem:[%s370 + $0x140] sm:$0xff]
                  %383 = vst [vmem:[%s371 + $0x28] sm:$0xff] %v382
                  %v384 = vld [vmem:[%s370 + $0x180] sm:$0xff]
                  %385 = vst [vmem:[%s371 + $0x30] sm:$0xff] %v384
                  %v386 = vld [vmem:[%s370 + $0x1c0] sm:$0xff]
                  %387 = vst [vmem:[%s371 + $0x38] sm:$0xff] %v386
                  %v388 = vld [vmem:[%s370 + $0x200] sm:$0xff]
                  %389 = vst [vmem:[%s371 + $0x40] sm:$0xff] %v388
                  %v390 = vld [vmem:[%s370 + $0x240] sm:$0xff]
                  %391 = vst [vmem:[%s371 + $0x48] sm:$0xff] %v390
                  %v392 = vld [vmem:[%s370 + $0x280] sm:$0xff]
                  %393 = vst [vmem:[%s371 + $0x50] sm:$0xff] %v392
                  %v394 = vld [vmem:[%s370 + $0x2c0] sm:$0xff]
                  %395 = vst [vmem:[%s371 + $0x58] sm:$0xff] %v394
                  %v396 = vld [vmem:[%s370 + $0x300] sm:$0xff]
                  %397 = vst [vmem:[%s371 + $0x60] sm:$0xff] %v396
                  %v398 = vld [vmem:[%s370 + $0x340] sm:$0xff]
                  %399 = vst [vmem:[%s371 + $0x68] sm:$0xff] %v398
                  %v400 = vld [vmem:[%s370 + $0x380] sm:$0xff]
                  %401 = vst [vmem:[%s371 + $0x70] sm:$0xff] %v400
                  %v402 = vld [vmem:[%s370 + $0x3c0] sm:$0xff]
                  %403 = vst [vmem:[%s371 + $0x78] sm:$0xff] %v402
                $region94: #{_lambda_.3} parent=88 // loop_footer
                  %s369 = sadd.s32 1, %s365
                $region95: #{_lambda_.3} parent=88 // loop_footer_branch
                  %364 = sbr.rel target = $region91
                $region96: #{_lambda_.3} parent=88 // loop_exit
                  _
              $region89: #{_lambda_.3} parent=73 // pred_fallthru
                _
              // Predicated region
              $region97: #{_lambda_.3} parent=73 // pred_check
                _
              $region98: #{_lambda_.3} parent=73 // pred_check_branch
                %405 = sbr.rel target = $region100
              $region99: #{_lambda_.3} parent=73 // pred_region
                _
              $region100: #{_lambda_.3} parent=73 // pred_fallthru
                _
            $region74: #{_lambda_.3} parent=69 // pred_fallthru
              _
            // Predicated region
            $region75: #{_lambda_.3} parent=69 // pred_check
              _
            $region76: #{_lambda_.3} parent=69 // pred_check_branch
              %320 = sbr.rel target = $region78
            $region77: #{_lambda_.3} parent=69 // pred_region
              loop: start=0, step=1, limit=1
              $region79: #{_lambda_.3} parent=77 // loop_pre_header
                _
              $region80: #{_lambda_.3} parent=77 // loop_header
                %s323 = sphi 0, %s327
                %p324 = scmp.ge.s32.totalorder %s323, 1
                %s328 = sphi %s314, %s314
                %s329 = sphi %s307, %s307
              $region81: #{_lambda_.3} parent=77 // loop_header_branch
                %326 = sbr.rel (%p324) target = $region85
              $region82: #{_lambda_.3} parent=77 // loop_body
                %v330 = vld [vmem:[%s328] sm:$0xff]
                %331 = vst [vmem:[%s329] sm:$0xff] %v330
                %v332 = vld [vmem:[%s328 + $0x40] sm:$0xff]
                %333 = vst [vmem:[%s329 + $0x8] sm:$0xff] %v332
                %v334 = vld [vmem:[%s328 + $0x80] sm:$0xff]
                %335 = vst [vmem:[%s329 + $0x10] sm:$0xff] %v334
                %v336 = vld [vmem:[%s328 + $0xc0] sm:$0xff]
                %337 = vst [vmem:[%s329 + $0x18] sm:$0xff] %v336
                %v338 = vld [vmem:[%s328 + $0x100] sm:$0xff]
                %339 = vst [vmem:[%s329 + $0x20] sm:$0xff] %v338
                %v340 = vld [vmem:[%s328 + $0x140] sm:$0xff]
                %341 = vst [vmem:[%s329 + $0x28] sm:$0xff] %v340
                %v342 = vld [vmem:[%s328 + $0x180] sm:$0xff]
                %343 = vst [vmem:[%s329 + $0x30] sm:$0xff] %v342
                %v344 = vld [vmem:[%s328 + $0x1c0] sm:$0xff]
                %345 = vst [vmem:[%s329 + $0x38] sm:$0xff] %v344
                %v346 = vld [vmem:[%s328 + $0x200] sm:$0xff]
                %347 = vst [vmem:[%s329 + $0x40] sm:$0xff] %v346
                %v348 = vld [vmem:[%s328 + $0x240] sm:$0xff]
                %349 = vst [vmem:[%s329 + $0x48] sm:$0xff] %v348
                %v350 = vld [vmem:[%s328 + $0x280] sm:$0xff]
                %351 = vst [vmem:[%s329 + $0x50] sm:$0xff] %v350
                %v352 = vld [vmem:[%s328 + $0x2c0] sm:$0xff]
                %353 = vst [vmem:[%s329 + $0x58] sm:$0xff] %v352
                %v354 = vld [vmem:[%s328 + $0x300] sm:$0xff]
                %355 = vst [vmem:[%s329 + $0x60] sm:$0xff] %v354
                %v356 = vld [vmem:[%s328 + $0x340] sm:$0xff]
                %357 = vst [vmem:[%s329 + $0x68] sm:$0xff] %v356
                %v358 = vld [vmem:[%s328 + $0x380] sm:$0xff]
                %359 = vst [vmem:[%s329 + $0x70] sm:$0xff] %v358
                %v360 = vld [vmem:[%s328 + $0x3c0] sm:$0xff]
                %361 = vst [vmem:[%s329 + $0x78] sm:$0xff] %v360
              $region83: #{_lambda_.3} parent=77 // loop_footer
                %s327 = sadd.s32 1, %s323
              $region84: #{_lambda_.3} parent=77 // loop_footer_branch
                %322 = sbr.rel target = $region80
              $region85: #{_lambda_.3} parent=77 // loop_exit
                _
            $region78: #{_lambda_.3} parent=69 // pred_fallthru
              _
          $region70: #{_lambda_.3} parent=65 // pred_fallthru
            _
          %406 = vnop
        $region66: #{_lambda_.3} parent=23 // pred_fallthru
          _
        // Predicated region
        $region101: #{_lambda_.3} parent=23 // pred_check
          %p407 = pneg %p111
        $region102: #{_lambda_.3} parent=23 // pred_check_branch
          %409 = sbr.rel (%p407) target = $region104
        $region103: #{_lambda_.3} parent=23 // pred_region
          %s410 = sand.u32 %s101, 1
          %s411 = sand.u32 %s101, 1
          %s412 = smul.addr %s411, 128
          %s413 = scalar_lea.vmem [#allocation4], %s412
          %s414 = smul.addr %s22, 128
          %s415 = sadd.s32 %s23, %s414
          %s416 = smul.addr %s415, 8
          %s417 = scalar_lea.vmem %s2, %s416
          // Predicated region
          $region105: #{_lambda_.3} parent=103 // pred_check
            _
          $region106: #{_lambda_.3} parent=103 // pred_check_branch
            %419 = sbr.rel (0) target = $region108
          $region107: #{_lambda_.3} parent=103 // pred_region
            // Predicated region
            $region109: #{_lambda_.3} parent=107 // pred_check
              _
            $region110: #{_lambda_.3} parent=107 // pred_check_branch
              %421 = sbr.rel (0) target = $region112
            $region111: #{_lambda_.3} parent=107 // pred_region
              // Predicated region
              $region124: #{_lambda_.3} parent=111 // pred_check
                _
              $region125: #{_lambda_.3} parent=111 // pred_check_branch
                %466 = sbr.rel (0) target = $region127
              $region126: #{_lambda_.3} parent=111 // pred_region
                loop: start=0, step=1, limit=1
                $region128: #{_lambda_.3} parent=126 // loop_pre_header
                  _
                $region129: #{_lambda_.3} parent=126 // loop_header
                  %s468 = sphi 0, %s472
                  %p469 = scmp.ge.s32.totalorder %s468, 1
                  %s473 = sphi %s417, %s417
                  %s474 = sphi %s413, %s413
                $region130: #{_lambda_.3} parent=126 // loop_header_branch
                  %471 = sbr.rel (%p469) target = $region134
                $region131: #{_lambda_.3} parent=126 // loop_body
                  %v475 = vld [vmem:[%s473] sm:$0xff]
                  %476 = vst [vmem:[%s474] sm:$0xff] %v475
                  %v477 = vld [vmem:[%s473 + $0x40] sm:$0xff]
                  %478 = vst [vmem:[%s474 + $0x8] sm:$0xff] %v477
                  %v479 = vld [vmem:[%s473 + $0x80] sm:$0xff]
                  %480 = vst [vmem:[%s474 + $0x10] sm:$0xff] %v479
                  %v481 = vld [vmem:[%s473 + $0xc0] sm:$0xff]
                  %482 = vst [vmem:[%s474 + $0x18] sm:$0xff] %v481
                  %v483 = vld [vmem:[%s473 + $0x100] sm:$0xff]
                  %484 = vst [vmem:[%s474 + $0x20] sm:$0xff] %v483
                  %v485 = vld [vmem:[%s473 + $0x140] sm:$0xff]
                  %486 = vst [vmem:[%s474 + $0x28] sm:$0xff] %v485
                  %v487 = vld [vmem:[%s473 + $0x180] sm:$0xff]
                  %488 = vst [vmem:[%s474 + $0x30] sm:$0xff] %v487
                  %v489 = vld [vmem:[%s473 + $0x1c0] sm:$0xff]
                  %490 = vst [vmem:[%s474 + $0x38] sm:$0xff] %v489
                  %v491 = vld [vmem:[%s473 + $0x200] sm:$0xff]
                  %492 = vst [vmem:[%s474 + $0x40] sm:$0xff] %v491
                  %v493 = vld [vmem:[%s473 + $0x240] sm:$0xff]
                  %494 = vst [vmem:[%s474 + $0x48] sm:$0xff] %v493
                  %v495 = vld [vmem:[%s473 + $0x280] sm:$0xff]
                  %496 = vst [vmem:[%s474 + $0x50] sm:$0xff] %v495
                  %v497 = vld [vmem:[%s473 + $0x2c0] sm:$0xff]
                  %498 = vst [vmem:[%s474 + $0x58] sm:$0xff] %v497
                  %v499 = vld [vmem:[%s473 + $0x300] sm:$0xff]
                  %500 = vst [vmem:[%s474 + $0x60] sm:$0xff] %v499
                  %v501 = vld [vmem:[%s473 + $0x340] sm:$0xff]
                  %502 = vst [vmem:[%s474 + $0x68] sm:$0xff] %v501
                  %v503 = vld [vmem:[%s473 + $0x380] sm:$0xff]
                  %504 = vst [vmem:[%s474 + $0x70] sm:$0xff] %v503
                  %v505 = vld [vmem:[%s473 + $0x3c0] sm:$0xff]
                  %506 = vst [vmem:[%s474 + $0x78] sm:$0xff] %v505
                $region132: #{_lambda_.3} parent=126 // loop_footer
                  %s472 = sadd.s32 1, %s468
                $region133: #{_lambda_.3} parent=126 // loop_footer_branch
                  %467 = sbr.rel target = $region129
                $region134: #{_lambda_.3} parent=126 // loop_exit
                  _
              $region127: #{_lambda_.3} parent=111 // pred_fallthru
                _
              // Predicated region
              $region135: #{_lambda_.3} parent=111 // pred_check
                _
              $region136: #{_lambda_.3} parent=111 // pred_check_branch
                %508 = sbr.rel target = $region138
              $region137: #{_lambda_.3} parent=111 // pred_region
                _
              $region138: #{_lambda_.3} parent=111 // pred_fallthru
                _
            $region112: #{_lambda_.3} parent=107 // pred_fallthru
              _
            // Predicated region
            $region113: #{_lambda_.3} parent=107 // pred_check
              _
            $region114: #{_lambda_.3} parent=107 // pred_check_branch
              %423 = sbr.rel target = $region116
            $region115: #{_lambda_.3} parent=107 // pred_region
              loop: start=0, step=1, limit=1
              $region117: #{_lambda_.3} parent=115 // loop_pre_header
                _
              $region118: #{_lambda_.3} parent=115 // loop_header
                %s426 = sphi 0, %s430
                %p427 = scmp.ge.s32.totalorder %s426, 1
                %s431 = sphi %s417, %s417
                %s432 = sphi %s413, %s413
              $region119: #{_lambda_.3} parent=115 // loop_header_branch
                %429 = sbr.rel (%p427) target = $region123
              $region120: #{_lambda_.3} parent=115 // loop_body
                %v433 = vld [vmem:[%s431] sm:$0xff]
                %434 = vst [vmem:[%s432] sm:$0xff] %v433
                %v435 = vld [vmem:[%s431 + $0x40] sm:$0xff]
                %436 = vst [vmem:[%s432 + $0x8] sm:$0xff] %v435
                %v437 = vld [vmem:[%s431 + $0x80] sm:$0xff]
                %438 = vst [vmem:[%s432 + $0x10] sm:$0xff] %v437
                %v439 = vld [vmem:[%s431 + $0xc0] sm:$0xff]
                %440 = vst [vmem:[%s432 + $0x18] sm:$0xff] %v439
                %v441 = vld [vmem:[%s431 + $0x100] sm:$0xff]
                %442 = vst [vmem:[%s432 + $0x20] sm:$0xff] %v441
                %v443 = vld [vmem:[%s431 + $0x140] sm:$0xff]
                %444 = vst [vmem:[%s432 + $0x28] sm:$0xff] %v443
                %v445 = vld [vmem:[%s431 + $0x180] sm:$0xff]
                %446 = vst [vmem:[%s432 + $0x30] sm:$0xff] %v445
                %v447 = vld [vmem:[%s431 + $0x1c0] sm:$0xff]
                %448 = vst [vmem:[%s432 + $0x38] sm:$0xff] %v447
                %v449 = vld [vmem:[%s431 + $0x200] sm:$0xff]
                %450 = vst [vmem:[%s432 + $0x40] sm:$0xff] %v449
                %v451 = vld [vmem:[%s431 + $0x240] sm:$0xff]
                %452 = vst [vmem:[%s432 + $0x48] sm:$0xff] %v451
                %v453 = vld [vmem:[%s431 + $0x280] sm:$0xff]
                %454 = vst [vmem:[%s432 + $0x50] sm:$0xff] %v453
                %v455 = vld [vmem:[%s431 + $0x2c0] sm:$0xff]
                %456 = vst [vmem:[%s432 + $0x58] sm:$0xff] %v455
                %v457 = vld [vmem:[%s431 + $0x300] sm:$0xff]
                %458 = vst [vmem:[%s432 + $0x60] sm:$0xff] %v457
                %v459 = vld [vmem:[%s431 + $0x340] sm:$0xff]
                %460 = vst [vmem:[%s432 + $0x68] sm:$0xff] %v459
                %v461 = vld [vmem:[%s431 + $0x380] sm:$0xff]
                %462 = vst [vmem:[%s432 + $0x70] sm:$0xff] %v461
                %v463 = vld [vmem:[%s431 + $0x3c0] sm:$0xff]
                %464 = vst [vmem:[%s432 + $0x78] sm:$0xff] %v463
              $region121: #{_lambda_.3} parent=115 // loop_footer
                %s430 = sadd.s32 1, %s426
              $region122: #{_lambda_.3} parent=115 // loop_footer_branch
                %425 = sbr.rel target = $region118
              $region123: #{_lambda_.3} parent=115 // loop_exit
                _
            $region116: #{_lambda_.3} parent=107 // pred_fallthru
              _
          $region108: #{_lambda_.3} parent=103 // pred_fallthru
            _
          %509 = vnop
        $region104: #{_lambda_.3} parent=23 // pred_fallthru
          _
        // Predicated region
        $region139: #{_lambda_.3} parent=23 // pred_check
          %p510 = pneg %p145
        $region140: #{_lambda_.3} parent=23 // pred_check_branch
          %512 = sbr.rel (%p510) target = $region142
        $region141: #{_lambda_.3} parent=23 // pred_region
          %s513 = sand.u32 %s135, 1
          %s514 = sand.u32 %s135, 1
          %s515 = smul.addr %s514, 128
          %s516 = scalar_lea.vmem [#allocation5], %s515
          %s517 = sadd.s32 %s23, 1
          %p518 = scmp.lt.s32.totalorder %s517, 7
          %s519 = scalar_select %p518, %s517, 7
          %s520 = smul.addr %s22, 128
          %s521 = sadd.s32 %s519, %s520
          %s522 = smul.addr %s521, 8
          %s523 = scalar_lea.vmem %s3, %s522
          // Predicated region
          $region143: #{_lambda_.3} parent=141 // pred_check
            _
          $region144: #{_lambda_.3} parent=141 // pred_check_branch
            %525 = sbr.rel (0) target = $region146
          $region145: #{_lambda_.3} parent=141 // pred_region
            // Predicated region
            $region147: #{_lambda_.3} parent=145 // pred_check
              _
            $region148: #{_lambda_.3} parent=145 // pred_check_branch
              %527 = sbr.rel (0) target = $region150
            $region149: #{_lambda_.3} parent=145 // pred_region
              // Predicated region
              $region162: #{_lambda_.3} parent=149 // pred_check
                _
              $region163: #{_lambda_.3} parent=149 // pred_check_branch
                %572 = sbr.rel (0) target = $region165
              $region164: #{_lambda_.3} parent=149 // pred_region
                loop: start=0, step=1, limit=1
                $region166: #{_lambda_.3} parent=164 // loop_pre_header
                  _
                $region167: #{_lambda_.3} parent=164 // loop_header
                  %s574 = sphi 0, %s578
                  %p575 = scmp.ge.s32.totalorder %s574, 1
                  %s579 = sphi %s523, %s523
                  %s580 = sphi %s516, %s516
                $region168: #{_lambda_.3} parent=164 // loop_header_branch
                  %577 = sbr.rel (%p575) target = $region172
                $region169: #{_lambda_.3} parent=164 // loop_body
                  %v581 = vld [vmem:[%s579] sm:$0xff]
                  %582 = vst [vmem:[%s580] sm:$0xff] %v581
                  %v583 = vld [vmem:[%s579 + $0x40] sm:$0xff]
                  %584 = vst [vmem:[%s580 + $0x8] sm:$0xff] %v583
                  %v585 = vld [vmem:[%s579 + $0x80] sm:$0xff]
                  %586 = vst [vmem:[%s580 + $0x10] sm:$0xff] %v585
                  %v587 = vld [vmem:[%s579 + $0xc0] sm:$0xff]
                  %588 = vst [vmem:[%s580 + $0x18] sm:$0xff] %v587
                  %v589 = vld [vmem:[%s579 + $0x100] sm:$0xff]
                  %590 = vst [vmem:[%s580 + $0x20] sm:$0xff] %v589
                  %v591 = vld [vmem:[%s579 + $0x140] sm:$0xff]
                  %592 = vst [vmem:[%s580 + $0x28] sm:$0xff] %v591
                  %v593 = vld [vmem:[%s579 + $0x180] sm:$0xff]
                  %594 = vst [vmem:[%s580 + $0x30] sm:$0xff] %v593
                  %v595 = vld [vmem:[%s579 + $0x1c0] sm:$0xff]
                  %596 = vst [vmem:[%s580 + $0x38] sm:$0xff] %v595
                  %v597 = vld [vmem:[%s579 + $0x200] sm:$0xff]
                  %598 = vst [vmem:[%s580 + $0x40] sm:$0xff] %v597
                  %v599 = vld [vmem:[%s579 + $0x240] sm:$0xff]
                  %600 = vst [vmem:[%s580 + $0x48] sm:$0xff] %v599
                  %v601 = vld [vmem:[%s579 + $0x280] sm:$0xff]
                  %602 = vst [vmem:[%s580 + $0x50] sm:$0xff] %v601
                  %v603 = vld [vmem:[%s579 + $0x2c0] sm:$0xff]
                  %604 = vst [vmem:[%s580 + $0x58] sm:$0xff] %v603
                  %v605 = vld [vmem:[%s579 + $0x300] sm:$0xff]
                  %606 = vst [vmem:[%s580 + $0x60] sm:$0xff] %v605
                  %v607 = vld [vmem:[%s579 + $0x340] sm:$0xff]
                  %608 = vst [vmem:[%s580 + $0x68] sm:$0xff] %v607
                  %v609 = vld [vmem:[%s579 + $0x380] sm:$0xff]
                  %610 = vst [vmem:[%s580 + $0x70] sm:$0xff] %v609
                  %v611 = vld [vmem:[%s579 + $0x3c0] sm:$0xff]
                  %612 = vst [vmem:[%s580 + $0x78] sm:$0xff] %v611
                $region170: #{_lambda_.3} parent=164 // loop_footer
                  %s578 = sadd.s32 1, %s574
                $region171: #{_lambda_.3} parent=164 // loop_footer_branch
                  %573 = sbr.rel target = $region167
                $region172: #{_lambda_.3} parent=164 // loop_exit
                  _
              $region165: #{_lambda_.3} parent=149 // pred_fallthru
                _
              // Predicated region
              $region173: #{_lambda_.3} parent=149 // pred_check
                _
              $region174: #{_lambda_.3} parent=149 // pred_check_branch
                %614 = sbr.rel target = $region176
              $region175: #{_lambda_.3} parent=149 // pred_region
                _
              $region176: #{_lambda_.3} parent=149 // pred_fallthru
                _
            $region150: #{_lambda_.3} parent=145 // pred_fallthru
              _
            // Predicated region
            $region151: #{_lambda_.3} parent=145 // pred_check
              _
            $region152: #{_lambda_.3} parent=145 // pred_check_branch
              %529 = sbr.rel target = $region154
            $region153: #{_lambda_.3} parent=145 // pred_region
              loop: start=0, step=1, limit=1
              $region155: #{_lambda_.3} parent=153 // loop_pre_header
                _
              $region156: #{_lambda_.3} parent=153 // loop_header
                %s532 = sphi 0, %s536
                %p533 = scmp.ge.s32.totalorder %s532, 1
                %s537 = sphi %s523, %s523
                %s538 = sphi %s516, %s516
              $region157: #{_lambda_.3} parent=153 // loop_header_branch
                %535 = sbr.rel (%p533) target = $region161
              $region158: #{_lambda_.3} parent=153 // loop_body
                %v539 = vld [vmem:[%s537] sm:$0xff]
                %540 = vst [vmem:[%s538] sm:$0xff] %v539
                %v541 = vld [vmem:[%s537 + $0x40] sm:$0xff]
                %542 = vst [vmem:[%s538 + $0x8] sm:$0xff] %v541
                %v543 = vld [vmem:[%s537 + $0x80] sm:$0xff]
                %544 = vst [vmem:[%s538 + $0x10] sm:$0xff] %v543
                %v545 = vld [vmem:[%s537 + $0xc0] sm:$0xff]
                %546 = vst [vmem:[%s538 + $0x18] sm:$0xff] %v545
                %v547 = vld [vmem:[%s537 + $0x100] sm:$0xff]
                %548 = vst [vmem:[%s538 + $0x20] sm:$0xff] %v547
                %v549 = vld [vmem:[%s537 + $0x140] sm:$0xff]
                %550 = vst [vmem:[%s538 + $0x28] sm:$0xff] %v549
                %v551 = vld [vmem:[%s537 + $0x180] sm:$0xff]
                %552 = vst [vmem:[%s538 + $0x30] sm:$0xff] %v551
                %v553 = vld [vmem:[%s537 + $0x1c0] sm:$0xff]
                %554 = vst [vmem:[%s538 + $0x38] sm:$0xff] %v553
                %v555 = vld [vmem:[%s537 + $0x200] sm:$0xff]
                %556 = vst [vmem:[%s538 + $0x40] sm:$0xff] %v555
                %v557 = vld [vmem:[%s537 + $0x240] sm:$0xff]
                %558 = vst [vmem:[%s538 + $0x48] sm:$0xff] %v557
                %v559 = vld [vmem:[%s537 + $0x280] sm:$0xff]
                %560 = vst [vmem:[%s538 + $0x50] sm:$0xff] %v559
                %v561 = vld [vmem:[%s537 + $0x2c0] sm:$0xff]
                %562 = vst [vmem:[%s538 + $0x58] sm:$0xff] %v561
                %v563 = vld [vmem:[%s537 + $0x300] sm:$0xff]
                %564 = vst [vmem:[%s538 + $0x60] sm:$0xff] %v563
                %v565 = vld [vmem:[%s537 + $0x340] sm:$0xff]
                %566 = vst [vmem:[%s538 + $0x68] sm:$0xff] %v565
                %v567 = vld [vmem:[%s537 + $0x380] sm:$0xff]
                %568 = vst [vmem:[%s538 + $0x70] sm:$0xff] %v567
                %v569 = vld [vmem:[%s537 + $0x3c0] sm:$0xff]
                %570 = vst [vmem:[%s538 + $0x78] sm:$0xff] %v569
              $region159: #{_lambda_.3} parent=153 // loop_footer
                %s536 = sadd.s32 1, %s532
              $region160: #{_lambda_.3} parent=153 // loop_footer_branch
                %531 = sbr.rel target = $region156
              $region161: #{_lambda_.3} parent=153 // loop_exit
                _
            $region154: #{_lambda_.3} parent=145 // pred_fallthru
              _
          $region146: #{_lambda_.3} parent=141 // pred_fallthru
            _
          %615 = vnop
        $region142: #{_lambda_.3} parent=23 // pred_fallthru
          _
      $region24: #{_lambda_.3} parent=5 // pred_fallthru
        _
      %p616 = scmp.le.s32.totalorder 1, %s15
      %p617 = scmp.lt.s32.totalorder %s15, 17
      %p618 = pnand %p616, %p617
      %p619 = pneg %p618
      // Predicated region
      $region177: #{_lambda_.3} parent=5 // pred_check
        _
      $region178: #{_lambda_.3} parent=5 // pred_check_branch
        %621 = sbr.rel (%p618) target = $region180
      $region179: #{_lambda_.3} parent=5 // pred_region
        %s622 = ssub.s32 %s15, 1
        %s623 = sand.u32 %s42, 1
        %s624 = sand.u32 %s42, 1
        %s625 = smul.addr %s624, 32
        %s626 = scalar_lea.vmem [#allocation2], %s625
        // Predicated region
        $region181: #{_lambda_.3} parent=179 // pred_check
          %p627 = pneg %p55
        $region182: #{_lambda_.3} parent=179 // pred_check_branch
          %629 = sbr.rel (%p627) target = $region184
        $region183: #{_lambda_.3} parent=179 // pred_region
          _
        $region184: #{_lambda_.3} parent=179 // pred_fallthru
          _
        %s630 = sand.u32 %s76, 1
        %s631 = sand.u32 %s76, 1
        %s632 = smul.addr %s631, 128
        %s633 = scalar_lea.vmem [#allocation3], %s632
        // Predicated region
        $region185: #{_lambda_.3} parent=179 // pred_check
          %p634 = pneg %p89
        $region186: #{_lambda_.3} parent=179 // pred_check_branch
          %636 = sbr.rel (%p634) target = $region188
        $region187: #{_lambda_.3} parent=179 // pred_region
          _
        $region188: #{_lambda_.3} parent=179 // pred_fallthru
          _
        %s637 = sand.u32 %s104, 1
        %s638 = sand.u32 %s104, 1
        %s639 = smul.addr %s638, 128
        %s640 = scalar_lea.vmem [#allocation4], %s639
        // Predicated region
        $region189: #{_lambda_.3} parent=179 // pred_check
          %p641 = pneg %p117
        $region190: #{_lambda_.3} parent=179 // pred_check_branch
          %643 = sbr.rel (%p641) target = $region192
        $region191: #{_lambda_.3} parent=179 // pred_region
          _
        $region192: #{_lambda_.3} parent=179 // pred_fallthru
          _
        %s644 = sand.u32 %s138, 1
        %s645 = sand.u32 %s138, 1
        %s646 = smul.addr %s645, 128
        %s647 = scalar_lea.vmem [#allocation5], %s646
        // Predicated region
        $region193: #{_lambda_.3} parent=179 // pred_check
          %p648 = pneg %p151
        $region194: #{_lambda_.3} parent=179 // pred_check_branch
          %650 = sbr.rel (%p648) target = $region196
        $region195: #{_lambda_.3} parent=179 // pred_region
          _
        $region196: #{_lambda_.3} parent=179 // pred_fallthru
          _
        %s651 = sand.u32 %s42, 1
        %s652 = sand.u32 %s42, 1
        %s653 = smul.addr %s652, 32
        %s654 = scalar_lea.vmem [#allocation2], %s653
        %p655 = pneg %p55
        %p656 = pneg %p52
        %s657 = sand.u32 %s76, 1
        %s658 = sand.u32 %s76, 1
        %s659 = smul.addr %s658, 128
        %s660 = scalar_lea.vmem [#allocation3], %s659
        %p661 = pneg %p89
        %p662 = pneg %p86
        %s663 = sand.u32 %s104, 1
        %s664 = sand.u32 %s104, 1
        %s665 = smul.addr %s664, 128
        %s666 = scalar_lea.vmem [#allocation4], %s665
        %p667 = pneg %p117
        %p668 = pneg %p114
        %s669 = sand.u32 %s138, 1
        %s670 = sand.u32 %s138, 1
        %s671 = smul.addr %s670, 128
        %s672 = scalar_lea.vmem [#allocation5], %s671
        %p673 = pneg %p151
        %p674 = pneg %p148
        %p675 = pneg %p172
        %p676 = pneg %p169
        %p677 = pneg %p193
        %p678 = pneg %p190
        %p679 = pneg %p221
        %p680 = pneg %p218
        %s681 = sand.u32 %s208, 1
        %s682 = scalar_lea.sflag [#allocation7], %s681
        %s683 = sand.u32 %s208, 1
        %s684 = smul.addr %s683, 64
        %s685 = scalar_lea.vmem [#allocation6], %s684
        %s686 = ssub.s32 %s25, 1
        %p687 = scmp.gt.s32.totalorder %s686, 0
        %s688 = scalar_select %p687, %s686, 0
        %s689 = sadd.s32 %s25, 1
        %p690 = scmp.lt.s32.totalorder %s689, 7
        %s691 = scalar_select %p690, %s689, 7
        %v692 = vld [vmem:[%s626] sm:$0xff]
        %v693 = vld [vmem:[%s626 + $0x8] sm:$0xff]
        %v694 = vld [vmem:[%s626 + $0x10] sm:$0xff]
        %v695 = vld [vmem:[%s626 + $0x18] sm:$0xff]
        %vm696 = vcmask 64512
        %697 = vst.msk [vmem:[%s685] sm:$0xff] %vm696, %v692
        %698 = vst.msk [vmem:[%s685 + $0x8] sm:$0xff] %vm696, %v693
        %699 = vst.msk [vmem:[%s685 + $0x10] sm:$0xff] %vm696, %v694
        %700 = vst.msk [vmem:[%s685 + $0x18] sm:$0xff] %vm696, %v695
        %v701 = vld [vmem:[%s633] sm:$0xff]
        %v702 = vld [vmem:[%s633 + $0x8] sm:$0xff]
        %v703 = vld [vmem:[%s633 + $0x10] sm:$0xff]
        %v704 = vld [vmem:[%s633 + $0x18] sm:$0xff]
        %v705 = vld [vmem:[%s633 + $0x20] sm:$0xff]
        %v706 = vld [vmem:[%s633 + $0x28] sm:$0xff]
        %v707 = vld [vmem:[%s633 + $0x30] sm:$0xff]
        %v708 = vld [vmem:[%s633 + $0x38] sm:$0xff]
        %v709 = vld [vmem:[%s633 + $0x40] sm:$0xff]
        %v710 = vld [vmem:[%s633 + $0x48] sm:$0xff]
        %v711 = vld [vmem:[%s633 + $0x50] sm:$0xff]
        %v712 = vld [vmem:[%s633 + $0x58] sm:$0xff]
        %v713 = vld [vmem:[%s633 + $0x60] sm:$0xff]
        %v714 = vld [vmem:[%s633 + $0x68] sm:$0xff]
        %v715 = vld [vmem:[%s633 + $0x70] sm:$0xff]
        %v716 = vld [vmem:[%s633 + $0x78] sm:$0xff]
        %v717 = vcombine.low %v701, %v703
        %v718 = vcombine.high %v701, %v703
        %v720 = vunpack.c.l.s4 1983009808
        %v721 = vunpack.c.0.s8 %v720
        %v722 = vlaneseq
        %v723 = vshrl.u32 %v722, 7
        %v724 = vsub.s32 %v721, %v723
        %v725 = vrot.slane %v717, %v724
        %v727 = vunpack.c.l.s4 1983009808
        %v728 = vunpack.c.0.s8 %v727
        %v729 = vlaneseq
        %v730 = vshrl.u32 %v729, 7
        %v731 = vsub.s32 %v728, %v730
        %v732 = vrot.slane %v718, %v731
        %v733 = vcombine.low %v702, %v704
        %v734 = vcombine.high %v702, %v704
        %v736 = vunpack.c.l.s4 1983009808
        %v737 = vunpack.c.0.s8 %v736
        %v738 = vlaneseq
        %v739 = vshrl.u32 %v738, 7
        %v740 = vsub.s32 %v737, %v739
        %v741 = vrot.slane %v733, %v740
        %v743 = vunpack.c.l.s4 1983009808
        %v744 = vunpack.c.0.s8 %v743
        %v745 = vlaneseq
        %v746 = vshrl.u32 %v745, 7
        %v747 = vsub.s32 %v744, %v746
        %v748 = vrot.slane %v734, %v747
        %v749 = vcombine.low %v705, %v707
        %v750 = vcombine.high %v705, %v707
        %v752 = vunpack.c.l.s4 1983009808
        %v753 = vunpack.c.0.s8 %v752
        %v754 = vlaneseq
        %v755 = vshrl.u32 %v754, 7
        %v756 = vsub.s32 %v753, %v755
        %v757 = vrot.slane %v749, %v756
        %v759 = vunpack.c.l.s4 1983009808
        %v760 = vunpack.c.0.s8 %v759
        %v761 = vlaneseq
        %v762 = vshrl.u32 %v761, 7
        %v763 = vsub.s32 %v760, %v762
        %v764 = vrot.slane %v750, %v763
        %v765 = vcombine.low %v706, %v708
        %v766 = vcombine.high %v706, %v708
        %v768 = vunpack.c.l.s4 1983009808
        %v769 = vunpack.c.0.s8 %v768
        %v770 = vlaneseq
        %v771 = vshrl.u32 %v770, 7
        %v772 = vsub.s32 %v769, %v771
        %v773 = vrot.slane %v765, %v772
        %v775 = vunpack.c.l.s4 1983009808
        %v776 = vunpack.c.0.s8 %v775
        %v777 = vlaneseq
        %v778 = vshrl.u32 %v777, 7
        %v779 = vsub.s32 %v776, %v778
        %v780 = vrot.slane %v766, %v779
        %v781 = vcombine.low %v725, %v741
        %v782 = vcombine.high %v725, %v741
        %v784 = vunpack.c.l.s4 1934713408
        %v785 = vunpack.c.0.s8 %v784
        %v786 = vlaneseq
        %v787 = vshrl.u32 %v786, 7
        %v788 = vsub.s32 %v785, %v787
        %v789 = vrot.slane %v781, %v788
        %v791 = vunpack.c.l.s4 1934713408
        %v792 = vunpack.c.0.s8 %v791
        %v793 = vlaneseq
        %v794 = vshrl.u32 %v793, 7
        %v795 = vsub.s32 %v792, %v794
        %v796 = vrot.slane %v782, %v795
        %v797 = vcombine.low %v732, %v748
        %v798 = vcombine.high %v732, %v748
        %v800 = vunpack.c.l.s4 1934713408
        %v801 = vunpack.c.0.s8 %v800
        %v802 = vlaneseq
        %v803 = vshrl.u32 %v802, 7
        %v804 = vsub.s32 %v801, %v803
        %v805 = vrot.slane %v797, %v804
        %v807 = vunpack.c.l.s4 1934713408
        %v808 = vunpack.c.0.s8 %v807
        %v809 = vlaneseq
        %v810 = vshrl.u32 %v809, 7
        %v811 = vsub.s32 %v808, %v810
        %v812 = vrot.slane %v798, %v811
        %v813 = vcombine.low %v757, %v773
        %v814 = vcombine.high %v757, %v773
        %v816 = vunpack.c.l.s4 1934713408
        %v817 = vunpack.c.0.s8 %v816
        %v818 = vlaneseq
        %v819 = vshrl.u32 %v818, 7
        %v820 = vsub.s32 %v817, %v819
        %v821 = vrot.slane %v813, %v820
        %v823 = vunpack.c.l.s4 1934713408
        %v824 = vunpack.c.0.s8 %v823
        %v825 = vlaneseq
        %v826 = vshrl.u32 %v825, 7
        %v827 = vsub.s32 %v824, %v826
        %v828 = vrot.slane %v814, %v827
        %v829 = vcombine.low %v764, %v780
        %v830 = vcombine.high %v764, %v780
        %v832 = vunpack.c.l.s4 1934713408
        %v833 = vunpack.c.0.s8 %v832
        %v834 = vlaneseq
        %v835 = vshrl.u32 %v834, 7
        %v836 = vsub.s32 %v833, %v835
        %v837 = vrot.slane %v829, %v836
        %v839 = vunpack.c.l.s4 1934713408
        %v840 = vunpack.c.0.s8 %v839
        %v841 = vlaneseq
        %v842 = vshrl.u32 %v841, 7
        %v843 = vsub.s32 %v840, %v842
        %v844 = vrot.slane %v830, %v843
        %v845 = vcombine.low %v789, %v821
        %v846 = vcombine.high %v789, %v821
        %v847 = vcombine.low %v796, %v828
        %v848 = vcombine.high %v796, %v828
        %v849 = vcombine.low %v805, %v837
        %v850 = vcombine.high %v805, %v837
        %v851 = vcombine.low %v812, %v844
        %v852 = vcombine.high %v812, %v844
        %v853 = vcombine.low %v709, %v711
        %v854 = vcombine.high %v709, %v711
        %v856 = vunpack.c.l.s4 1983009808
        %v857 = vunpack.c.0.s8 %v856
        %v858 = vlaneseq
        %v859 = vshrl.u32 %v858, 7
        %v860 = vsub.s32 %v857, %v859
        %v861 = vrot.slane %v853, %v860
        %v863 = vunpack.c.l.s4 1983009808
        %v864 = vunpack.c.0.s8 %v863
        %v865 = vlaneseq
        %v866 = vshrl.u32 %v865, 7
        %v867 = vsub.s32 %v864, %v866
        %v868 = vrot.slane %v854, %v867
        %v869 = vcombine.low %v710, %v712
        %v870 = vcombine.high %v710, %v712
        %v872 = vunpack.c.l.s4 1983009808
        %v873 = vunpack.c.0.s8 %v872
        %v874 = vlaneseq
        %v875 = vshrl.u32 %v874, 7
        %v876 = vsub.s32 %v873, %v875
        %v877 = vrot.slane %v869, %v876
        %v879 = vunpack.c.l.s4 1983009808
        %v880 = vunpack.c.0.s8 %v879
        %v881 = vlaneseq
        %v882 = vshrl.u32 %v881, 7
        %v883 = vsub.s32 %v880, %v882
        %v884 = vrot.slane %v870, %v883
        %v885 = vcombine.low %v713, %v715
        %v886 = vcombine.high %v713, %v715
        %v888 = vunpack.c.l.s4 1983009808
        %v889 = vunpack.c.0.s8 %v888
        %v890 = vlaneseq
        %v891 = vshrl.u32 %v890, 7
        %v892 = vsub.s32 %v889, %v891
        %v893 = vrot.slane %v885, %v892
        %v895 = vunpack.c.l.s4 1983009808
        %v896 = vunpack.c.0.s8 %v895
        %v897 = vlaneseq
        %v898 = vshrl.u32 %v897, 7
        %v899 = vsub.s32 %v896, %v898
        %v900 = vrot.slane %v886, %v899
        %v901 = vcombine.low %v714, %v716
        %v902 = vcombine.high %v714, %v716
        %v904 = vunpack.c.l.s4 1983009808
        %v905 = vunpack.c.0.s8 %v904
        %v906 = vlaneseq
        %v907 = vshrl.u32 %v906, 7
        %v908 = vsub.s32 %v905, %v907
        %v909 = vrot.slane %v901, %v908
        %v911 = vunpack.c.l.s4 1983009808
        %v912 = vunpack.c.0.s8 %v911
        %v913 = vlaneseq
        %v914 = vshrl.u32 %v913, 7
        %v915 = vsub.s32 %v912, %v914
        %v916 = vrot.slane %v902, %v915
        %v917 = vcombine.low %v861, %v877
        %v918 = vcombine.high %v861, %v877
        %v920 = vunpack.c.l.s4 1934713408
        %v921 = vunpack.c.0.s8 %v920
        %v922 = vlaneseq
        %v923 = vshrl.u32 %v922, 7
        %v924 = vsub.s32 %v921, %v923
        %v925 = vrot.slane %v917, %v924
        %v927 = vunpack.c.l.s4 1934713408
        %v928 = vunpack.c.0.s8 %v927
        %v929 = vlaneseq
        %v930 = vshrl.u32 %v929, 7
        %v931 = vsub.s32 %v928, %v930
        %v932 = vrot.slane %v918, %v931
        %v933 = vcombine.low %v868, %v884
        %v934 = vcombine.high %v868, %v884
        %v936 = vunpack.c.l.s4 1934713408
        %v937 = vunpack.c.0.s8 %v936
        %v938 = vlaneseq
        %v939 = vshrl.u32 %v938, 7
        %v940 = vsub.s32 %v937, %v939
        %v941 = vrot.slane %v933, %v940
        %v943 = vunpack.c.l.s4 1934713408
        %v944 = vunpack.c.0.s8 %v943
        %v945 = vlaneseq
        %v946 = vshrl.u32 %v945, 7
        %v947 = vsub.s32 %v944, %v946
        %v948 = vrot.slane %v934, %v947
        %v949 = vcombine.low %v893, %v909
        %v950 = vcombine.high %v893, %v909
        %v952 = vunpack.c.l.s4 1934713408
        %v953 = vunpack.c.0.s8 %v952
        %v954 = vlaneseq
        %v955 = vshrl.u32 %v954, 7
        %v956 = vsub.s32 %v953, %v955
        %v957 = vrot.slane %v949, %v956
        %v959 = vunpack.c.l.s4 1934713408
        %v960 = vunpack.c.0.s8 %v959
        %v961 = vlaneseq
        %v962 = vshrl.u32 %v961, 7
        %v963 = vsub.s32 %v960, %v962
        %v964 = vrot.slane %v950, %v963
        %v965 = vcombine.low %v900, %v916
        %v966 = vcombine.high %v900, %v916
        %v968 = vunpack.c.l.s4 1934713408
        %v969 = vunpack.c.0.s8 %v968
        %v970 = vlaneseq
        %v971 = vshrl.u32 %v970, 7
        %v972 = vsub.s32 %v969, %v971
        %v973 = vrot.slane %v965, %v972
        %v975 = vunpack.c.l.s4 1934713408
        %v976 = vunpack.c.0.s8 %v975
        %v977 = vlaneseq
        %v978 = vshrl.u32 %v977, 7
        %v979 = vsub.s32 %v976, %v978
        %v980 = vrot.slane %v966, %v979
        %v981 = vcombine.low %v925, %v957
        %v982 = vcombine.high %v925, %v957
        %v983 = vcombine.low %v932, %v964
        %v984 = vcombine.high %v932, %v964
        %v985 = vcombine.low %v941, %v973
        %v986 = vcombine.high %v941, %v973
        %v987 = vcombine.low %v948, %v980
        %v988 = vcombine.high %v948, %v980
        %991 = vrot.lane.b32.xlu0 %v846, 8
        %v992 = vpop.permute.xlu0 %991
        %993 = vrot.lane.b32.xlu0 %v982, 8
        %v994 = vpop.permute.xlu0 %993
        %999 = vrot.lane.b32.xlu0 %v847, 16
        %v1000 = vpop.permute.xlu0 %999
        %1001 = vrot.lane.b32.xlu0 %v983, 16
        %v1002 = vpop.permute.xlu0 %1001
        %1007 = vrot.lane.b32.xlu0 %v848, 24
        %v1008 = vpop.permute.xlu0 %1007
        %1009 = vrot.lane.b32.xlu0 %v984, 24
        %v1010 = vpop.permute.xlu0 %1009
        %1015 = vrot.lane.b32.xlu0 %v849, 32
        %v1016 = vpop.permute.xlu0 %1015
        %1017 = vrot.lane.b32.xlu0 %v985, 32
        %v1018 = vpop.permute.xlu0 %1017
        %1023 = vrot.lane.b32.xlu0 %v850, 40
        %v1024 = vpop.permute.xlu0 %1023
        %1025 = vrot.lane.b32.xlu0 %v986, 40
        %v1026 = vpop.permute.xlu0 %1025
        %1031 = vrot.lane.b32.xlu0 %v851, 48
        %v1032 = vpop.permute.xlu0 %1031
        %1033 = vrot.lane.b32.xlu0 %v987, 48
        %v1034 = vpop.permute.xlu0 %1033
        %1039 = vrot.lane.b32.xlu0 %v852, 56
        %v1040 = vpop.permute.xlu0 %1039
        %1041 = vrot.lane.b32.xlu0 %v988, 56
        %v1042 = vpop.permute.xlu0 %1041
        %v1045 = vsel %vm696, %v845, %v992
        %v1046 = vsel %vm696, %v981, %v994
        %vm1047 = vcmask 130048
        %v1048 = vsel %vm1047, %v1045, %v1000
        %v1049 = vsel %vm1047, %v1046, %v1002
        %vm1050 = vcmask 195584
        %v1051 = vsel %vm1050, %v1048, %v1008
        %v1052 = vsel %vm1050, %v1049, %v1010
        %vm1053 = vcmask 261120
        %v1054 = vsel %vm1053, %v1051, %v1016
        %v1055 = vsel %vm1053, %v1052, %v1018
        %vm1056 = vcmask 326656
        %v1057 = vsel %vm1056, %v1054, %v1024
        %v1058 = vsel %vm1056, %v1055, %v1026
        %vm1059 = vcmask 392192
        %v1060 = vsel %vm1059, %v1057, %v1032
        %v1061 = vsel %vm1059, %v1058, %v1034
        %vm1062 = vcmask 457728
        %v1063 = vsel %vm1062, %v1060, %v1040
        %v1064 = vsel %vm1062, %v1061, %v1042
        %p1065 = scmp.eq.s32.totalorder %s25, 0
        %s1066 = scalar_select %p1065, 0.0, 1.0
        %v1067 = vstv %s1066
        %v1068 = vmul.f32 %v1063, %v1067
        %v1069 = vmul.f32 %v1064, %v1067
        %v1070 = vld [vmem:[%s640] sm:$0xff]
        %v1071 = vld [vmem:[%s640 + $0x8] sm:$0xff]
        %v1072 = vld [vmem:[%s640 + $0x10] sm:$0xff]
        %v1073 = vld [vmem:[%s640 + $0x18] sm:$0xff]
        %v1074 = vld [vmem:[%s640 + $0x20] sm:$0xff]
        %v1075 = vld [vmem:[%s640 + $0x28] sm:$0xff]
        %v1076 = vld [vmem:[%s640 + $0x30] sm:$0xff]
        %v1077 = vld [vmem:[%s640 + $0x38] sm:$0xff]
        %v1078 = vld [vmem:[%s640 + $0x40] sm:$0xff]
        %v1079 = vld [vmem:[%s640 + $0x48] sm:$0xff]
        %v1080 = vld [vmem:[%s640 + $0x50] sm:$0xff]
        %v1081 = vld [vmem:[%s640 + $0x58] sm:$0xff]
        %v1082 = vld [vmem:[%s640 + $0x60] sm:$0xff]
        %v1083 = vld [vmem:[%s640 + $0x68] sm:$0xff]
        %v1084 = vld [vmem:[%s640 + $0x70] sm:$0xff]
        %v1085 = vld [vmem:[%s640 + $0x78] sm:$0xff]
        %v1086 = vcombine.low %v1070, %v1072
        %v1087 = vcombine.high %v1070, %v1072
        %v1089 = vunpack.c.l.s4 1983009808
        %v1090 = vunpack.c.0.s8 %v1089
        %v1091 = vlaneseq
        %v1092 = vshrl.u32 %v1091, 7
        %v1093 = vsub.s32 %v1090, %v1092
        %v1094 = vrot.slane %v1086, %v1093
        %v1096 = vunpack.c.l.s4 1983009808
        %v1097 = vunpack.c.0.s8 %v1096
        %v1098 = vlaneseq
        %v1099 = vshrl.u32 %v1098, 7
        %v1100 = vsub.s32 %v1097, %v1099
        %v1101 = vrot.slane %v1087, %v1100
        %v1102 = vcombine.low %v1071, %v1073
        %v1103 = vcombine.high %v1071, %v1073
        %v1105 = vunpack.c.l.s4 1983009808
        %v1106 = vunpack.c.0.s8 %v1105
        %v1107 = vlaneseq
        %v1108 = vshrl.u32 %v1107, 7
        %v1109 = vsub.s32 %v1106, %v1108
        %v1110 = vrot.slane %v1102, %v1109
        %v1112 = vunpack.c.l.s4 1983009808
        %v1113 = vunpack.c.0.s8 %v1112
        %v1114 = vlaneseq
        %v1115 = vshrl.u32 %v1114, 7
        %v1116 = vsub.s32 %v1113, %v1115
        %v1117 = vrot.slane %v1103, %v1116
        %v1118 = vcombine.low %v1074, %v1076
        %v1119 = vcombine.high %v1074, %v1076
        %v1121 = vunpack.c.l.s4 1983009808
        %v1122 = vunpack.c.0.s8 %v1121
        %v1123 = vlaneseq
        %v1124 = vshrl.u32 %v1123, 7
        %v1125 = vsub.s32 %v1122, %v1124
        %v1126 = vrot.slane %v1118, %v1125
        %v1128 = vunpack.c.l.s4 1983009808
        %v1129 = vunpack.c.0.s8 %v1128
        %v1130 = vlaneseq
        %v1131 = vshrl.u32 %v1130, 7
        %v1132 = vsub.s32 %v1129, %v1131
        %v1133 = vrot.slane %v1119, %v1132
        %v1134 = vcombine.low %v1075, %v1077
        %v1135 = vcombine.high %v1075, %v1077
        %v1137 = vunpack.c.l.s4 1983009808
        %v1138 = vunpack.c.0.s8 %v1137
        %v1139 = vlaneseq
        %v1140 = vshrl.u32 %v1139, 7
        %v1141 = vsub.s32 %v1138, %v1140
        %v1142 = vrot.slane %v1134, %v1141
        %v1144 = vunpack.c.l.s4 1983009808
        %v1145 = vunpack.c.0.s8 %v1144
        %v1146 = vlaneseq
        %v1147 = vshrl.u32 %v1146, 7
        %v1148 = vsub.s32 %v1145, %v1147
        %v1149 = vrot.slane %v1135, %v1148
        %v1150 = vcombine.low %v1094, %v1110
        %v1151 = vcombine.high %v1094, %v1110
        %v1153 = vunpack.c.l.s4 1934713408
        %v1154 = vunpack.c.0.s8 %v1153
        %v1155 = vlaneseq
        %v1156 = vshrl.u32 %v1155, 7
        %v1157 = vsub.s32 %v1154, %v1156
        %v1158 = vrot.slane %v1150, %v1157
        %v1160 = vunpack.c.l.s4 1934713408
        %v1161 = vunpack.c.0.s8 %v1160
        %v1162 = vlaneseq
        %v1163 = vshrl.u32 %v1162, 7
        %v1164 = vsub.s32 %v1161, %v1163
        %v1165 = vrot.slane %v1151, %v1164
        %v1166 = vcombine.low %v1101, %v1117
        %v1167 = vcombine.high %v1101, %v1117
        %v1169 = vunpack.c.l.s4 1934713408
        %v1170 = vunpack.c.0.s8 %v1169
        %v1171 = vlaneseq
        %v1172 = vshrl.u32 %v1171, 7
        %v1173 = vsub.s32 %v1170, %v1172
        %v1174 = vrot.slane %v1166, %v1173
        %v1176 = vunpack.c.l.s4 1934713408
        %v1177 = vunpack.c.0.s8 %v1176
        %v1178 = vlaneseq
        %v1179 = vshrl.u32 %v1178, 7
        %v1180 = vsub.s32 %v1177, %v1179
        %v1181 = vrot.slane %v1167, %v1180
        %v1182 = vcombine.low %v1126, %v1142
        %v1183 = vcombine.high %v1126, %v1142
        %v1185 = vunpack.c.l.s4 1934713408
        %v1186 = vunpack.c.0.s8 %v1185
        %v1187 = vlaneseq
        %v1188 = vshrl.u32 %v1187, 7
        %v1189 = vsub.s32 %v1186, %v1188
        %v1190 = vrot.slane %v1182, %v1189
        %v1192 = vunpack.c.l.s4 1934713408
        %v1193 = vunpack.c.0.s8 %v1192
        %v1194 = vlaneseq
        %v1195 = vshrl.u32 %v1194, 7
        %v1196 = vsub.s32 %v1193, %v1195
        %v1197 = vrot.slane %v1183, %v1196
        %v1198 = vcombine.low %v1133, %v1149
        %v1199 = vcombine.high %v1133, %v1149
        %v1201 = vunpack.c.l.s4 1934713408
        %v1202 = vunpack.c.0.s8 %v1201
        %v1203 = vlaneseq
        %v1204 = vshrl.u32 %v1203, 7
        %v1205 = vsub.s32 %v1202, %v1204
        %v1206 = vrot.slane %v1198, %v1205
        %v1208 = vunpack.c.l.s4 1934713408
        %v1209 = vunpack.c.0.s8 %v1208
        %v1210 = vlaneseq
        %v1211 = vshrl.u32 %v1210, 7
        %v1212 = vsub.s32 %v1209, %v1211
        %v1213 = vrot.slane %v1199, %v1212
        %v1214 = vcombine.low %v1158, %v1190
        %v1215 = vcombine.high %v1158, %v1190
        %v1216 = vcombine.low %v1165, %v1197
        %v1217 = vcombine.high %v1165, %v1197
        %v1218 = vcombine.low %v1174, %v1206
        %v1219 = vcombine.high %v1174, %v1206
        %v1220 = vcombine.low %v1181, %v1213
        %v1221 = vcombine.high %v1181, %v1213
        %v1222 = vcombine.low %v1078, %v1080
        %v1223 = vcombine.high %v1078, %v1080
        %v1225 = vunpack.c.l.s4 1983009808
        %v1226 = vunpack.c.0.s8 %v1225
        %v1227 = vlaneseq
        %v1228 = vshrl.u32 %v1227, 7
        %v1229 = vsub.s32 %v1226, %v1228
        %v1230 = vrot.slane %v1222, %v1229
        %v1232 = vunpack.c.l.s4 1983009808
        %v1233 = vunpack.c.0.s8 %v1232
        %v1234 = vlaneseq
        %v1235 = vshrl.u32 %v1234, 7
        %v1236 = vsub.s32 %v1233, %v1235
        %v1237 = vrot.slane %v1223, %v1236
        %v1238 = vcombine.low %v1079, %v1081
        %v1239 = vcombine.high %v1079, %v1081
        %v1241 = vunpack.c.l.s4 1983009808
        %v1242 = vunpack.c.0.s8 %v1241
        %v1243 = vlaneseq
        %v1244 = vshrl.u32 %v1243, 7
        %v1245 = vsub.s32 %v1242, %v1244
        %v1246 = vrot.slane %v1238, %v1245
        %v1248 = vunpack.c.l.s4 1983009808
        %v1249 = vunpack.c.0.s8 %v1248
        %v1250 = vlaneseq
        %v1251 = vshrl.u32 %v1250, 7
        %v1252 = vsub.s32 %v1249, %v1251
        %v1253 = vrot.slane %v1239, %v1252
        %v1254 = vcombine.low %v1082, %v1084
        %v1255 = vcombine.high %v1082, %v1084
        %v1257 = vunpack.c.l.s4 1983009808
        %v1258 = vunpack.c.0.s8 %v1257
        %v1259 = vlaneseq
        %v1260 = vshrl.u32 %v1259, 7
        %v1261 = vsub.s32 %v1258, %v1260
        %v1262 = vrot.slane %v1254, %v1261
        %v1264 = vunpack.c.l.s4 1983009808
        %v1265 = vunpack.c.0.s8 %v1264
        %v1266 = vlaneseq
        %v1267 = vshrl.u32 %v1266, 7
        %v1268 = vsub.s32 %v1265, %v1267
        %v1269 = vrot.slane %v1255, %v1268
        %v1270 = vcombine.low %v1083, %v1085
        %v1271 = vcombine.high %v1083, %v1085
        %v1273 = vunpack.c.l.s4 1983009808
        %v1274 = vunpack.c.0.s8 %v1273
        %v1275 = vlaneseq
        %v1276 = vshrl.u32 %v1275, 7
        %v1277 = vsub.s32 %v1274, %v1276
        %v1278 = vrot.slane %v1270, %v1277
        %v1280 = vunpack.c.l.s4 1983009808
        %v1281 = vunpack.c.0.s8 %v1280
        %v1282 = vlaneseq
        %v1283 = vshrl.u32 %v1282, 7
        %v1284 = vsub.s32 %v1281, %v1283
        %v1285 = vrot.slane %v1271, %v1284
        %v1286 = vcombine.low %v1230, %v1246
        %v1287 = vcombine.high %v1230, %v1246
        %v1289 = vunpack.c.l.s4 1934713408
        %v1290 = vunpack.c.0.s8 %v1289
        %v1291 = vlaneseq
        %v1292 = vshrl.u32 %v1291, 7
        %v1293 = vsub.s32 %v1290, %v1292
        %v1294 = vrot.slane %v1286, %v1293
        %v1296 = vunpack.c.l.s4 1934713408
        %v1297 = vunpack.c.0.s8 %v1296
        %v1298 = vlaneseq
        %v1299 = vshrl.u32 %v1298, 7
        %v1300 = vsub.s32 %v1297, %v1299
        %v1301 = vrot.slane %v1287, %v1300
        %v1302 = vcombine.low %v1237, %v1253
        %v1303 = vcombine.high %v1237, %v1253
        %v1305 = vunpack.c.l.s4 1934713408
        %v1306 = vunpack.c.0.s8 %v1305
        %v1307 = vlaneseq
        %v1308 = vshrl.u32 %v1307, 7
        %v1309 = vsub.s32 %v1306, %v1308
        %v1310 = vrot.slane %v1302, %v1309
        %v1312 = vunpack.c.l.s4 1934713408
        %v1313 = vunpack.c.0.s8 %v1312
        %v1314 = vlaneseq
        %v1315 = vshrl.u32 %v1314, 7
        %v1316 = vsub.s32 %v1313, %v1315
        %v1317 = vrot.slane %v1303, %v1316
        %v1318 = vcombine.low %v1262, %v1278
        %v1319 = vcombine.high %v1262, %v1278
        %v1321 = vunpack.c.l.s4 1934713408
        %v1322 = vunpack.c.0.s8 %v1321
        %v1323 = vlaneseq
        %v1324 = vshrl.u32 %v1323, 7
        %v1325 = vsub.s32 %v1322, %v1324
        %v1326 = vrot.slane %v1318, %v1325
        %v1328 = vunpack.c.l.s4 1934713408
        %v1329 = vunpack.c.0.s8 %v1328
        %v1330 = vlaneseq
        %v1331 = vshrl.u32 %v1330, 7
        %v1332 = vsub.s32 %v1329, %v1331
        %v1333 = vrot.slane %v1319, %v1332
        %v1334 = vcombine.low %v1269, %v1285
        %v1335 = vcombine.high %v1269, %v1285
        %v1337 = vunpack.c.l.s4 1934713408
        %v1338 = vunpack.c.0.s8 %v1337
        %v1339 = vlaneseq
        %v1340 = vshrl.u32 %v1339, 7
        %v1341 = vsub.s32 %v1338, %v1340
        %v1342 = vrot.slane %v1334, %v1341
        %v1344 = vunpack.c.l.s4 1934713408
        %v1345 = vunpack.c.0.s8 %v1344
        %v1346 = vlaneseq
        %v1347 = vshrl.u32 %v1346, 7
        %v1348 = vsub.s32 %v1345, %v1347
        %v1349 = vrot.slane %v1335, %v1348
        %v1350 = vcombine.low %v1294, %v1326
        %v1351 = vcombine.high %v1294, %v1326
        %v1352 = vcombine.low %v1301, %v1333
        %v1353 = vcombine.high %v1301, %v1333
        %v1354 = vcombine.low %v1310, %v1342
        %v1355 = vcombine.high %v1310, %v1342
        %v1356 = vcombine.low %v1317, %v1349
        %v1357 = vcombine.high %v1317, %v1349
        %1360 = vrot.lane.b32.xlu0 %v1215, 8
        %v1361 = vpop.permute.xlu0 %1360
        %1362 = vrot.lane.b32.xlu0 %v1351, 8
        %v1363 = vpop.permute.xlu0 %1362
        %1368 = vrot.lane.b32.xlu0 %v1216, 16
        %v1369 = vpop.permute.xlu0 %1368
        %1370 = vrot.lane.b32.xlu0 %v1352, 16
        %v1371 = vpop.permute.xlu0 %1370
        %1376 = vrot.lane.b32.xlu0 %v1217, 24
        %v1377 = vpop.permute.xlu0 %1376
        %1378 = vrot.lane.b32.xlu0 %v1353, 24
        %v1379 = vpop.permute.xlu0 %1378
        %1384 = vrot.lane.b32.xlu0 %v1218, 32
        %v1385 = vpop.permute.xlu0 %1384
        %1386 = vrot.lane.b32.xlu0 %v1354, 32
        %v1387 = vpop.permute.xlu0 %1386
        %1392 = vrot.lane.b32.xlu0 %v1219, 40
        %v1393 = vpop.permute.xlu0 %1392
        %1394 = vrot.lane.b32.xlu0 %v1355, 40
        %v1395 = vpop.permute.xlu0 %1394
        %1400 = vrot.lane.b32.xlu0 %v1220, 48
        %v1401 = vpop.permute.xlu0 %1400
        %1402 = vrot.lane.b32.xlu0 %v1356, 48
        %v1403 = vpop.permute.xlu0 %1402
        %1408 = vrot.lane.b32.xlu0 %v1221, 56
        %v1409 = vpop.permute.xlu0 %1408
        %1410 = vrot.lane.b32.xlu0 %v1357, 56
        %v1411 = vpop.permute.xlu0 %1410
        %v1414 = vsel %vm696, %v1214, %v1361
        %v1415 = vsel %vm696, %v1350, %v1363
        %v1416 = vsel %vm1047, %v1414, %v1369
        %v1417 = vsel %vm1047, %v1415, %v1371
        %v1418 = vsel %vm1050, %v1416, %v1377
        %v1419 = vsel %vm1050, %v1417, %v1379
        %v1420 = vsel %vm1053, %v1418, %v1385
        %v1421 = vsel %vm1053, %v1419, %v1387
        %v1422 = vsel %vm1056, %v1420, %v1393
        %v1423 = vsel %vm1056, %v1421, %v1395
        %v1424 = vsel %vm1059, %v1422, %v1401
        %v1425 = vsel %vm1059, %v1423, %v1403
        %v1426 = vsel %vm1062, %v1424, %v1409
        %v1427 = vsel %vm1062, %v1425, %v1411
        %v1428 = vld [vmem:[%s647] sm:$0xff]
        %v1429 = vld [vmem:[%s647 + $0x8] sm:$0xff]
        %v1430 = vld [vmem:[%s647 + $0x10] sm:$0xff]
        %v1431 = vld [vmem:[%s647 + $0x18] sm:$0xff]
        %v1432 = vld [vmem:[%s647 + $0x20] sm:$0xff]
        %v1433 = vld [vmem:[%s647 + $0x28] sm:$0xff]
        %v1434 = vld [vmem:[%s647 + $0x30] sm:$0xff]
        %v1435 = vld [vmem:[%s647 + $0x38] sm:$0xff]
        %v1436 = vld [vmem:[%s647 + $0x40] sm:$0xff]
        %v1437 = vld [vmem:[%s647 + $0x48] sm:$0xff]
        %v1438 = vld [vmem:[%s647 + $0x50] sm:$0xff]
        %v1439 = vld [vmem:[%s647 + $0x58] sm:$0xff]
        %v1440 = vld [vmem:[%s647 + $0x60] sm:$0xff]
        %v1441 = vld [vmem:[%s647 + $0x68] sm:$0xff]
        %v1442 = vld [vmem:[%s647 + $0x70] sm:$0xff]
        %v1443 = vld [vmem:[%s647 + $0x78] sm:$0xff]
        %v1444 = vcombine.low %v1428, %v1430
        %v1445 = vcombine.high %v1428, %v1430
        %v1447 = vunpack.c.l.s4 1983009808
        %v1448 = vunpack.c.0.s8 %v1447
        %v1449 = vlaneseq
        %v1450 = vshrl.u32 %v1449, 7
        %v1451 = vsub.s32 %v1448, %v1450
        %v1452 = vrot.slane %v1444, %v1451
        %v1454 = vunpack.c.l.s4 1983009808
        %v1455 = vunpack.c.0.s8 %v1454
        %v1456 = vlaneseq
        %v1457 = vshrl.u32 %v1456, 7
        %v1458 = vsub.s32 %v1455, %v1457
        %v1459 = vrot.slane %v1445, %v1458
        %v1460 = vcombine.low %v1429, %v1431
        %v1461 = vcombine.high %v1429, %v1431
        %v1463 = vunpack.c.l.s4 1983009808
        %v1464 = vunpack.c.0.s8 %v1463
        %v1465 = vlaneseq
        %v1466 = vshrl.u32 %v1465, 7
        %v1467 = vsub.s32 %v1464, %v1466
        %v1468 = vrot.slane %v1460, %v1467
        %v1470 = vunpack.c.l.s4 1983009808
        %v1471 = vunpack.c.0.s8 %v1470
        %v1472 = vlaneseq
        %v1473 = vshrl.u32 %v1472, 7
        %v1474 = vsub.s32 %v1471, %v1473
        %v1475 = vrot.slane %v1461, %v1474
        %v1476 = vcombine.low %v1432, %v1434
        %v1477 = vcombine.high %v1432, %v1434
        %v1479 = vunpack.c.l.s4 1983009808
        %v1480 = vunpack.c.0.s8 %v1479
        %v1481 = vlaneseq
        %v1482 = vshrl.u32 %v1481, 7
        %v1483 = vsub.s32 %v1480, %v1482
        %v1484 = vrot.slane %v1476, %v1483
        %v1486 = vunpack.c.l.s4 1983009808
        %v1487 = vunpack.c.0.s8 %v1486
        %v1488 = vlaneseq
        %v1489 = vshrl.u32 %v1488, 7
        %v1490 = vsub.s32 %v1487, %v1489
        %v1491 = vrot.slane %v1477, %v1490
        %v1492 = vcombine.low %v1433, %v1435
        %v1493 = vcombine.high %v1433, %v1435
        %v1495 = vunpack.c.l.s4 1983009808
        %v1496 = vunpack.c.0.s8 %v1495
        %v1497 = vlaneseq
        %v1498 = vshrl.u32 %v1497, 7
        %v1499 = vsub.s32 %v1496, %v1498
        %v1500 = vrot.slane %v1492, %v1499
        %v1502 = vunpack.c.l.s4 1983009808
        %v1503 = vunpack.c.0.s8 %v1502
        %v1504 = vlaneseq
        %v1505 = vshrl.u32 %v1504, 7
        %v1506 = vsub.s32 %v1503, %v1505
        %v1507 = vrot.slane %v1493, %v1506
        %v1508 = vcombine.low %v1452, %v1468
        %v1509 = vcombine.high %v1452, %v1468
        %v1511 = vunpack.c.l.s4 1934713408
        %v1512 = vunpack.c.0.s8 %v1511
        %v1513 = vlaneseq
        %v1514 = vshrl.u32 %v1513, 7
        %v1515 = vsub.s32 %v1512, %v1514
        %v1516 = vrot.slane %v1508, %v1515
        %v1518 = vunpack.c.l.s4 1934713408
        %v1519 = vunpack.c.0.s8 %v1518
        %v1520 = vlaneseq
        %v1521 = vshrl.u32 %v1520, 7
        %v1522 = vsub.s32 %v1519, %v1521
        %v1523 = vrot.slane %v1509, %v1522
        %v1524 = vcombine.low %v1459, %v1475
        %v1525 = vcombine.high %v1459, %v1475
        %v1527 = vunpack.c.l.s4 1934713408
        %v1528 = vunpack.c.0.s8 %v1527
        %v1529 = vlaneseq
        %v1530 = vshrl.u32 %v1529, 7
        %v1531 = vsub.s32 %v1528, %v1530
        %v1532 = vrot.slane %v1524, %v1531
        %v1534 = vunpack.c.l.s4 1934713408
        %v1535 = vunpack.c.0.s8 %v1534
        %v1536 = vlaneseq
        %v1537 = vshrl.u32 %v1536, 7
        %v1538 = vsub.s32 %v1535, %v1537
        %v1539 = vrot.slane %v1525, %v1538
        %v1540 = vcombine.low %v1484, %v1500
        %v1541 = vcombine.high %v1484, %v1500
        %v1543 = vunpack.c.l.s4 1934713408
        %v1544 = vunpack.c.0.s8 %v1543
        %v1545 = vlaneseq
        %v1546 = vshrl.u32 %v1545, 7
        %v1547 = vsub.s32 %v1544, %v1546
        %v1548 = vrot.slane %v1540, %v1547
        %v1550 = vunpack.c.l.s4 1934713408
        %v1551 = vunpack.c.0.s8 %v1550
        %v1552 = vlaneseq
        %v1553 = vshrl.u32 %v1552, 7
        %v1554 = vsub.s32 %v1551, %v1553
        %v1555 = vrot.slane %v1541, %v1554
        %v1556 = vcombine.low %v1491, %v1507
        %v1557 = vcombine.high %v1491, %v1507
        %v1559 = vunpack.c.l.s4 1934713408
        %v1560 = vunpack.c.0.s8 %v1559
        %v1561 = vlaneseq
        %v1562 = vshrl.u32 %v1561, 7
        %v1563 = vsub.s32 %v1560, %v1562
        %v1564 = vrot.slane %v1556, %v1563
        %v1566 = vunpack.c.l.s4 1934713408
        %v1567 = vunpack.c.0.s8 %v1566
        %v1568 = vlaneseq
        %v1569 = vshrl.u32 %v1568, 7
        %v1570 = vsub.s32 %v1567, %v1569
        %v1571 = vrot.slane %v1557, %v1570
        %v1572 = vcombine.low %v1516, %v1548
        %v1573 = vcombine.high %v1516, %v1548
        %v1574 = vcombine.low %v1523, %v1555
        %v1575 = vcombine.high %v1523, %v1555
        %v1576 = vcombine.low %v1532, %v1564
        %v1577 = vcombine.high %v1532, %v1564
        %v1578 = vcombine.low %v1539, %v1571
        %v1579 = vcombine.high %v1539, %v1571
        %v1580 = vcombine.low %v1436, %v1438
        %v1581 = vcombine.high %v1436, %v1438
        %v1583 = vunpack.c.l.s4 1983009808
        %v1584 = vunpack.c.0.s8 %v1583
        %v1585 = vlaneseq
        %v1586 = vshrl.u32 %v1585, 7
        %v1587 = vsub.s32 %v1584, %v1586
        %v1588 = vrot.slane %v1580, %v1587
        %v1590 = vunpack.c.l.s4 1983009808
        %v1591 = vunpack.c.0.s8 %v1590
        %v1592 = vlaneseq
        %v1593 = vshrl.u32 %v1592, 7
        %v1594 = vsub.s32 %v1591, %v1593
        %v1595 = vrot.slane %v1581, %v1594
        %v1596 = vcombine.low %v1437, %v1439
        %v1597 = vcombine.high %v1437, %v1439
        %v1599 = vunpack.c.l.s4 1983009808
        %v1600 = vunpack.c.0.s8 %v1599
        %v1601 = vlaneseq
        %v1602 = vshrl.u32 %v1601, 7
        %v1603 = vsub.s32 %v1600, %v1602
        %v1604 = vrot.slane %v1596, %v1603
        %v1606 = vunpack.c.l.s4 1983009808
        %v1607 = vunpack.c.0.s8 %v1606
        %v1608 = vlaneseq
        %v1609 = vshrl.u32 %v1608, 7
        %v1610 = vsub.s32 %v1607, %v1609
        %v1611 = vrot.slane %v1597, %v1610
        %v1612 = vcombine.low %v1440, %v1442
        %v1613 = vcombine.high %v1440, %v1442
        %v1615 = vunpack.c.l.s4 1983009808
        %v1616 = vunpack.c.0.s8 %v1615
        %v1617 = vlaneseq
        %v1618 = vshrl.u32 %v1617, 7
        %v1619 = vsub.s32 %v1616, %v1618
        %v1620 = vrot.slane %v1612, %v1619
        %v1622 = vunpack.c.l.s4 1983009808
        %v1623 = vunpack.c.0.s8 %v1622
        %v1624 = vlaneseq
        %v1625 = vshrl.u32 %v1624, 7
        %v1626 = vsub.s32 %v1623, %v1625
        %v1627 = vrot.slane %v1613, %v1626
        %v1628 = vcombine.low %v1441, %v1443
        %v1629 = vcombine.high %v1441, %v1443
        %v1631 = vunpack.c.l.s4 1983009808
        %v1632 = vunpack.c.0.s8 %v1631
        %v1633 = vlaneseq
        %v1634 = vshrl.u32 %v1633, 7
        %v1635 = vsub.s32 %v1632, %v1634
        %v1636 = vrot.slane %v1628, %v1635
        %v1638 = vunpack.c.l.s4 1983009808
        %v1639 = vunpack.c.0.s8 %v1638
        %v1640 = vlaneseq
        %v1641 = vshrl.u32 %v1640, 7
        %v1642 = vsub.s32 %v1639, %v1641
        %v1643 = vrot.slane %v1629, %v1642
        %v1644 = vcombine.low %v1588, %v1604
        %v1645 = vcombine.high %v1588, %v1604
        %v1647 = vunpack.c.l.s4 1934713408
        %v1648 = vunpack.c.0.s8 %v1647
        %v1649 = vlaneseq
        %v1650 = vshrl.u32 %v1649, 7
        %v1651 = vsub.s32 %v1648, %v1650
        %v1652 = vrot.slane %v1644, %v1651
        %v1654 = vunpack.c.l.s4 1934713408
        %v1655 = vunpack.c.0.s8 %v1654
        %v1656 = vlaneseq
        %v1657 = vshrl.u32 %v1656, 7
        %v1658 = vsub.s32 %v1655, %v1657
        %v1659 = vrot.slane %v1645, %v1658
        %v1660 = vcombine.low %v1595, %v1611
        %v1661 = vcombine.high %v1595, %v1611
        %v1663 = vunpack.c.l.s4 1934713408
        %v1664 = vunpack.c.0.s8 %v1663
        %v1665 = vlaneseq
        %v1666 = vshrl.u32 %v1665, 7
        %v1667 = vsub.s32 %v1664, %v1666
        %v1668 = vrot.slane %v1660, %v1667
        %v1670 = vunpack.c.l.s4 1934713408
        %v1671 = vunpack.c.0.s8 %v1670
        %v1672 = vlaneseq
        %v1673 = vshrl.u32 %v1672, 7
        %v1674 = vsub.s32 %v1671, %v1673
        %v1675 = vrot.slane %v1661, %v1674
        %v1676 = vcombine.low %v1620, %v1636
        %v1677 = vcombine.high %v1620, %v1636
        %v1679 = vunpack.c.l.s4 1934713408
        %v1680 = vunpack.c.0.s8 %v1679
        %v1681 = vlaneseq
        %v1682 = vshrl.u32 %v1681, 7
        %v1683 = vsub.s32 %v1680, %v1682
        %v1684 = vrot.slane %v1676, %v1683
        %v1686 = vunpack.c.l.s4 1934713408
        %v1687 = vunpack.c.0.s8 %v1686
        %v1688 = vlaneseq
        %v1689 = vshrl.u32 %v1688, 7
        %v1690 = vsub.s32 %v1687, %v1689
        %v1691 = vrot.slane %v1677, %v1690
        %v1692 = vcombine.low %v1627, %v1643
        %v1693 = vcombine.high %v1627, %v1643
        %v1695 = vunpack.c.l.s4 1934713408
        %v1696 = vunpack.c.0.s8 %v1695
        %v1697 = vlaneseq
        %v1698 = vshrl.u32 %v1697, 7
        %v1699 = vsub.s32 %v1696, %v1698
        %v1700 = vrot.slane %v1692, %v1699
        %v1702 = vunpack.c.l.s4 1934713408
        %v1703 = vunpack.c.0.s8 %v1702
        %v1704 = vlaneseq
        %v1705 = vshrl.u32 %v1704, 7
        %v1706 = vsub.s32 %v1703, %v1705
        %v1707 = vrot.slane %v1693, %v1706
        %v1708 = vcombine.low %v1652, %v1684
        %v1709 = vcombine.high %v1652, %v1684
        %v1710 = vcombine.low %v1659, %v1691
        %v1711 = vcombine.high %v1659, %v1691
        %v1712 = vcombine.low %v1668, %v1700
        %v1713 = vcombine.high %v1668, %v1700
        %v1714 = vcombine.low %v1675, %v1707
        %v1715 = vcombine.high %v1675, %v1707
        %1718 = vrot.lane.b32.xlu0 %v1573, 8
        %v1719 = vpop.permute.xlu0 %1718
        %1720 = vrot.lane.b32.xlu0 %v1709, 8
        %v1721 = vpop.permute.xlu0 %1720
        %1726 = vrot.lane.b32.xlu0 %v1574, 16
        %v1727 = vpop.permute.xlu0 %1726
        %1728 = vrot.lane.b32.xlu0 %v1710, 16
        %v1729 = vpop.permute.xlu0 %1728
        %1734 = vrot.lane.b32.xlu0 %v1575, 24
        %v1735 = vpop.permute.xlu0 %1734
        %1736 = vrot.lane.b32.xlu0 %v1711, 24
        %v1737 = vpop.permute.xlu0 %1736
        %1742 = vrot.lane.b32.xlu0 %v1576, 32
        %v1743 = vpop.permute.xlu0 %1742
        %1744 = vrot.lane.b32.xlu0 %v1712, 32
        %v1745 = vpop.permute.xlu0 %1744
        %1750 = vrot.lane.b32.xlu0 %v1577, 40
        %v1751 = vpop.permute.xlu0 %1750
        %1752 = vrot.lane.b32.xlu0 %v1713, 40
        %v1753 = vpop.permute.xlu0 %1752
        %1758 = vrot.lane.b32.xlu0 %v1578, 48
        %v1759 = vpop.permute.xlu0 %1758
        %1760 = vrot.lane.b32.xlu0 %v1714, 48
        %v1761 = vpop.permute.xlu0 %1760
        %1766 = vrot.lane.b32.xlu0 %v1579, 56
        %v1767 = vpop.permute.xlu0 %1766
        %1768 = vrot.lane.b32.xlu0 %v1715, 56
        %v1769 = vpop.permute.xlu0 %1768
        %v1772 = vsel %vm696, %v1572, %v1719
        %v1773 = vsel %vm696, %v1708, %v1721
        %v1774 = vsel %vm1047, %v1772, %v1727
        %v1775 = vsel %vm1047, %v1773, %v1729
        %v1776 = vsel %vm1050, %v1774, %v1735
        %v1777 = vsel %vm1050, %v1775, %v1737
        %v1778 = vsel %vm1053, %v1776, %v1743
        %v1779 = vsel %vm1053, %v1777, %v1745
        %v1780 = vsel %vm1056, %v1778, %v1751
        %v1781 = vsel %vm1056, %v1779, %v1753
        %v1782 = vsel %vm1059, %v1780, %v1759
        %v1783 = vsel %vm1059, %v1781, %v1761
        %v1784 = vsel %vm1062, %v1782, %v1767
        %v1785 = vsel %vm1062, %v1783, %v1769
        %p1786 = scmp.eq.s32.totalorder %s25, 7
        %s1787 = scalar_select %p1786, 0.0, 1.0
        %v1788 = vstv %s1787
        %v1789 = vmul.f32 %v1784, %v1788
        %v1790 = vmul.f32 %v1785, %v1788
        %1793 = vrot.lane.b32.xlu0 %v1068, 9
        %v1794 = vpop.permute.xlu0 %1793
        %1795 = vrot.lane.b32.xlu0 %v1069, 9
        %v1796 = vpop.permute.xlu0 %1795
        %vm1799 = vcmask 72704
        %v1800 = vsel %vm1799, 0.0, %v1794
        %v1801 = vsel %vm1799, 0.0, %v1796
        %vm1802 = vcmask 596992
        %v1803 = vsel %vm1802, %v1800, 0.0
        %v1804 = vsel %vm1802, %v1801, 0.0
        %v1805 = vld [vmem:[%s5] sm:$0x1]
        %v1806 = vlaneseq
        %v1807 = vshrl.u32 %v1806, 7
        %v1808 = vsub.s32 0, %v1807
        %v1809 = vrot.slane %v1805, %v1808
        %v1810 = vmul.f32 %v1803, %v1809
        %v1811 = vmul.f32 %v1804, %v1809
        %v1812 = vld [vmem:[%s5 + $0x1] sm:$0x1]
        %v1813 = vlaneseq
        %v1814 = vshrl.u32 %v1813, 7
        %v1815 = vsub.s32 0, %v1814
        %v1816 = vrot.slane %v1812, %v1815
        %1818 = vrot.lane.b32.xlu0 %v1816, 1
        %v1819 = vpop.permute.xlu0 %1818
        %v1821 = vmul.f32 %v1803, %v1819
        %v1822 = vmul.f32 %v1804, %v1819
        %v1823 = vld [vmem:[%s5 + $0x2] sm:$0x1]
        %v1824 = vlaneseq
        %v1825 = vshrl.u32 %v1824, 7
        %v1826 = vsub.s32 0, %v1825
        %v1827 = vrot.slane %v1823, %v1826
        %1829 = vrot.lane.b32.xlu0 %v1827, 2
        %v1830 = vpop.permute.xlu0 %1829
        %v1832 = vmul.f32 %v1803, %v1830
        %v1833 = vmul.f32 %v1804, %v1830
        %v1834 = vld [vmem:[%s5 + $0x3] sm:$0x1]
        %v1835 = vlaneseq
        %v1836 = vshrl.u32 %v1835, 7
        %v1837 = vsub.s32 0, %v1836
        %v1838 = vrot.slane %v1834, %v1837
        %1840 = vrot.lane.b32.xlu0 %v1838, 8
        %v1841 = vpop.permute.xlu0 %1840
        %v1843 = vmul.f32 %v1803, %v1841
        %v1844 = vmul.f32 %v1804, %v1841
        %v1845 = vld [vmem:[%s5 + $0x5] sm:$0x1]
        %v1846 = vlaneseq
        %v1847 = vshrl.u32 %v1846, 7
        %v1848 = vsub.s32 0, %v1847
        %v1849 = vrot.slane %v1845, %v1848
        %1851 = vrot.lane.b32.xlu0 %v1849, 10
        %v1852 = vpop.permute.xlu0 %1851
        %v1854 = vmul.f32 %v1803, %v1852
        %v1855 = vmul.f32 %v1804, %v1852
        %v1856 = vld [vmem:[%s5 + $0x6] sm:$0x1]
        %v1857 = vlaneseq
        %v1858 = vshrl.u32 %v1857, 7
        %v1859 = vsub.s32 0, %v1858
        %v1860 = vrot.slane %v1856, %v1859
        %1862 = vrot.lane.b32.xlu0 %v1860, 16
        %v1863 = vpop.permute.xlu0 %1862
        %v1865 = vmul.f32 %v1803, %v1863
        %v1866 = vmul.f32 %v1804, %v1863
        %v1867 = vld [vmem:[%s5 + $0x7] sm:$0x1]
        %v1868 = vlaneseq
        %v1869 = vshrl.u32 %v1868, 7
        %v1870 = vsub.s32 0, %v1869
        %v1871 = vrot.slane %v1867, %v1870
        %1873 = vrot.lane.b32.xlu0 %v1871, 17
        %v1874 = vpop.permute.xlu0 %1873
        %v1876 = vmul.f32 %v1803, %v1874
        %v1877 = vmul.f32 %v1804, %v1874
        %v1878 = vld [vmem:[%s5 + $0x8] sm:$0x1]
        %v1879 = vlaneseq
        %v1880 = vshrl.u32 %v1879, 7
        %v1881 = vsub.s32 0, %v1880
        %v1882 = vrot.slane %v1878, %v1881
        %1884 = vrot.lane.b32.xlu0 %v1882, 18
        %v1885 = vpop.permute.xlu0 %1884
        %v1887 = vmul.f32 %v1803, %v1885
        %v1888 = vmul.f32 %v1804, %v1885
        %1891 = vrot.lane.b32.xlu0 %v1426, 9
        %v1892 = vpop.permute.xlu0 %1891
        %1893 = vrot.lane.b32.xlu0 %v1427, 9
        %v1894 = vpop.permute.xlu0 %1893
        %v1897 = vsel %vm1799, 0.0, %v1892
        %v1898 = vsel %vm1799, 0.0, %v1894
        %v1899 = vsel %vm1802, %v1897, 0.0
        %v1900 = vsel %vm1802, %v1898, 0.0
        %v1901 = vmul.f32 %v1899, %v1809
        %v1902 = vmul.f32 %v1900, %v1809
        %v1903 = vmul.f32 %v1899, %v1819
        %v1904 = vmul.f32 %v1900, %v1819
        %v1905 = vmul.f32 %v1899, %v1830
        %v1906 = vmul.f32 %v1900, %v1830
        %v1907 = vmul.f32 %v1899, %v1841
        %v1908 = vmul.f32 %v1900, %v1841
        %v1909 = vmul.f32 %v1899, %v1852
        %v1910 = vmul.f32 %v1900, %v1852
        %v1911 = vmul.f32 %v1899, %v1863
        %v1912 = vmul.f32 %v1900, %v1863
        %v1913 = vmul.f32 %v1899, %v1874
        %v1914 = vmul.f32 %v1900, %v1874
        %v1915 = vmul.f32 %v1899, %v1885
        %v1916 = vmul.f32 %v1900, %v1885
        %1919 = vrot.lane.b32.xlu0 %v1789, 9
        %v1920 = vpop.permute.xlu0 %1919
        %1921 = vrot.lane.b32.xlu0 %v1790, 9
        %v1922 = vpop.permute.xlu0 %1921
        %v1925 = vsel %vm1799, 0.0, %v1920
        %v1926 = vsel %vm1799, 0.0, %v1922
        %v1927 = vsel %vm1802, %v1925, 0.0
        %v1928 = vsel %vm1802, %v1926, 0.0
        %v1929 = vmul.f32 %v1927, %v1809
        %v1930 = vmul.f32 %v1928, %v1809
        %v1931 = vmul.f32 %v1927, %v1819
        %v1932 = vmul.f32 %v1928, %v1819
        %v1933 = vmul.f32 %v1927, %v1830
        %v1934 = vmul.f32 %v1928, %v1830
        %v1935 = vmul.f32 %v1927, %v1841
        %v1936 = vmul.f32 %v1928, %v1841
        %v1937 = vmul.f32 %v1927, %v1852
        %v1938 = vmul.f32 %v1928, %v1852
        %v1939 = vmul.f32 %v1927, %v1863
        %v1940 = vmul.f32 %v1928, %v1863
        %v1941 = vmul.f32 %v1927, %v1874
        %v1942 = vmul.f32 %v1928, %v1874
        %v1943 = vmul.f32 %v1927, %v1885
        %v1944 = vmul.f32 %v1928, %v1885
        %1947 = vrot.lane.b32.xlu0 %v1821, 127
        %v1948 = vpop.permute.xlu0 %1947
        %1949 = vrot.lane.b32.xlu0 %v1822, 127
        %v1950 = vpop.permute.xlu0 %1949
        %1955 = vrot.lane.b32.xlu0 %v1832, 126
        %v1956 = vpop.permute.xlu0 %1955
        %1957 = vrot.lane.b32.xlu0 %v1833, 126
        %v1958 = vpop.permute.xlu0 %1957
        %1963 = vrot.lane.b32.xlu0 %v1843, 120
        %v1964 = vpop.permute.xlu0 %1963
        %1965 = vrot.lane.b32.xlu0 %v1844, 120
        %v1966 = vpop.permute.xlu0 %1965
        %1971 = vrot.lane.b32.xlu0 %v1854, 118
        %v1972 = vpop.permute.xlu0 %1971
        %1973 = vrot.lane.b32.xlu0 %v1855, 118
        %v1974 = vpop.permute.xlu0 %1973
        %1979 = vrot.lane.b32.xlu0 %v1865, 112
        %v1980 = vpop.permute.xlu0 %1979
        %1981 = vrot.lane.b32.xlu0 %v1866, 112
        %v1982 = vpop.permute.xlu0 %1981
        %1987 = vrot.lane.b32.xlu0 %v1876, 111
        %v1988 = vpop.permute.xlu0 %1987
        %1989 = vrot.lane.b32.xlu0 %v1877, 111
        %v1990 = vpop.permute.xlu0 %1989
        %1995 = vrot.lane.b32.xlu0 %v1887, 110
        %v1996 = vpop.permute.xlu0 %1995
        %1997 = vrot.lane.b32.xlu0 %v1888, 110
        %v1998 = vpop.permute.xlu0 %1997
        %2003 = vrot.lane.b32.xlu0 %v1903, 127
        %v2004 = vpop.permute.xlu0 %2003
        %2005 = vrot.lane.b32.xlu0 %v1904, 127
        %v2006 = vpop.permute.xlu0 %2005
        %2011 = vrot.lane.b32.xlu0 %v1905, 126
        %v2012 = vpop.permute.xlu0 %2011
        %2013 = vrot.lane.b32.xlu0 %v1906, 126
        %v2014 = vpop.permute.xlu0 %2013
        %2019 = vrot.lane.b32.xlu0 %v1907, 120
        %v2020 = vpop.permute.xlu0 %2019
        %2021 = vrot.lane.b32.xlu0 %v1908, 120
        %v2022 = vpop.permute.xlu0 %2021
        %2027 = vrot.lane.b32.xlu0 %v1909, 118
        %v2028 = vpop.permute.xlu0 %2027
        %2029 = vrot.lane.b32.xlu0 %v1910, 118
        %v2030 = vpop.permute.xlu0 %2029
        %2035 = vrot.lane.b32.xlu0 %v1911, 112
        %v2036 = vpop.permute.xlu0 %2035
        %2037 = vrot.lane.b32.xlu0 %v1912, 112
        %v2038 = vpop.permute.xlu0 %2037
        %2043 = vrot.lane.b32.xlu0 %v1915, 127
        %v2044 = vpop.permute.xlu0 %2043
        %2045 = vrot.lane.b32.xlu0 %v1916, 127
        %v2046 = vpop.permute.xlu0 %2045
        %2049 = vrot.lane.b32.xlu0 %v1929, 17
        %v2050 = vpop.permute.xlu0 %2049
        %2051 = vrot.lane.b32.xlu0 %v1930, 17
        %v2052 = vpop.permute.xlu0 %2051
        %2055 = vrot.lane.b32.xlu0 %v1931, 16
        %v2056 = vpop.permute.xlu0 %2055
        %2057 = vrot.lane.b32.xlu0 %v1932, 16
        %v2058 = vpop.permute.xlu0 %2057
        %2061 = vrot.lane.b32.xlu0 %v1933, 15
        %v2062 = vpop.permute.xlu0 %2061
        %2063 = vrot.lane.b32.xlu0 %v1934, 15
        %v2064 = vpop.permute.xlu0 %2063
        %2067 = vrot.lane.b32.xlu0 %v1935, 9
        %v2068 = vpop.permute.xlu0 %2067
        %2069 = vrot.lane.b32.xlu0 %v1936, 9
        %v2070 = vpop.permute.xlu0 %2069
        %2071 = vrot.lane.b32.xlu0 %v1789, 17
        %v2072 = vpop.permute.xlu0 %2071
        %2073 = vrot.lane.b32.xlu0 %v1790, 17
        %v2074 = vpop.permute.xlu0 %2073
        %2077 = vrot.lane.b32.xlu0 %v1937, 7
        %v2078 = vpop.permute.xlu0 %2077
        %2079 = vrot.lane.b32.xlu0 %v1938, 7
        %v2080 = vpop.permute.xlu0 %2079
        %2083 = vrot.lane.b32.xlu0 %v1939, 1
        %v2084 = vpop.permute.xlu0 %2083
        %2085 = vrot.lane.b32.xlu0 %v1940, 1
        %v2086 = vpop.permute.xlu0 %2085
        %2089 = vrot.lane.b32.xlu0 %v1943, 127
        %v2090 = vpop.permute.xlu0 %2089
        %2091 = vrot.lane.b32.xlu0 %v1944, 127
        %v2092 = vpop.permute.xlu0 %2091
        %2097 = vrot.lane.b32.xlu0 %v1913, 111
        %v2098 = vpop.permute.xlu0 %2097
        %2099 = vrot.lane.b32.xlu0 %v1914, 111
        %v2100 = vpop.permute.xlu0 %2099
        %2101 = vrot.lane.b32.xlu0 %v2044, 111
        %v2102 = vpop.permute.xlu0 %2101
        %2103 = vrot.lane.b32.xlu0 %v2046, 111
        %v2104 = vpop.permute.xlu0 %2103
        %2105 = vrot.lane.b32.xlu0 %v2050, 111
        %v2106 = vpop.permute.xlu0 %2105
        %2107 = vrot.lane.b32.xlu0 %v2052, 111
        %v2108 = vpop.permute.xlu0 %2107
        %2109 = vrot.lane.b32.xlu0 %v2056, 111
        %v2110 = vpop.permute.xlu0 %2109
        %2111 = vrot.lane.b32.xlu0 %v2058, 111
        %v2112 = vpop.permute.xlu0 %2111
        %2113 = vrot.lane.b32.xlu0 %v2062, 111
        %v2114 = vpop.permute.xlu0 %2113
        %2115 = vrot.lane.b32.xlu0 %v2064, 111
        %v2116 = vpop.permute.xlu0 %2115
        %2117 = vrot.lane.b32.xlu0 %v2068, 111
        %v2118 = vpop.permute.xlu0 %2117
        %2119 = vrot.lane.b32.xlu0 %v2070, 111
        %v2120 = vpop.permute.xlu0 %2119
        %2121 = vrot.lane.b32.xlu0 %v2072, 111
        %v2122 = vpop.permute.xlu0 %2121
        %2123 = vrot.lane.b32.xlu0 %v2074, 111
        %v2124 = vpop.permute.xlu0 %2123
        %2125 = vrot.lane.b32.xlu0 %v2078, 111
        %v2126 = vpop.permute.xlu0 %2125
        %2127 = vrot.lane.b32.xlu0 %v2080, 111
        %v2128 = vpop.permute.xlu0 %2127
        %2129 = vrot.lane.b32.xlu0 %v2084, 111
        %v2130 = vpop.permute.xlu0 %2129
        %2131 = vrot.lane.b32.xlu0 %v2086, 111
        %v2132 = vpop.permute.xlu0 %2131
        %2133 = vrot.lane.b32.xlu0 %v1941, 111
        %v2134 = vpop.permute.xlu0 %2133
        %2135 = vrot.lane.b32.xlu0 %v1942, 111
        %v2136 = vpop.permute.xlu0 %2135
        %2137 = vrot.lane.b32.xlu0 %v2090, 111
        %v2138 = vpop.permute.xlu0 %2137
        %2139 = vrot.lane.b32.xlu0 %v2092, 111
        %v2140 = vpop.permute.xlu0 %2139
        %v2163 = vld [vmem:[%s4] sm:$0xff]
        %v2164 = vld [vmem:[%s4 + $0x8] sm:$0xff]
        %v2167 = vcombine.high %v2163, %v2163
        %v2168 = vcombine.high %v2164, %v2164
        %v2170 = vsel %vm1059, %v2168, 0
        %2172 = vmatprep.subr.mxu0 0.0
        %2173 = vmatpush1.msra.mxu0 %v1810
        %2174 = vmatprep.subr.mxu0 0.0
        %2175 = vmatpush1.msra.mxu0 %v1811
        %2176 = vmatprep.subr.mxu0 0.0
        %2177 = vmatpush1.msra.mxu0 %v1948
        %2178 = vmatprep.subr.mxu0 0.0
        %2179 = vmatpush1.msra.mxu0 %v1950
        %2180 = vmatprep.subr.mxu0 0.0
        %2181 = vmatpush1.msra.mxu0 %v1956
        %2182 = vmatprep.subr.mxu0 0.0
        %2183 = vmatpush1.msra.mxu0 %v1958
        %2184 = vmatprep.subr.mxu0 0.0
        %2185 = vmatpush1.msra.mxu0 %v1964
        %2186 = vmatprep.subr.mxu0 0.0
        %2187 = vmatpush1.msra.mxu0 %v1966
        %2188 = vmatprep.subr.mxu0 0.0
        %2189 = vmatpush1.msra.mxu0 %v1068
        %2190 = vmatprep.subr.mxu0 0.0
        %2191 = vmatpush1.msra.mxu0 %v1069
        %2192 = vmatprep.subr.mxu0 0.0
        %2193 = vmatpush1.msra.mxu0 %v1972
        %2194 = vmatprep.subr.mxu0 0.0
        %2195 = vmatpush1.msra.mxu0 %v1974
        %2196 = vmatprep.subr.mxu0 0.0
        %2197 = vmatpush1.msra.mxu0 %v1980
        %2198 = vmatprep.subr.mxu0 0.0
        %2199 = vmatpush1.msra.mxu0 %v1982
        %2200 = vmatprep.subr.mxu0 0.0
        %2201 = vmatpush1.msra.mxu0 %v1988
        %2202 = vmatprep.subr.mxu0 0.0
        %2203 = vmatpush1.msra.mxu0 %v1990
        %2204 = vmatprep.subr.mxu0 0.0
        %2205 = vmatpush1.msra.mxu0 %v1996
        %2206 = vmatprep.subr.mxu0 0.0
        %2207 = vmatpush1.msra.mxu0 %v1998
        %2208 = vmatprep.subr.mxu0 0.0
        %2209 = vmatpush1.msra.mxu0 %v1901
        %2210 = vmatprep.subr.mxu0 0.0
        %2211 = vmatpush1.msra.mxu0 %v1902
        %2212 = vmatprep.subr.mxu0 0.0
        %2213 = vmatpush1.msra.mxu0 %v2004
        %2214 = vmatprep.subr.mxu0 0.0
        %2215 = vmatpush1.msra.mxu0 %v2006
        %2216 = vmatprep.subr.mxu0 0.0
        %2217 = vmatpush1.msra.mxu0 %v2012
        %2218 = vmatprep.subr.mxu0 0.0
        %2219 = vmatpush1.msra.mxu0 %v2014
        %2220 = vmatprep.subr.mxu0 0.0
        %2221 = vmatpush1.msra.mxu0 %v2020
        %2222 = vmatprep.subr.mxu0 0.0
        %2223 = vmatpush1.msra.mxu0 %v2022
        %2224 = vmatprep.subr.mxu0 0.0
        %2225 = vmatpush1.msra.mxu0 %v1426
        %2226 = vmatprep.subr.mxu0 0.0
        %2227 = vmatpush1.msra.mxu0 %v1427
        %2228 = vmatprep.subr.mxu0 0.0
        %2229 = vmatpush1.msra.mxu0 %v2028
        %2230 = vmatprep.subr.mxu0 0.0
        %2231 = vmatpush1.msra.mxu0 %v2030
        %2232 = vmatprep.subr.mxu0 0.0
        %2233 = vmatpush1.msra.mxu0 %v2036
        %2234 = vmatprep.subr.mxu0 0.0
        %2235 = vmatpush1.msra.mxu0 %v2038
        %2236 = vmatprep.mubr.f32.mxu0 %v2167
        %2237 = vmatmul.mubr.f32.gmra.mrb[0].mxu0 %v2163
        %v2238 = vpop.f32.mrb[0].mxu0
        %v2239 = vadd.f32 0.0, %v2238
        %v2240 = vpop.f32.mrb[0].mxu0
        %2241 = vdwg.mxu0
        %2242 = vmatprep.subr.mxu0 0.0
        %2243 = vmatpush1.msra.mxu0 %v2098
        %2244 = vmatprep.subr.mxu0 0.0
        %2245 = vmatpush1.msra.mxu0 %v2100
        %2246 = vmatprep.subr.mxu0 0.0
        %2247 = vmatpush1.msra.mxu0 %v2102
        %2248 = vmatprep.subr.mxu0 0.0
        %2249 = vmatpush1.msra.mxu0 %v2104
        %2250 = vmatprep.subr.mxu0 0.0
        %2251 = vmatpush1.msra.mxu0 %v2106
        %2252 = vmatprep.subr.mxu0 0.0
        %2253 = vmatpush1.msra.mxu0 %v2108
        %2254 = vmatprep.subr.mxu0 0.0
        %2255 = vmatpush1.msra.mxu0 %v2110
        %2256 = vmatprep.subr.mxu0 0.0
        %2257 = vmatpush1.msra.mxu0 %v2112
        %2258 = vmatprep.subr.mxu0 0.0
        %2259 = vmatpush1.msra.mxu0 %v2114
        %2260 = vmatprep.subr.mxu0 0.0
        %2261 = vmatpush1.msra.mxu0 %v2116
        %2262 = vmatprep.subr.mxu0 0.0
        %2263 = vmatpush1.msra.mxu0 %v2118
        %2264 = vmatprep.subr.mxu0 0.0
        %2265 = vmatpush1.msra.mxu0 %v2120
        %2266 = vmatprep.subr.mxu0 0.0
        %2267 = vmatpush1.msra.mxu0 %v2122
        %2268 = vmatprep.subr.mxu0 0.0
        %2269 = vmatpush1.msra.mxu0 %v2124
        %2270 = vmatprep.subr.mxu0 0.0
        %2271 = vmatpush1.msra.mxu0 %v2126
        %2272 = vmatprep.subr.mxu0 0.0
        %2273 = vmatpush1.msra.mxu0 %v2128
        %2274 = vmatprep.subr.mxu0 0.0
        %2275 = vmatpush1.msra.mxu0 %v2130
        %2276 = vmatprep.subr.mxu0 0.0
        %2277 = vmatpush1.msra.mxu0 %v2132
        %2278 = vmatprep.subr.mxu0 0.0
        %2279 = vmatpush1.msra.mxu0 %v2134
        %2280 = vmatprep.subr.mxu0 0.0
        %2281 = vmatpush1.msra.mxu0 %v2136
        %2282 = vmatprep.subr.mxu0 0.0
        %2283 = vmatpush1.msra.mxu0 %v2138
        %2284 = vmatprep.subr.mxu0 0.0
        %2285 = vmatpush1.msra.mxu0 %v2140
        %2286 = vmatprep.subr.mxu0 0.0
        %2287 = vmatpush1.msra.mxu0 0.0
        %2288 = vmatprep.subr.mxu0 0.0
        %2289 = vmatpush1.msra.mxu0 0.0
        %2290 = vmatprep.subr.mxu0 0.0
        %2291 = vmatpush1.msra.mxu0 0.0
        %2292 = vmatprep.subr.mxu0 0.0
        %2293 = vmatpush1.msra.mxu0 0.0
        %2294 = vmatprep.subr.mxu0 0.0
        %2295 = vmatpush1.msra.mxu0 0.0
        %2296 = vmatprep.subr.mxu0 0.0
        %2297 = vmatpush1.msra.mxu0 0.0
        %2298 = vmatprep.subr.mxu0 0.0
        %2299 = vmatpush1.msra.mxu0 0.0
        %2300 = vmatprep.subr.mxu0 0.0
        %2301 = vmatpush1.msra.mxu0 0.0
        %2302 = vmatprep.subr.mxu0 0.0
        %2303 = vmatpush1.msra.mxu0 0.0
        %2304 = vmatprep.subr.mxu0 0.0
        %2305 = vmatpush1.msra.mxu0 0.0
        %2306 = vmatprep.mubr.f32.mxu0 %v2170
        %2307 = vmatmul.mubr.f32.gmra.mrb[0].mxu0 %v2164
        %v2308 = vpop.f32.mrb[0].mxu0
        %v2309 = vadd.f32 %v2239, %v2308
        %v2310 = vpop.f32.mrb[0].mxu0
        %2311 = vdwg.mxu0
        %2313 = vrot.lane.b32.xlu0 %v2309, 120
        %v2314 = vpop.permute.xlu0 %2313
        %2316 = vrot.lane.b32.xlu0 %v2309, 112
        %v2317 = vpop.permute.xlu0 %2316
        %2319 = vrot.lane.b32.xlu0 %v2309, 104
        %v2320 = vpop.permute.xlu0 %2319
        %2322 = vrot.lane.b32.xlu0 %v2309, 96
        %v2323 = vpop.permute.xlu0 %2322
        %2325 = vrot.lane.b32.xlu0 %v2309, 88
        %v2326 = vpop.permute.xlu0 %2325
        %2328 = vrot.lane.b32.xlu0 %v2309, 80
        %v2329 = vpop.permute.xlu0 %2328
        %2331 = vrot.lane.b32.xlu0 %v2309, 72
        %v2332 = vpop.permute.xlu0 %2331
        %v2334 = vcombine.low %v2309, %v2317
        %v2336 = vunpack.c.l.s4 1983009808
        %v2337 = vunpack.c.0.s8 %v2336
        %v2338 = vlaneseq
        %v2339 = vshrl.u32 %v2338, 7
        %v2340 = vsub.s32 %v2337, %v2339
        %v2341 = vrot.slane %v2334, %v2340
        %v2342 = vcombine.low %v2314, %v2320
        %v2344 = vunpack.c.l.s4 1983009808
        %v2345 = vunpack.c.0.s8 %v2344
        %v2346 = vlaneseq
        %v2347 = vshrl.u32 %v2346, 7
        %v2348 = vsub.s32 %v2345, %v2347
        %v2349 = vrot.slane %v2342, %v2348
        %v2350 = vcombine.low %v2323, %v2329
        %v2352 = vunpack.c.l.s4 1983009808
        %v2353 = vunpack.c.0.s8 %v2352
        %v2354 = vlaneseq
        %v2355 = vshrl.u32 %v2354, 7
        %v2356 = vsub.s32 %v2353, %v2355
        %v2357 = vrot.slane %v2350, %v2356
        %v2358 = vcombine.low %v2326, %v2332
        %v2360 = vunpack.c.l.s4 1983009808
        %v2361 = vunpack.c.0.s8 %v2360
        %v2362 = vlaneseq
        %v2363 = vshrl.u32 %v2362, 7
        %v2364 = vsub.s32 %v2361, %v2363
        %v2365 = vrot.slane %v2358, %v2364
        %v2366 = vcombine.low %v2341, %v2349
        %v2367 = vcombine.high %v2341, %v2349
        %v2369 = vunpack.c.l.s4 1934713408
        %v2370 = vunpack.c.0.s8 %v2369
        %v2371 = vlaneseq
        %v2372 = vshrl.u32 %v2371, 7
        %v2373 = vsub.s32 %v2370, %v2372
        %v2374 = vrot.slane %v2366, %v2373
        %v2376 = vunpack.c.l.s4 1934713408
        %v2377 = vunpack.c.0.s8 %v2376
        %v2378 = vlaneseq
        %v2379 = vshrl.u32 %v2378, 7
        %v2380 = vsub.s32 %v2377, %v2379
        %v2381 = vrot.slane %v2367, %v2380
        %v2382 = vcombine.low %v2357, %v2365
        %v2383 = vcombine.high %v2357, %v2365
        %v2385 = vunpack.c.l.s4 1934713408
        %v2386 = vunpack.c.0.s8 %v2385
        %v2387 = vlaneseq
        %v2388 = vshrl.u32 %v2387, 7
        %v2389 = vsub.s32 %v2386, %v2388
        %v2390 = vrot.slane %v2382, %v2389
        %v2392 = vunpack.c.l.s4 1934713408
        %v2393 = vunpack.c.0.s8 %v2392
        %v2394 = vlaneseq
        %v2395 = vshrl.u32 %v2394, 7
        %v2396 = vsub.s32 %v2393, %v2395
        %v2397 = vrot.slane %v2383, %v2396
        %v2398 = vcombine.low %v2374, %v2390
        %v2399 = vcombine.high %v2374, %v2390
        %v2400 = vcombine.low %v2381, %v2397
        %v2401 = vcombine.high %v2381, %v2397
        %s2402 = scalar_lea.vmem %s685, 32 [#allocation6]
        %2403 = vst.msk [vmem:[%s2402] sm:$0xff] %vm696, %v2398
        %2404 = vst.msk [vmem:[%s2402 + $0x8] sm:$0xff] %vm696, %v2399
        %2405 = vst.msk [vmem:[%s2402 + $0x10] sm:$0xff] %vm696, %v2400
        %2406 = vst.msk [vmem:[%s2402 + $0x18] sm:$0xff] %vm696, %v2401
        %s2407 = sand.u32 %s208, 1
        %s2408 = scalar_lea.sflag [#allocation7], %s2407
        %s2409 = sand.u32 %s208, 1
        %s2410 = smul.addr %s2409, 64
        %s2411 = scalar_lea.vmem [#allocation6], %s2410
        // Predicated region
        $region197: #{_lambda_.3} parent=179 // pred_check
          %p2412 = pneg %p218
        $region198: #{_lambda_.3} parent=179 // pred_check_branch
          %2414 = sbr.rel (%p2412) target = $region200
        $region199: #{_lambda_.3} parent=179 // pred_region
          %s2416 = ssub.s32 1024, 1024
          %2417 = vsyncadd %s2408, %s2416
          %s2418 = smul.addr %s24, 64
          %s2419 = sadd.s32 %s25, %s2418
          %s2420 = smul.addr %s2419, 128
          %s2421 = scalar_lea.hbm %s6, %s2420
          %s2422 = sshll.u32 %s2411, 4
          %s2423 = int_to_ptr.vmem [resolvable:$true] %s2422
          %2428 = dma.vmem_to_hbm [thread:$0]  %s2423, 1024, %s2421, %s2408, 128, 1024, 8
        $region200: #{_lambda_.3} parent=179 // pred_fallthru
          _
      $region180: #{_lambda_.3} parent=5 // pred_fallthru
        _
      %p2429 = scmp.le.s32.totalorder 2, %s15
      // Predicated region
      $region201: #{_lambda_.3} parent=5 // pred_check
        %p2430 = pneg %p2429
      $region202: #{_lambda_.3} parent=5 // pred_check_branch
        %2432 = sbr.rel (%p2430) target = $region204
      $region203: #{_lambda_.3} parent=5 // pred_region
        %s2433 = ssub.s32 %s15, 2
        // Predicated region
        $region205: #{_lambda_.3} parent=203 // pred_check
          %p2434 = pneg %p224
        $region206: #{_lambda_.3} parent=203 // pred_check_branch
          %2436 = sbr.rel (%p2434) target = $region208
        $region207: #{_lambda_.3} parent=203 // pred_region
          %s2437 = sand.u32 %s209, 1
          %s2438 = scalar_lea.sflag [#allocation7], %s2437
          %s2439 = sand.u32 %s209, 1
          %s2440 = smul.addr %s2439, 64
          %s2441 = scalar_lea.vmem [#allocation6], %s2440
          %2442 = dma.done %s2438, 1024
        $region208: #{_lambda_.3} parent=203 // pred_fallthru
          _
      $region204: #{_lambda_.3} parent=5 // pred_fallthru
        _
    $region6: #{_lambda_.3} parent=1 // loop_footer
      %s19 = sadd.s32 1, %s15
    $region7: #{_lambda_.3} parent=1 // loop_footer_branch
      %14 = sbr.rel target = $region3
    $region8: #{_lambda_.3} parent=1 // loop_exit
      _
    %2443 = vsyncpa [#allocation7], 1
    %s2444 = scalar_lea.sflag [#allocation7], 1
    %2445 = vsyncpa %s2444, 1

</llo_original>
